<compile_context>
chip_gen: v5e
topology: v5e:2x2
jax: 0.10.0
libtpu: 0.0.40
codegen_flags: <defaults>
</compile_context>

<pallas_src>
import functools

import jax
import jax.numpy as jnp
from jax import lax
from jax.experimental import pallas as pl
from jax.experimental.pallas import tpu as pltpu


_VMEM = pl.BlockSpec(memory_space=pltpu.MemorySpace.VMEM)


# ----------------------------------------------------------------------------
# Pallas kernels
# ----------------------------------------------------------------------------
def _matmul_bias_relu_kernel(x_ref, w_ref, b_ref, o_ref):
    # bf16 x bf16 -> f32 accumulate on the MXU; f32 epilogue (bias + ReLU).
    y = jnp.dot(x_ref[...], w_ref[...], preferred_element_type=jnp.float32)
    y = y + b_ref[...]
    o_ref[...] = jnp.maximum(y, 0.0).astype(o_ref.dtype)


def _fused_dense_gru_head_kernel(
        xt_ref, ff_ref,
        w0_ref, b0_ref, g0_ref, be0_ref,          # stem layer 0
        w1_ref, b1_ref, g1_ref, be1_ref,          # stem layer 1
        wf_ref, bf_ref,                           # flow FC (GAP folded into K)
        wma_ref, wmb_ref, bm_ref,                 # merger (weight pre-split along K)
        wih_ref, bih_ref, whh_ref, bhh_ref,       # GRU
        wh_ref, bh_ref, gh_ref, beh_ref,          # head MLP
        wo_ref, bo_ref,                           # head Linear
        o_ref, *, T, B):
    """stem -> flow FC -> merger -> GRU -> head. All intermediates VMEM/vreg resident."""
    f32 = jnp.float32
    H = w1_ref.shape[0]

    def ln_lrelu(y, g, beta):                     # LayerNorm(eps=1e-5) + LeakyReLU(0.01)
        mu = jnp.mean(y, axis=-1, keepdims=True)
        var = jnp.mean(jnp.square(y - mu), axis=-1, keepdims=True)
        yn = (y - mu) * lax.rsqrt(var + 1e-5) * g + beta
        return jnp.where(yn >= 0.0, yn, 0.01 * yn)

    # --- stem MLP (2 layers) over all T*B rows at once ---------------------
    z = ln_lrelu(jnp.dot(xt_ref[...], w0_ref[...], preferred_element_type=f32)
                 + b0_ref[...], g0_ref[...], be0_ref[...])
    zt = ln_lrelu(jnp.dot(z, w1_ref[...], preferred_element_type=f32)
                  + b1_ref[...], g1_ref[...], be1_ref[...])

    # --- flow head: AdaptiveAvgPool2d(1)+Linear folded into one lane-dense dot
    ff = ff_ref[...].astype(f32)                  # (T*B, hw*C) , K = 128 here
    zf = jnp.maximum(jnp.dot(ff, wf_ref[...], preferred_element_type=f32)
                     + bf_ref[...], 0.0)

    # --- merger: weight pre-split along K -> no in-kernel concat -----------
    z_all = jnp.maximum(
        jnp.dot(zt, wma_ref[...], preferred_element_type=f32)
        + jnp.dot(zf, wmb_ref[...], preferred_element_type=f32) + bm_ref[...], 0.0)

    # --- GRU (PyTorch gate order r,z,n; h0 = 0) -----------------------------
    # Input projection hoisted out of the recurrence (one well-shaped MXU dot).
    gi_all = jnp.dot(z_all, wih_ref[...], preferred_element_type=f32) + bih_ref[...]
    gi_r, gi_z, gi_n = gi_all[:, 0:H], gi_all[:, H:2 * H], gi_all[:, 2 * H:3 * H]
    whh = whh_ref[...]
    whh_r, whh_z, whh_n = whh[:, 0:H], whh[:, H:2 * H], whh[:, 2 * H:3 * H]
    bhh = bhh_ref[...]
    bhh_r, bhh_z, bhh_n = bhh[:, 0:H], bhh[:, H:2 * H], bhh[:, 2 * H:3 * H]

    h = jnp.zeros((B, H), f32)
    for t in range(T):            # static T -> fully unrolled; per-gate dots at lane 0
        lo = t * B
        gh_r = jnp.dot(h, whh_r, preferred_element_type=f32) + bhh_r
        gh_z = jnp.dot(h, whh_z, preferred_element_type=f32) + bhh_z
        gh_n = jnp.dot(h, whh_n, preferred_element_type=f32) + bhh_n
        r = jax.nn.sigmoid(gi_r[lo:lo + B, :] + gh_r)
        zg = jax.nn.sigmoid(gi_z[lo:lo + B, :] + gh_z)
        n = jnp.tanh(gi_n[lo:lo + B, :] + r * gh_n)
        h = (1.0 - zg) * n + zg * h

    # --- dropout: eval-mode identity; head: MLP(1 layer) + Linear ----------
    y = ln_lrelu(jnp.dot(h, wh_ref[...], preferred_element_type=f32) + bh_ref[...],
                 gh_ref[...], beh_ref[...])
    out = jnp.dot(y, wo_ref[...], preferred_element_type=f32) + bo_ref[...]
    o_ref[...] = out.astype(o_ref.dtype)


# ----------------------------------------------------------------------------
# Wrappers around the kernels
# ----------------------------------------------------------------------------
def _pick_row_tile(m, target=512):
    """Largest divisor of m that is a multiple of 8 and <= min(m//2, target),
    so the grid has >=2 blocks (keeps both v7x TensorCores busy) and each block
    stays small in VMEM. Falls back to the full extent."""
    if m % 8 != 0 or m < 16:
        return m
    best, limit, t = 8, min(m // 2, target), 8
    while t <= limit:
        if m % t == 0:
            best = t
        t += 8
    return best


def matmul_bias_relu(x, w, b, out_dtype=jnp.bfloat16):
    """Row-tiled (M, K) x (K, N) + bias -> ReLU; used for the conv im2col matmuls."""
    M, K = x.shape
    N = w.shape[1]
    tm = _pick_row_tile(M)
    cost = pl.CostEstimate(
        flops=2 * M * K * N,
        transcendentals=0,
        bytes_accessed=int(x.size * x.dtype.itemsize + w.size * w.dtype.itemsize
                           + b.size * b.dtype.itemsize
                           + M * N * jnp.dtype(out_dtype).itemsize))
    return pl.pallas_call(
        _matmul_bias_relu_kernel,
        out_shape=jax.ShapeDtypeStruct((M, N), out_dtype),
        grid=(M // tm,),
        in_specs=[pl.BlockSpec((tm, K), lambda i: (i, 0)),
                  pl.BlockSpec((K, N), lambda i: (0, 0)),
                  pl.BlockSpec((1, N), lambda i: (0, 0))],
        out_specs=pl.BlockSpec((tm, N), lambda i: (i, 0)),
        compiler_params=pltpu.CompilerParams(dimension_semantics=("parallel",)),
        cost_estimate=cost,
    )(x, w, b)


def conv2d_relu_nhwc(x, w_mat, b, k, stride, padding):
    """NHWC conv: im2col built directly in NHWC (no transposes) + Pallas matmul.
    x: (N, H, W, C); w_mat: (k*k*C, O) bf16; b: (1, O) f32."""
    N, H, W, C = x.shape
    Ho = (H + 2 * padding - k) // stride + 1
    Wo = (W + 2 * padding - k) // stride + 1
    xp = jnp.pad(x, ((0, 0), (padding, padding), (padding, padding), (0, 0)))
    cols = [xp[:, i:i + stride * Ho:stride, j:j + stride * Wo:stride, :]
            for i in range(k) for j in range(k)]
    col = jnp.stack(cols, axis=3).reshape(N * Ho * Wo, k * k * C)   # (M, k*k*C), NHWC order
    y = matmul_bias_relu(col.astype(jnp.bfloat16), w_mat, b)        # Pallas hot path
    return y.reshape(N, Ho, Wo, w_mat.shape[1])                     # stays NHWC


def fused_dense_gru_head(xt, fflat, wf_fold, p, T, B):
    H = p["stem1"][0].shape[0]
    out_dim = p["head_out_w"].shape[1]
    args = [xt, fflat,
            *p["stem0"], *p["stem1"],
            wf_fold, p["flow_fc_b"],
            p["merger_wa"], p["merger_wb"], p["merger_b"],
            p["gru_wih_t"], p["gru_bih"], p["gru_whh_t"], p["gru_bhh"],
            *p["head_mlp"],
            p["head_out_w"], p["head_out_b"]]
    TB, Din, Kf = T * B, xt.shape[1], fflat.shape[1]
    flops = 2 * (TB * Din * H + TB * H * H + TB * Kf * H + 2 * TB * H * H
                 + TB * H * 3 * H + T * 3 * B * H * H + B * H * H + B * H * out_dim)
    bytes_accessed = int(sum(a.size * a.dtype.itemsize for a in args) + B * out_dim * 4)
    kern = functools.partial(_fused_dense_gru_head_kernel, T=T, B=B)
    return pl.pallas_call(
        kern,
        out_shape=jax.ShapeDtypeStruct((B, out_dim), jnp.float32),
        in_specs=[_VMEM] * len(args),
        out_specs=_VMEM,
        cost_estimate=pl.CostEstimate(flops=flops, transcendentals=3 * T * B * H,
                                      bytes_accessed=bytes_accessed),
    )(*args)


# ----------------------------------------------------------------------------
# Parameters + forward pass
# ----------------------------------------------------------------------------
def init_params(key, input_dim, hidden_dim, output_dim, cnn_channels):
    keys = iter(jax.random.split(key, 32))
    f32, bf16 = jnp.float32, jnp.bfloat16

    def w(shape, scale=0.1):
        return (scale * jax.random.normal(next(keys), shape)).astype(f32)

    def ln(dim):
        return jnp.ones((1, dim), f32), jnp.zeros((1, dim), f32)

    def conv_mat(o, c, k):
        # NCHW (O, C, kh, kw) conv weight -> im2col matrix (kh*kw*C, O), bf16 for the
        # MXU (f32 accumulate in-kernel). Patch order matches the NHWC im2col above.
        wc = w((o, c, k, k))
        return wc.transpose(2, 3, 1, 0).reshape(k * k * c, o).astype(bf16)

    H = hidden_dim
    p = {}
    g0, be0 = ln(H); p["stem0"] = (w((input_dim + 1, H)), w((1, H)), g0, be0)
    g1, be1 = ln(H); p["stem1"] = (w((H, H)), w((1, H)), g1, be1)
    # flow CNN
    p["conv1_wm"], p["conv1_b"] = conv_mat(32, cnn_channels, 5), w((1, 32))
    p["conv2_wm"], p["conv2_b"] = conv_mat(64, 32, 3), w((1, 64))
    p["conv3_wm"], p["conv3_b"] = conv_mat(H, 64, 3), w((1, H))
    p["flow_fc_w"], p["flow_fc_b"] = w((H, H)), w((1, H))
    # merger weight pre-split along K so the fused kernel avoids an in-kernel concat
    p["merger_wa"], p["merger_wb"], p["merger_b"] = w((H, H)), w((H, H)), w((1, H))
    # GRU (weights stored transposed: (in, 3H), gate order r,z,n)
    p["gru_wih_t"], p["gru_whh_t"] = w((H, 3 * H)), w((H, 3 * H))
    p["gru_bih"], p["gru_bhh"] = w((1, 3 * H)), w((1, 3 * H))
    # head: MLP (1 layer) + Linear
    gh, beh = ln(H); p["head_mlp"] = (w((H, H)), w((1, H)), gh, beh)
    p["head_out_w"], p["head_out_b"] = w((H, output_dim)), w((1, output_dim))
    return p


def single_step_flow_rnn_forward(params, x_obs, t_obs, flow):
    """x_obs: (T, B, D); t_obs: (T, B, 1); flow: (T+1, B, C, Hf, Wf) -> (1, B, out)."""
    T, B, D = x_obs.shape

    # first_difference of observation times (first entry = 0) + time feature concat
    t_diff = jnp.concatenate([jnp.zeros_like(t_obs[:1]), t_obs[1:] - t_obs[:-1]], axis=0)
    xt = jnp.concatenate([x_obs, t_diff], axis=-1).reshape(T * B, D + 1)

    # flow CNN: NHWC end-to-end — one relayout at entry, none per layer.
    f = flow[1:].reshape(-1, *flow.shape[-3:])            # (T*B, C, Hf, Wf)
    f = jnp.transpose(f, (0, 2, 3, 1))                    # -> NHWC, once
    f = conv2d_relu_nhwc(f, params["conv1_wm"], params["conv1_b"], 5, 2, 1)
    f = conv2d_relu_nhwc(f, params["conv2_wm"], params["conv2_b"], 3, 2, 1)
    f = conv2d_relu_nhwc(f, params["conv3_wm"], params["conv3_b"], 3, 2, 1)
    N, hh, ww, Cc = f.shape
    hw = hh * ww
    fflat = f.reshape(N, hw * Cc)                         # (T*B, hw*C): lane-dense K
    # Fold AdaptiveAvgPool2d(1) into the flow FC: tile (W / hw) along K (tiny, once).
    wf_fold = jnp.tile(params["flow_fc_w"] / hw, (hw, 1)) # (hw*C, H)

    # Entire dense chain + GRU + head in a single Pallas call (VMEM-resident).
    out = fused_dense_gru_head(xt, fflat, wf_fold, params, T, B)
    return out[None]                                      # (1, B, output_dim)


if __name__ == "__main__":
    key = jax.random.PRNGKey(0)
    k_p, k_x, k_t, k_f = jax.random.split(key, 4)

    # small shapes consistent with the module
    T, B = 8, 2
    input_dim, hidden_dim, output_dim, cnn_channels = 4, 32, 4, 2
    Hf = Wf = 16

    params = init_params(k_p, input_dim, hidden_dim, output_dim, cnn_channels)

    x_obs = jax.random.normal(k_x, (T, B, input_dim), jnp.float32)
    t_obs = jnp.cumsum(jnp.abs(jax.random.normal(k_t, (T, B, 1), jnp.float32)) + 0.1, axis=0)
    flow = jax.random.normal(k_f, (T + 1, B, cnn_channels, Hf, Wf), jnp.float32)

    fwd = jax.jit(single_step_flow_rnn_forward)
    out = jax.block_until_ready(fwd(params, x_obs, t_obs, flow))

    assert out.shape == (1, B, output_dim), out.shape
    assert bool(jnp.all(jnp.isfinite(out)))
    print("KERNEL_OK")
</pallas_src>

<mosaic_0001>
module attributes {stable_mosaic.version = 11 : i64} {
  func.func @_matmul_bias_relu_kernel(%arg0: i32, %arg1: memref<392x50xbf16, #tpu.memory_space<vmem>>, %arg2: memref<50x32xbf16, #tpu.memory_space<vmem>>, %arg3: memref<1x32xf32, #tpu.memory_space<vmem>>, %arg4: memref<392x32xbf16, #tpu.memory_space<vmem>>) attributes {dimension_semantics = [#tpu.dimension_semantics<parallel>], iteration_bounds = array<i64: 2>, scalar_prefetch = 0 : i64, scratch_operands = 0 : i64, tpu.core_type = #tpu.core_type<tc>, window_params = [{transform_indices = @transform_0, window_bounds = array<i64: 392, 50>}, {pipeline_mode = #tpu.pipeline_mode<synchronous>, transform_indices = @transform_1, window_bounds = array<i64: 50, 32>}, {pipeline_mode = #tpu.pipeline_mode<synchronous>, transform_indices = @transform_2, window_bounds = array<i64: 1, 32>}, {transform_indices = @transform_3, window_bounds = array<i64: 392, 32>}]} {
    %c0 = arith.constant 0 : index
    %c0_0 = arith.constant 0 : index
    %0 = vector.load %arg1[%c0, %c0_0] : memref<392x50xbf16, #tpu.memory_space<vmem>>, vector<392x50xbf16>
    %c0_1 = arith.constant 0 : index
    %c0_2 = arith.constant 0 : index
    %1 = vector.load %arg2[%c0_1, %c0_2] : memref<50x32xbf16, #tpu.memory_space<vmem>>, vector<50x32xbf16>
    %cst = arith.constant dense<0.000000e+00> : vector<392x32xf32>
    %2 = tpu.matmul %0, %1, %cst {dimension_numbers = #tpu.dot_dimension_numbers<[1], [0], [0], [1], [0, 0, 1, 1], [], []>} : vector<392x50xbf16>, vector<50x32xbf16>, vector<392x32xf32> -> vector<392x32xf32>
    %c0_3 = arith.constant 0 : index
    %c0_4 = arith.constant 0 : index
    %3 = vector.load %arg3[%c0_3, %c0_4] : memref<1x32xf32, #tpu.memory_space<vmem>>, vector<1x32xf32>
    %4 = vector.broadcast %3 : vector<1x32xf32> to vector<392x32xf32>
    %5 = arith.addf %2, %4 : vector<392x32xf32>
    %cst_5 = arith.constant 0.000000e+00 : f32
    %6 = vector.broadcast %cst_5 : f32 to vector<392x32xf32>
    %7 = arith.maximumf %5, %6 : vector<392x32xf32>
    %8 = arith.truncf %7 : vector<392x32xf32> to vector<392x32xbf16>
    %c0_6 = arith.constant 0 : index
    %c0_7 = arith.constant 0 : index
    %9 = vector.load %arg4[%c0_6, %c0_7] : memref<392x32xbf16, #tpu.memory_space<vmem>>, vector<392x32xbf16>
    tpu.vector_store %arg4[%c0_6, %c0_7], %8 {strides = array<i32>} : memref<392x32xbf16, #tpu.memory_space<vmem>>, vector<392x32xbf16>,
    return
  }
  func.func @transform_0(%arg0: i32) -> (i32, i32) {
    %c0_i32 = arith.constant 0 : i32
    %c0_i32_0 = arith.constant 0 : i32
    return %arg0, %c0_i32 : i32, i32
  }
  func.func @transform_1(%arg0: i32) -> (i32, i32) {
    %c0_i32 = arith.constant 0 : i32
    %c0_i32_0 = arith.constant 0 : i32
    %c0_i32_1 = arith.constant 0 : i32
    return %c0_i32, %c0_i32_0 : i32, i32
  }
  func.func @transform_2(%arg0: i32) -> (i32, i32) {
    %c0_i32 = arith.constant 0 : i32
    %c0_i32_0 = arith.constant 0 : i32
    %c0_i32_1 = arith.constant 0 : i32
    return %c0_i32, %c0_i32_0 : i32, i32
  }
  func.func @transform_3(%arg0: i32) -> (i32, i32) {
    %c0_i32 = arith.constant 0 : i32
    %c0_i32_0 = arith.constant 0 : i32
    return %arg0, %c0_i32 : i32, i32
  }
}

module attributes {stable_mosaic.version = 11 : i64} {
  func.func @_matmul_bias_relu_kernel(%arg0: i32, %arg1: memref<128x288xbf16, #tpu.memory_space<vmem>>, %arg2: memref<288x64xbf16, #tpu.memory_space<vmem>>, %arg3: memref<1x64xf32, #tpu.memory_space<vmem>>, %arg4: memref<128x64xbf16, #tpu.memory_space<vmem>>) attributes {dimension_semantics = [#tpu.dimension_semantics<parallel>], iteration_bounds = array<i64: 2>, scalar_prefetch = 0 : i64, scratch_operands = 0 : i64, tpu.core_type = #tpu.core_type<tc>, window_params = [{transform_indices = @transform_0, window_bounds = array<i64: 128, 288>}, {pipeline_mode = #tpu.pipeline_mode<synchronous>, transform_indices = @transform_1, window_bounds = array<i64: 288, 64>}, {pipeline_mode = #tpu.pipeline_mode<synchronous>, transform_indices = @transform_2, window_bounds = array<i64: 1, 64>}, {transform_indices = @transform_3, window_bounds = array<i64: 128, 64>}]} {
    %c0 = arith.constant 0 : index
    %c0_0 = arith.constant 0 : index
    %0 = vector.load %arg1[%c0, %c0_0] : memref<128x288xbf16, #tpu.memory_space<vmem>>, vector<128x288xbf16>
    %c0_1 = arith.constant 0 : index
    %c0_2 = arith.constant 0 : index
    %1 = vector.load %arg2[%c0_1, %c0_2] : memref<288x64xbf16, #tpu.memory_space<vmem>>, vector<288x64xbf16>
    %cst = arith.constant dense<0.000000e+00> : vector<128x64xf32>
    %2 = tpu.matmul %0, %1, %cst {dimension_numbers = #tpu.dot_dimension_numbers<[1], [0], [0], [1], [0, 0, 1, 1], [], []>} : vector<128x288xbf16>, vector<288x64xbf16>, vector<128x64xf32> -> vector<128x64xf32>
    %c0_3 = arith.constant 0 : index
    %c0_4 = arith.constant 0 : index
    %3 = vector.load %arg3[%c0_3, %c0_4] : memref<1x64xf32, #tpu.memory_space<vmem>>, vector<1x64xf32>
    %4 = vector.broadcast %3 : vector<1x64xf32> to vector<128x64xf32>
    %5 = arith.addf %2, %4 : vector<128x64xf32>
    %cst_5 = arith.constant 0.000000e+00 : f32
    %6 = vector.broadcast %cst_5 : f32 to vector<128x64xf32>
    %7 = arith.maximumf %5, %6 : vector<128x64xf32>
    %8 = arith.truncf %7 : vector<128x64xf32> to vector<128x64xbf16>
    %c0_6 = arith.constant 0 : index
    %c0_7 = arith.constant 0 : index
    %9 = vector.load %arg4[%c0_6, %c0_7] : memref<128x64xbf16, #tpu.memory_space<vmem>>, vector<128x64xbf16>
    tpu.vector_store %arg4[%c0_6, %c0_7], %8 {strides = array<i32>} : memref<128x64xbf16, #tpu.memory_space<vmem>>, vector<128x64xbf16>,
    return
  }
  func.func @transform_0(%arg0: i32) -> (i32, i32) {
    %c0_i32 = arith.constant 0 : i32
    %c0_i32_0 = arith.constant 0 : i32
    return %arg0, %c0_i32 : i32, i32
  }
  func.func @transform_1(%arg0: i32) -> (i32, i32) {
    %c0_i32 = arith.constant 0 : i32
    %c0_i32_0 = arith.constant 0 : i32
    %c0_i32_1 = arith.constant 0 : i32
    return %c0_i32, %c0_i32_0 : i32, i32
  }
  func.func @transform_2(%arg0: i32) -> (i32, i32) {
    %c0_i32 = arith.constant 0 : i32
    %c0_i32_0 = arith.constant 0 : i32
    %c0_i32_1 = arith.constant 0 : i32
    return %c0_i32, %c0_i32_0 : i32, i32
  }
  func.func @transform_3(%arg0: i32) -> (i32, i32) {
    %c0_i32 = arith.constant 0 : i32
    %c0_i32_0 = arith.constant 0 : i32
    return %arg0, %c0_i32 : i32, i32
  }
}

module attributes {stable_mosaic.version = 11 : i64} {
  func.func @_matmul_bias_relu_kernel(%arg0: i32, %arg1: memref<32x576xbf16, #tpu.memory_space<vmem>>, %arg2: memref<576x32xbf16, #tpu.memory_space<vmem>>, %arg3: memref<1x32xf32, #tpu.memory_space<vmem>>, %arg4: memref<32x32xbf16, #tpu.memory_space<vmem>>) attributes {dimension_semantics = [#tpu.dimension_semantics<parallel>], iteration_bounds = array<i64: 2>, scalar_prefetch = 0 : i64, scratch_operands = 0 : i64, tpu.core_type = #tpu.core_type<tc>, window_params = [{transform_indices = @transform_0, window_bounds = array<i64: 32, 576>}, {pipeline_mode = #tpu.pipeline_mode<synchronous>, transform_indices = @transform_1, window_bounds = array<i64: 576, 32>}, {pipeline_mode = #tpu.pipeline_mode<synchronous>, transform_indices = @transform_2, window_bounds = array<i64: 1, 32>}, {transform_indices = @transform_3, window_bounds = array<i64: 32, 32>}]} {
    %c0 = arith.constant 0 : index
    %c0_0 = arith.constant 0 : index
    %0 = vector.load %arg1[%c0, %c0_0] : memref<32x576xbf16, #tpu.memory_space<vmem>>, vector<32x576xbf16>
    %c0_1 = arith.constant 0 : index
    %c0_2 = arith.constant 0 : index
    %1 = vector.load %arg2[%c0_1, %c0_2] : memref<576x32xbf16, #tpu.memory_space<vmem>>, vector<576x32xbf16>
    %cst = arith.constant dense<0.000000e+00> : vector<32x32xf32>
    %2 = tpu.matmul %0, %1, %cst {dimension_numbers = #tpu.dot_dimension_numbers<[1], [0], [0], [1], [0, 0, 1, 1], [], []>} : vector<32x576xbf16>, vector<576x32xbf16>, vector<32x32xf32> -> vector<32x32xf32>
    %c0_3 = arith.constant 0 : index
    %c0_4 = arith.constant 0 : index
    %3 = vector.load %arg3[%c0_3, %c0_4] : memref<1x32xf32, #tpu.memory_space<vmem>>, vector<1x32xf32>
    %4 = vector.broadcast %3 : vector<1x32xf32> to vector<32x32xf32>
    %5 = arith.addf %2, %4 : vector<32x32xf32>
    %cst_5 = arith.constant 0.000000e+00 : f32
    %6 = vector.broadcast %cst_5 : f32 to vector<32x32xf32>
    %7 = arith.maximumf %5, %6 : vector<32x32xf32>
    %8 = arith.truncf %7 : vector<32x32xf32> to vector<32x32xbf16>
    %c0_6 = arith.constant 0 : index
    %c0_7 = arith.constant 0 : index
    %9 = vector.load %arg4[%c0_6, %c0_7] : memref<32x32xbf16, #tpu.memory_space<vmem>>, vector<32x32xbf16>
    tpu.vector_store %arg4[%c0_6, %c0_7], %8 {strides = array<i32>} : memref<32x32xbf16, #tpu.memory_space<vmem>>, vector<32x32xbf16>,
    return
  }
  func.func @transform_0(%arg0: i32) -> (i32, i32) {
    %c0_i32 = arith.constant 0 : i32
    %c0_i32_0 = arith.constant 0 : i32
    return %arg0, %c0_i32 : i32, i32
  }
  func.func @transform_1(%arg0: i32) -> (i32, i32) {
    %c0_i32 = arith.constant 0 : i32
    %c0_i32_0 = arith.constant 0 : i32
    %c0_i32_1 = arith.constant 0 : i32
    return %c0_i32, %c0_i32_0 : i32, i32
  }
  func.func @transform_2(%arg0: i32) -> (i32, i32) {
    %c0_i32 = arith.constant 0 : i32
    %c0_i32_0 = arith.constant 0 : i32
    %c0_i32_1 = arith.constant 0 : i32
    return %c0_i32, %c0_i32_0 : i32, i32
  }
  func.func @transform_3(%arg0: i32) -> (i32, i32) {
    %c0_i32 = arith.constant 0 : i32
    %c0_i32_0 = arith.constant 0 : i32
    return %arg0, %c0_i32 : i32, i32
  }
}

module attributes {stable_mosaic.version = 11 : i64} {
  func.func @_fused_dense_gru_head_kernel(%arg0: memref<16x5xf32, #tpu.memory_space<vmem>>, %arg1: memref<16x128xbf16, #tpu.memory_space<vmem>>, %arg2: memref<5x32xf32, #tpu.memory_space<vmem>>, %arg3: memref<1x32xf32, #tpu.memory_space<vmem>>, %arg4: memref<1x32xf32, #tpu.memory_space<vmem>>, %arg5: memref<1x32xf32, #tpu.memory_space<vmem>>, %arg6: memref<32x32xf32, #tpu.memory_space<vmem>>, %arg7: memref<1x32xf32, #tpu.memory_space<vmem>>, %arg8: memref<1x32xf32, #tpu.memory_space<vmem>>, %arg9: memref<1x32xf32, #tpu.memory_space<vmem>>, %arg10: memref<128x32xf32, #tpu.memory_space<vmem>>, %arg11: memref<1x32xf32, #tpu.memory_space<vmem>>, %arg12: memref<32x32xf32, #tpu.memory_space<vmem>>, %arg13: memref<32x32xf32, #tpu.memory_space<vmem>>, %arg14: memref<1x32xf32, #tpu.memory_space<vmem>>, %arg15: memref<32x96xf32, #tpu.memory_space<vmem>>, %arg16: memref<1x96xf32, #tpu.memory_space<vmem>>, %arg17: memref<32x96xf32, #tpu.memory_space<vmem>>, %arg18: memref<1x96xf32, #tpu.memory_space<vmem>>, %arg19: memref<32x32xf32, #tpu.memory_space<vmem>>, %arg20: memref<1x32xf32, #tpu.memory_space<vmem>>, %arg21: memref<1x32xf32, #tpu.memory_space<vmem>>, %arg22: memref<1x32xf32, #tpu.memory_space<vmem>>, %arg23: memref<32x4xf32, #tpu.memory_space<vmem>>, %arg24: memref<1x4xf32, #tpu.memory_space<vmem>>, %arg25: memref<2x4xf32, #tpu.memory_space<vmem>>) attributes {dimension_semantics = [], scalar_prefetch = 0 : i64, scratch_operands = 0 : i64, tpu.core_type = #tpu.core_type<tc>} {
    %c0 = arith.constant 0 : index
    %c0_0 = arith.constant 0 : index
    %0 = vector.load %arg0[%c0, %c0_0] : memref<16x5xf32, #tpu.memory_space<vmem>>, vector<16x5xf32>
    %c0_1 = arith.constant 0 : index
    %c0_2 = arith.constant 0 : index
    %1 = vector.load %arg2[%c0_1, %c0_2] : memref<5x32xf32, #tpu.memory_space<vmem>>, vector<5x32xf32>
    %cst = arith.constant dense<0.000000e+00> : vector<16x32xf32>
    %2 = tpu.matmul %0, %1, %cst {dimension_numbers = #tpu.dot_dimension_numbers<[1], [0], [0], [1], [0, 0, 1, 1], [], []>} : vector<16x5xf32>, vector<5x32xf32>, vector<16x32xf32> -> vector<16x32xf32>
    %c0_3 = arith.constant 0 : index
    %c0_4 = arith.constant 0 : index
    %3 = vector.load %arg3[%c0_3, %c0_4] : memref<1x32xf32, #tpu.memory_space<vmem>>, vector<1x32xf32>
    %4 = vector.broadcast %3 : vector<1x32xf32> to vector<16x32xf32>
    %5 = arith.addf %2, %4 : vector<16x32xf32>
    %c0_5 = arith.constant 0 : index
    %c0_6 = arith.constant 0 : index
    %6 = vector.load %arg4[%c0_5, %c0_6] : memref<1x32xf32, #tpu.memory_space<vmem>>, vector<1x32xf32>
    %c0_7 = arith.constant 0 : index
    %c0_8 = arith.constant 0 : index
    %7 = vector.load %arg5[%c0_7, %c0_8] : memref<1x32xf32, #tpu.memory_space<vmem>>, vector<1x32xf32>
    %cst_9 = arith.constant dense<0.000000e+00> : vector<16xf32>
    %8 = vector.multi_reduction <add>, %5, %cst_9 [1] : vector<16x32xf32> to vector<16xf32>
    %9 = vector.shape_cast %8 : vector<16xf32> to vector<16x1xf32>
    %cst_10 = arith.constant 3.200000e+01 : f32
    %10 = vector.broadcast %cst_10 : f32 to vector<16x1xf32>
    %11 = arith.divf %9, %10 : vector<16x1xf32>
    %12 = vector.broadcast %11 : vector<16x1xf32> to vector<16x32xf32>
    %13 = arith.subf %5, %12 : vector<16x32xf32>
    %14 = arith.mulf %13, %13 : vector<16x32xf32>
    %cst_11 = arith.constant dense<0.000000e+00> : vector<16xf32>
    %15 = vector.multi_reduction <add>, %14, %cst_11 [1] : vector<16x32xf32> to vector<16xf32>
    %16 = vector.shape_cast %15 : vector<16xf32> to vector<16x1xf32>
    %cst_12 = arith.constant 3.200000e+01 : f32
    %17 = vector.broadcast %cst_12 : f32 to vector<16x1xf32>
    %18 = arith.divf %16, %17 : vector<16x1xf32>
    %19 = vector.broadcast %11 : vector<16x1xf32> to vector<16x32xf32>
    %20 = arith.subf %5, %19 : vector<16x32xf32>
    %cst_13 = arith.constant 9.99999974E-6 : f32
    %21 = vector.broadcast %cst_13 : f32 to vector<16x1xf32>
    %22 = arith.addf %18, %21 : vector<16x1xf32>
    %23 = math.rsqrt %22 : vector<16x1xf32>
    %24 = vector.broadcast %23 : vector<16x1xf32> to vector<16x32xf32>
    %25 = arith.mulf %20, %24 : vector<16x32xf32>
    %26 = vector.broadcast %6 : vector<1x32xf32> to vector<16x32xf32>
    %27 = arith.mulf %25, %26 : vector<16x32xf32>
    %28 = vector.broadcast %7 : vector<1x32xf32> to vector<16x32xf32>
    %29 = arith.addf %27, %28 : vector<16x32xf32>
    %cst_14 = arith.constant 0.000000e+00 : f32
    %30 = vector.broadcast %cst_14 : f32 to vector<16x32xf32>
    %31 = arith.cmpf oge, %29, %30 : vector<16x32xf32>
    %cst_15 = arith.constant 0.00999999977 : f32
    %32 = vector.broadcast %cst_15 : f32 to vector<16x32xf32>
    %33 = arith.mulf %32, %29 : vector<16x32xf32>
    %34 = arith.select %31, %29, %33 : vector<16x32xi1>, vector<16x32xf32>
    %c0_16 = arith.constant 0 : index
    %c0_17 = arith.constant 0 : index
    %35 = vector.load %arg6[%c0_16, %c0_17] : memref<32x32xf32, #tpu.memory_space<vmem>>, vector<32x32xf32>
    %cst_18 = arith.constant dense<0.000000e+00> : vector<16x32xf32>
    %36 = tpu.matmul %34, %35, %cst_18 {dimension_numbers = #tpu.dot_dimension_numbers<[1], [0], [0], [1], [0, 0, 1, 1], [], []>} : vector<16x32xf32>, vector<32x32xf32>, vector<16x32xf32> -> vector<16x32xf32>
    %c0_19 = arith.constant 0 : index
    %c0_20 = arith.constant 0 : index
    %37 = vector.load %arg7[%c0_19, %c0_20] : memref<1x32xf32, #tpu.memory_space<vmem>>, vector<1x32xf32>
    %38 = vector.broadcast %37 : vector<1x32xf32> to vector<16x32xf32>
    %39 = arith.addf %36, %38 : vector<16x32xf32>
    %c0_21 = arith.constant 0 : index
    %c0_22 = arith.constant 0 : index
    %40 = vector.load %arg8[%c0_21, %c0_22] : memref<1x32xf32, #tpu.memory_space<vmem>>, vector<1x32xf32>
    %c0_23 = arith.constant 0 : index
    %c0_24 = arith.constant 0 : index
    %41 = vector.load %arg9[%c0_23, %c0_24] : memref<1x32xf32, #tpu.memory_space<vmem>>, vector<1x32xf32>
    %cst_25 = arith.constant dense<0.000000e+00> : vector<16xf32>
    %42 = vector.multi_reduction <add>, %39, %cst_25 [1] : vector<16x32xf32> to vector<16xf32>
    %43 = vector.shape_cast %42 : vector<16xf32> to vector<16x1xf32>
    %cst_26 = arith.constant 3.200000e+01 : f32
    %44 = vector.broadcast %cst_26 : f32 to vector<16x1xf32>
    %45 = arith.divf %43, %44 : vector<16x1xf32>
    %46 = vector.broadcast %45 : vector<16x1xf32> to vector<16x32xf32>
    %47 = arith.subf %39, %46 : vector<16x32xf32>
    %48 = arith.mulf %47, %47 : vector<16x32xf32>
    %cst_27 = arith.constant dense<0.000000e+00> : vector<16xf32>
    %49 = vector.multi_reduction <add>, %48, %cst_27 [1] : vector<16x32xf32> to vector<16xf32>
    %50 = vector.shape_cast %49 : vector<16xf32> to vector<16x1xf32>
    %cst_28 = arith.constant 3.200000e+01 : f32
    %51 = vector.broadcast %cst_28 : f32 to vector<16x1xf32>
    %52 = arith.divf %50, %51 : vector<16x1xf32>
    %53 = vector.broadcast %45 : vector<16x1xf32> to vector<16x32xf32>
    %54 = arith.subf %39, %53 : vector<16x32xf32>
    %cst_29 = arith.constant 9.99999974E-6 : f32
    %55 = vector.broadcast %cst_29 : f32 to vector<16x1xf32>
    %56 = arith.addf %52, %55 : vector<16x1xf32>
    %57 = math.rsqrt %56 : vector<16x1xf32>
    %58 = vector.broadcast %57 : vector<16x1xf32> to vector<16x32xf32>
    %59 = arith.mulf %54, %58 : vector<16x32xf32>
    %60 = vector.broadcast %40 : vector<1x32xf32> to vector<16x32xf32>
    %61 = arith.mulf %59, %60 : vector<16x32xf32>
    %62 = vector.broadcast %41 : vector<1x32xf32> to vector<16x32xf32>
    %63 = arith.addf %61, %62 : vector<16x32xf32>
    %cst_30 = arith.constant 0.000000e+00 : f32
    %64 = vector.broadcast %cst_30 : f32 to vector<16x32xf32>
    %65 = arith.cmpf oge, %63, %64 : vector<16x32xf32>
    %cst_31 = arith.constant 0.00999999977 : f32
    %66 = vector.broadcast %cst_31 : f32 to vector<16x32xf32>
    %67 = arith.mulf %66, %63 : vector<16x32xf32>
    %68 = arith.select %65, %63, %67 : vector<16x32xi1>, vector<16x32xf32>
    %c0_32 = arith.constant 0 : index
    %c0_33 = arith.constant 0 : index
    %69 = vector.load %arg1[%c0_32, %c0_33] : memref<16x128xbf16, #tpu.memory_space<vmem>>, vector<16x128xbf16>
    %70 = arith.extf %69 : vector<16x128xbf16> to vector<16x128xf32>
    %c0_34 = arith.constant 0 : index
    %c0_35 = arith.constant 0 : index
    %71 = vector.load %arg10[%c0_34, %c0_35] : memref<128x32xf32, #tpu.memory_space<vmem>>, vector<128x32xf32>
    %cst_36 = arith.constant dense<0.000000e+00> : vector<16x32xf32>
    %72 = tpu.matmul %70, %71, %cst_36 {dimension_numbers = #tpu.dot_dimension_numbers<[1], [0], [0], [1], [0, 0, 1, 1], [], []>} : vector<16x128xf32>, vector<128x32xf32>, vector<16x32xf32> -> vector<16x32xf32>
    %c0_37 = arith.constant 0 : index
    %c0_38 = arith.constant 0 : index
    %73 = vector.load %arg11[%c0_37, %c0_38] : memref<1x32xf32, #tpu.memory_space<vmem>>, vector<1x32xf32>
    %74 = vector.broadcast %73 : vector<1x32xf32> to vector<16x32xf32>
    %75 = arith.addf %72, %74 : vector<16x32xf32>
    %cst_39 = arith.constant 0.000000e+00 : f32
    %76 = vector.broadcast %cst_39 : f32 to vector<16x32xf32>
    %77 = arith.maximumf %75, %76 : vector<16x32xf32>
    %c0_40 = arith.constant 0 : index
    %c0_41 = arith.constant 0 : index
    %78 = vector.load %arg12[%c0_40, %c0_41] : memref<32x32xf32, #tpu.memory_space<vmem>>, vector<32x32xf32>
    %cst_42 = arith.constant dense<0.000000e+00> : vector<16x32xf32>
    %79 = tpu.matmul %68, %78, %cst_42 {dimension_numbers = #tpu.dot_dimension_numbers<[1], [0], [0], [1], [0, 0, 1, 1], [], []>} : vector<16x32xf32>, vector<32x32xf32>, vector<16x32xf32> -> vector<16x32xf32>
    %c0_43 = arith.constant 0 : index
    %c0_44 = arith.constant 0 : index
    %80 = vector.load %arg13[%c0_43, %c0_44] : memref<32x32xf32, #tpu.memory_space<vmem>>, vector<32x32xf32>
    %cst_45 = arith.constant dense<0.000000e+00> : vector<16x32xf32>
    %81 = tpu.matmul %77, %80, %cst_45 {dimension_numbers = #tpu.dot_dimension_numbers<[1], [0], [0], [1], [0, 0, 1, 1], [], []>} : vector<16x32xf32>, vector<32x32xf32>, vector<16x32xf32> -> vector<16x32xf32>
    %82 = arith.addf %79, %81 : vector<16x32xf32>
    %c0_46 = arith.constant 0 : index
    %c0_47 = arith.constant 0 : index
    %83 = vector.load %arg14[%c0_46, %c0_47] : memref<1x32xf32, #tpu.memory_space<vmem>>, vector<1x32xf32>
    %84 = vector.broadcast %83 : vector<1x32xf32> to vector<16x32xf32>
    %85 = arith.addf %82, %84 : vector<16x32xf32>
    %cst_48 = arith.constant 0.000000e+00 : f32
    %86 = vector.broadcast %cst_48 : f32 to vector<16x32xf32>
    %87 = arith.maximumf %85, %86 : vector<16x32xf32>
    %c0_49 = arith.constant 0 : index
    %c0_50 = arith.constant 0 : index
    %88 = vector.load %arg15[%c0_49, %c0_50] : memref<32x96xf32, #tpu.memory_space<vmem>>, vector<32x96xf32>
    %cst_51 = arith.constant dense<0.000000e+00> : vector<16x96xf32>
    %89 = tpu.matmul %87, %88, %cst_51 {dimension_numbers = #tpu.dot_dimension_numbers<[1], [0], [0], [1], [0, 0, 1, 1], [], []>} : vector<16x32xf32>, vector<32x96xf32>, vector<16x96xf32> -> vector<16x96xf32>
    %c0_52 = arith.constant 0 : index
    %c0_53 = arith.constant 0 : index
    %90 = vector.load %arg16[%c0_52, %c0_53] : memref<1x96xf32, #tpu.memory_space<vmem>>, vector<1x96xf32>
    %91 = vector.broadcast %90 : vector<1x96xf32> to vector<16x96xf32>
    %92 = arith.addf %89, %91 : vector<16x96xf32>
    %93 = vector.extract_strided_slice %92 {offsets = [0, 0], sizes = [16, 32], strides = [1, 1]} : vector<16x96xf32> to vector<16x32xf32>
    %94 = vector.extract_strided_slice %92 {offsets = [0, 32], sizes = [16, 32], strides = [1, 1]} : vector<16x96xf32> to vector<16x32xf32>
    %95 = vector.extract_strided_slice %92 {offsets = [0, 64], sizes = [16, 32], strides = [1, 1]} : vector<16x96xf32> to vector<16x32xf32>
    %c0_54 = arith.constant 0 : index
    %c0_55 = arith.constant 0 : index
    %96 = vector.load %arg17[%c0_54, %c0_55] : memref<32x96xf32, #tpu.memory_space<vmem>>, vector<32x96xf32>
    %97 = vector.extract_strided_slice %96 {offsets = [0, 0], sizes = [32, 32], strides = [1, 1]} : vector<32x96xf32> to vector<32x32xf32>
    %98 = vector.extract_strided_slice %96 {offsets = [0, 32], sizes = [32, 32], strides = [1, 1]} : vector<32x96xf32> to vector<32x32xf32>
    %99 = vector.extract_strided_slice %96 {offsets = [0, 64], sizes = [32, 32], strides = [1, 1]} : vector<32x96xf32> to vector<32x32xf32>
    %c0_56 = arith.constant 0 : index
    %c0_57 = arith.constant 0 : index
    %100 = vector.load %arg18[%c0_56, %c0_57] : memref<1x96xf32, #tpu.memory_space<vmem>>, vector<1x96xf32>
    %101 = vector.extract_strided_slice %100 {offsets = [0, 0], sizes = [1, 32], strides = [1, 1]} : vector<1x96xf32> to vector<1x32xf32>
    %102 = vector.extract_strided_slice %100 {offsets = [0, 32], sizes = [1, 32], strides = [1, 1]} : vector<1x96xf32> to vector<1x32xf32>
    %103 = vector.extract_strided_slice %100 {offsets = [0, 64], sizes = [1, 32], strides = [1, 1]} : vector<1x96xf32> to vector<1x32xf32>
    %cst_58 = arith.constant 0.000000e+00 : f32
    %104 = vector.broadcast %cst_58 : f32 to vector<2x32xf32>
    %cst_59 = arith.constant dense<0.000000e+00> : vector<2x32xf32>
    %105 = tpu.matmul %104, %97, %cst_59 {dimension_numbers = #tpu.dot_dimension_numbers<[1], [0], [0], [1], [0, 0, 1, 1], [], []>} : vector<2x32xf32>, vector<32x32xf32>, vector<2x32xf32> -> vector<2x32xf32>
    %106 = vector.broadcast %101 : vector<1x32xf32> to vector<2x32xf32>
    %107 = arith.addf %105, %106 : vector<2x32xf32>
    %cst_60 = arith.constant dense<0.000000e+00> : vector<2x32xf32>
    %108 = tpu.matmul %104, %98, %cst_60 {dimension_numbers = #tpu.dot_dimension_numbers<[1], [0], [0], [1], [0, 0, 1, 1], [], []>} : vector<2x32xf32>, vector<32x32xf32>, vector<2x32xf32> -> vector<2x32xf32>
    %109 = vector.broadcast %102 : vector<1x32xf32> to vector<2x32xf32>
    %110 = arith.addf %108, %109 : vector<2x32xf32>
    %cst_61 = arith.constant dense<0.000000e+00> : vector<2x32xf32>
    %111 = tpu.matmul %104, %99, %cst_61 {dimension_numbers = #tpu.dot_dimension_numbers<[1], [0], [0], [1], [0, 0, 1, 1], [], []>} : vector<2x32xf32>, vector<32x32xf32>, vector<2x32xf32> -> vector<2x32xf32>
    %112 = vector.broadcast %103 : vector<1x32xf32> to vector<2x32xf32>
    %113 = arith.addf %111, %112 : vector<2x32xf32>
    %114 = vector.extract_strided_slice %93 {offsets = [0, 0], sizes = [2, 32], strides = [1, 1]} : vector<16x32xf32> to vector<2x32xf32>
    %115 = arith.addf %114, %107 : vector<2x32xf32>
    %116 = arith.negf %115 : vector<2x32xf32>
    %117 = math.exp %116 : vector<2x32xf32>
    %cst_62 = arith.constant 1.000000e+00 : f32
    %118 = vector.broadcast %cst_62 : f32 to vector<2x32xf32>
    %119 = arith.addf %118, %117 : vector<2x32xf32>
    %120 = arith.divf %118, %119 : vector<2x32xf32>
    %121 = vector.extract_strided_slice %94 {offsets = [0, 0], sizes = [2, 32], strides = [1, 1]} : vector<16x32xf32> to vector<2x32xf32>
    %122 = arith.addf %121, %110 : vector<2x32xf32>
    %123 = arith.negf %122 : vector<2x32xf32>
    %124 = math.exp %123 : vector<2x32xf32>
    %cst_63 = arith.constant 1.000000e+00 : f32
    %125 = vector.broadcast %cst_63 : f32 to vector<2x32xf32>
    %126 = arith.addf %125, %124 : vector<2x32xf32>
    %127 = arith.divf %125, %126 : vector<2x32xf32>
    %128 = vector.extract_strided_slice %95 {offsets = [0, 0], sizes = [2, 32], strides = [1, 1]} : vector<16x32xf32> to vector<2x32xf32>
    %129 = arith.mulf %120, %113 : vector<2x32xf32>
    %130 = arith.addf %128, %129 : vector<2x32xf32>
    %131 = math.tanh %130 : vector<2x32xf32>
    %cst_64 = arith.constant 1.000000e+00 : f32
    %132 = vector.broadcast %cst_64 : f32 to vector<2x32xf32>
    %133 = arith.subf %132, %127 : vector<2x32xf32>
    %134 = arith.mulf %133, %131 : vector<2x32xf32>
    %135 = arith.mulf %127, %104 : vector<2x32xf32>
    %136 = arith.addf %134, %135 : vector<2x32xf32>
    %cst_65 = arith.constant dense<0.000000e+00> : vector<2x32xf32>
    %137 = tpu.matmul %136, %97, %cst_65 {dimension_numbers = #tpu.dot_dimension_numbers<[1], [0], [0], [1], [0, 0, 1, 1], [], []>} : vector<2x32xf32>, vector<32x32xf32>, vector<2x32xf32> -> vector<2x32xf32>
    %138 = vector.broadcast %101 : vector<1x32xf32> to vector<2x32xf32>
    %139 = arith.addf %137, %138 : vector<2x32xf32>
    %cst_66 = arith.constant dense<0.000000e+00> : vector<2x32xf32>
    %140 = tpu.matmul %136, %98, %cst_66 {dimension_numbers = #tpu.dot_dimension_numbers<[1], [0], [0], [1], [0, 0, 1, 1], [], []>} : vector<2x32xf32>, vector<32x32xf32>, vector<2x32xf32> -> vector<2x32xf32>
    %141 = vector.broadcast %102 : vector<1x32xf32> to vector<2x32xf32>
    %142 = arith.addf %140, %141 : vector<2x32xf32>
    %cst_67 = arith.constant dense<0.000000e+00> : vector<2x32xf32>
    %143 = tpu.matmul %136, %99, %cst_67 {dimension_numbers = #tpu.dot_dimension_numbers<[1], [0], [0], [1], [0, 0, 1, 1], [], []>} : vector<2x32xf32>, vector<32x32xf32>, vector<2x32xf32> -> vector<2x32xf32>
    %144 = vector.broadcast %103 : vector<1x32xf32> to vector<2x32xf32>
    %145 = arith.addf %143, %144 : vector<2x32xf32>
    %146 = vector.extract_strided_slice %93 {offsets = [2, 0], sizes = [2, 32], strides = [1, 1]} : vector<16x32xf32> to vector<2x32xf32>
    %147 = arith.addf %146, %139 : vector<2x32xf32>
    %148 = arith.negf %147 : vector<2x32xf32>
    %149 = math.exp %148 : vector<2x32xf32>
    %cst_68 = arith.constant 1.000000e+00 : f32
    %150 = vector.broadcast %cst_68 : f32 to vector<2x32xf32>
    %151 = arith.addf %150, %149 : vector<2x32xf32>
    %152 = arith.divf %150, %151 : vector<2x32xf32>
    %153 = vector.extract_strided_slice %94 {offsets = [2, 0], sizes = [2, 32], strides = [1, 1]} : vector<16x32xf32> to vector<2x32xf32>
    %154 = arith.addf %153, %142 : vector<2x32xf32>
    %155 = arith.negf %154 : vector<2x32xf32>
    %156 = math.exp %155 : vector<2x32xf32>
    %cst_69 = arith.constant 1.000000e+00 : f32
    %157 = vector.broadcast %cst_69 : f32 to vector<2x32xf32>
    %158 = arith.addf %157, %156 : vector<2x32xf32>
    %159 = arith.divf %157, %158 : vector<2x32xf32>
    %160 = vector.extract_strided_slice %95 {offsets = [2, 0], sizes = [2, 32], strides = [1, 1]} : vector<16x32xf32> to vector<2x32xf32>
    %161 = arith.mulf %152, %145 : vector<2x32xf32>
    %162 = arith.addf %160, %161 : vector<2x32xf32>
    %163 = math.tanh %162 : vector<2x32xf32>
    %cst_70 = arith.constant 1.000000e+00 : f32
    %164 = vector.broadcast %cst_70 : f32 to vector<2x32xf32>
    %165 = arith.subf %164, %159 : vector<2x32xf32>
    %166 = arith.mulf %165, %163 : vector<2x32xf32>
    %167 = arith.mulf %159, %136 : vector<2x32xf32>
    %168 = arith.addf %166, %167 : vector<2x32xf32>
    %cst_71 = arith.constant dense<0.000000e+00> : vector<2x32xf32>
    %169 = tpu.matmul %168, %97, %cst_71 {dimension_numbers = #tpu.dot_dimension_numbers<[1], [0], [0], [1], [0, 0, 1, 1], [], []>} : vector<2x32xf32>, vector<32x32xf32>, vector<2x32xf32> -> vector<2x32xf32>
    %170 = vector.broadcast %101 : vector<1x32xf32> to vector<2x32xf32>
    %171 = arith.addf %169, %170 : vector<2x32xf32>
    %cst_72 = arith.constant dense<0.000000e+00> : vector<2x32xf32>
    %172 = tpu.matmul %168, %98, %cst_72 {dimension_numbers = #tpu.dot_dimension_numbers<[1], [0], [0], [1], [0, 0, 1, 1], [], []>} : vector<2x32xf32>, vector<32x32xf32>, vector<2x32xf32> -> vector<2x32xf32>
    %173 = vector.broadcast %102 : vector<1x32xf32> to vector<2x32xf32>
    %174 = arith.addf %172, %173 : vector<2x32xf32>
    %cst_73 = arith.constant dense<0.000000e+00> : vector<2x32xf32>
    %175 = tpu.matmul %168, %99, %cst_73 {dimension_numbers = #tpu.dot_dimension_numbers<[1], [0], [0], [1], [0, 0, 1, 1], [], []>} : vector<2x32xf32>, vector<32x32xf32>, vector<2x32xf32> -> vector<2x32xf32>
    %176 = vector.broadcast %103 : vector<1x32xf32> to vector<2x32xf32>
    %177 = arith.addf %175, %176 : vector<2x32xf32>
    %178 = vector.extract_strided_slice %93 {offsets = [4, 0], sizes = [2, 32], strides = [1, 1]} : vector<16x32xf32> to vector<2x32xf32>
    %179 = arith.addf %178, %171 : vector<2x32xf32>
    %180 = arith.negf %179 : vector<2x32xf32>
    %181 = math.exp %180 : vector<2x32xf32>
    %cst_74 = arith.constant 1.000000e+00 : f32
    %182 = vector.broadcast %cst_74 : f32 to vector<2x32xf32>
    %183 = arith.addf %182, %181 : vector<2x32xf32>
    %184 = arith.divf %182, %183 : vector<2x32xf32>
    %185 = vector.extract_strided_slice %94 {offsets = [4, 0], sizes = [2, 32], strides = [1, 1]} : vector<16x32xf32> to vector<2x32xf32>
    %186 = arith.addf %185, %174 : vector<2x32xf32>
    %187 = arith.negf %186 : vector<2x32xf32>
    %188 = math.exp %187 : vector<2x32xf32>
    %cst_75 = arith.constant 1.000000e+00 : f32
    %189 = vector.broadcast %cst_75 : f32 to vector<2x32xf32>
    %190 = arith.addf %189, %188 : vector<2x32xf32>
    %191 = arith.divf %189, %190 : vector<2x32xf32>
    %192 = vector.extract_strided_slice %95 {offsets = [4, 0], sizes = [2, 32], strides = [1, 1]} : vector<16x32xf32> to vector<2x32xf32>
    %193 = arith.mulf %184, %177 : vector<2x32xf32>
    %194 = arith.addf %192, %193 : vector<2x32xf32>
    %195 = math.tanh %194 : vector<2x32xf32>
    %cst_76 = arith.constant 1.000000e+00 : f32
    %196 = vector.broadcast %cst_76 : f32 to vector<2x32xf32>
    %197 = arith.subf %196, %191 : vector<2x32xf32>
    %198 = arith.mulf %197, %195 : vector<2x32xf32>
    %199 = arith.mulf %191, %168 : vector<2x32xf32>
    %200 = arith.addf %198, %199 : vector<2x32xf32>
    %cst_77 = arith.constant dense<0.000000e+00> : vector<2x32xf32>
    %201 = tpu.matmul %200, %97, %cst_77 {dimension_numbers = #tpu.dot_dimension_numbers<[1], [0], [0], [1], [0, 0, 1, 1], [], []>} : vector<2x32xf32>, vector<32x32xf32>, vector<2x32xf32> -> vector<2x32xf32>
    %202 = vector.broadcast %101 : vector<1x32xf32> to vector<2x32xf32>
    %203 = arith.addf %201, %202 : vector<2x32xf32>
    %cst_78 = arith.constant dense<0.000000e+00> : vector<2x32xf32>
    %204 = tpu.matmul %200, %98, %cst_78 {dimension_numbers = #tpu.dot_dimension_numbers<[1], [0], [0], [1], [0, 0, 1, 1], [], []>} : vector<2x32xf32>, vector<32x32xf32>, vector<2x32xf32> -> vector<2x32xf32>
    %205 = vector.broadcast %102 : vector<1x32xf32> to vector<2x32xf32>
    %206 = arith.addf %204, %205 : vector<2x32xf32>
    %cst_79 = arith.constant dense<0.000000e+00> : vector<2x32xf32>
    %207 = tpu.matmul %200, %99, %cst_79 {dimension_numbers = #tpu.dot_dimension_numbers<[1], [0], [0], [1], [0, 0, 1, 1], [], []>} : vector<2x32xf32>, vector<32x32xf32>, vector<2x32xf32> -> vector<2x32xf32>
    %208 = vector.broadcast %103 : vector<1x32xf32> to vector<2x32xf32>
    %209 = arith.addf %207, %208 : vector<2x32xf32>
    %210 = vector.extract_strided_slice %93 {offsets = [6, 0], sizes = [2, 32], strides = [1, 1]} : vector<16x32xf32> to vector<2x32xf32>
    %211 = arith.addf %210, %203 : vector<2x32xf32>
    %212 = arith.negf %211 : vector<2x32xf32>
    %213 = math.exp %212 : vector<2x32xf32>
    %cst_80 = arith.constant 1.000000e+00 : f32
    %214 = vector.broadcast %cst_80 : f32 to vector<2x32xf32>
    %215 = arith.addf %214, %213 : vector<2x32xf32>
    %216 = arith.divf %214, %215 : vector<2x32xf32>
    %217 = vector.extract_strided_slice %94 {offsets = [6, 0], sizes = [2, 32], strides = [1, 1]} : vector<16x32xf32> to vector<2x32xf32>
    %218 = arith.addf %217, %206 : vector<2x32xf32>
    %219 = arith.negf %218 : vector<2x32xf32>
    %220 = math.exp %219 : vector<2x32xf32>
    %cst_81 = arith.constant 1.000000e+00 : f32
    %221 = vector.broadcast %cst_81 : f32 to vector<2x32xf32>
    %222 = arith.addf %221, %220 : vector<2x32xf32>
    %223 = arith.divf %221, %222 : vector<2x32xf32>
    %224 = vector.extract_strided_slice %95 {offsets = [6, 0], sizes = [2, 32], strides = [1, 1]} : vector<16x32xf32> to vector<2x32xf32>
    %225 = arith.mulf %216, %209 : vector<2x32xf32>
    %226 = arith.addf %224, %225 : vector<2x32xf32>
    %227 = math.tanh %226 : vector<2x32xf32>
    %cst_82 = arith.constant 1.000000e+00 : f32
    %228 = vector.broadcast %cst_82 : f32 to vector<2x32xf32>
    %229 = arith.subf %228, %223 : vector<2x32xf32>
    %230 = arith.mulf %229, %227 : vector<2x32xf32>
    %231 = arith.mulf %223, %200 : vector<2x32xf32>
    %232 = arith.addf %230, %231 : vector<2x32xf32>
    %cst_83 = arith.constant dense<0.000000e+00> : vector<2x32xf32>
    %233 = tpu.matmul %232, %97, %cst_83 {dimension_numbers = #tpu.dot_dimension_numbers<[1], [0], [0], [1], [0, 0, 1, 1], [], []>} : vector<2x32xf32>, vector<32x32xf32>, vector<2x32xf32> -> vector<2x32xf32>
    %234 = vector.broadcast %101 : vector<1x32xf32> to vector<2x32xf32>
    %235 = arith.addf %233, %234 : vector<2x32xf32>
    %cst_84 = arith.constant dense<0.000000e+00> : vector<2x32xf32>
    %236 = tpu.matmul %232, %98, %cst_84 {dimension_numbers = #tpu.dot_dimension_numbers<[1], [0], [0], [1], [0, 0, 1, 1], [], []>} : vector<2x32xf32>, vector<32x32xf32>, vector<2x32xf32> -> vector<2x32xf32>
    %237 = vector.broadcast %102 : vector<1x32xf32> to vector<2x32xf32>
    %238 = arith.addf %236, %237 : vector<2x32xf32>
    %cst_85 = arith.constant dense<0.000000e+00> : vector<2x32xf32>
    %239 = tpu.matmul %232, %99, %cst_85 {dimension_numbers = #tpu.dot_dimension_numbers<[1], [0], [0], [1], [0, 0, 1, 1], [], []>} : vector<2x32xf32>, vector<32x32xf32>, vector<2x32xf32> -> vector<2x32xf32>
    %240 = vector.broadcast %103 : vector<1x32xf32> to vector<2x32xf32>
    %241 = arith.addf %239, %240 : vector<2x32xf32>
    %242 = vector.extract_strided_slice %93 {offsets = [8, 0], sizes = [2, 32], strides = [1, 1]} : vector<16x32xf32> to vector<2x32xf32>
    %243 = arith.addf %242, %235 : vector<2x32xf32>
    %244 = arith.negf %243 : vector<2x32xf32>
    %245 = math.exp %244 : vector<2x32xf32>
    %cst_86 = arith.constant 1.000000e+00 : f32
    %246 = vector.broadcast %cst_86 : f32 to vector<2x32xf32>
    %247 = arith.addf %246, %245 : vector<2x32xf32>
    %248 = arith.divf %246, %247 : vector<2x32xf32>
    %249 = vector.extract_strided_slice %94 {offsets = [8, 0], sizes = [2, 32], strides = [1, 1]} : vector<16x32xf32> to vector<2x32xf32>
    %250 = arith.addf %249, %238 : vector<2x32xf32>
    %251 = arith.negf %250 : vector<2x32xf32>
    %252 = math.exp %251 : vector<2x32xf32>
    %cst_87 = arith.constant 1.000000e+00 : f32
    %253 = vector.broadcast %cst_87 : f32 to vector<2x32xf32>
    %254 = arith.addf %253, %252 : vector<2x32xf32>
    %255 = arith.divf %253, %254 : vector<2x32xf32>
    %256 = vector.extract_strided_slice %95 {offsets = [8, 0], sizes = [2, 32], strides = [1, 1]} : vector<16x32xf32> to vector<2x32xf32>
    %257 = arith.mulf %248, %241 : vector<2x32xf32>
    %258 = arith.addf %256, %257 : vector<2x32xf32>
    %259 = math.tanh %258 : vector<2x32xf32>
    %cst_88 = arith.constant 1.000000e+00 : f32
    %260 = vector.broadcast %cst_88 : f32 to vector<2x32xf32>
    %261 = arith.subf %260, %255 : vector<2x32xf32>
    %262 = arith.mulf %261, %259 : vector<2x32xf32>
    %263 = arith.mulf %255, %232 : vector<2x32xf32>
    %264 = arith.addf %262, %263 : vector<2x32xf32>
    %cst_89 = arith.constant dense<0.000000e+00> : vector<2x32xf32>
    %265 = tpu.matmul %264, %97, %cst_89 {dimension_numbers = #tpu.dot_dimension_numbers<[1], [0], [0], [1], [0, 0, 1, 1], [], []>} : vector<2x32xf32>, vector<32x32xf32>, vector<2x32xf32> -> vector<2x32xf32>
    %266 = vector.broadcast %101 : vector<1x32xf32> to vector<2x32xf32>
    %267 = arith.addf %265, %266 : vector<2x32xf32>
    %cst_90 = arith.constant dense<0.000000e+00> : vector<2x32xf32>
    %268 = tpu.matmul %264, %98, %cst_90 {dimension_numbers = #tpu.dot_dimension_numbers<[1], [0], [0], [1], [0, 0, 1, 1], [], []>} : vector<2x32xf32>, vector<32x32xf32>, vector<2x32xf32> -> vector<2x32xf32>
    %269 = vector.broadcast %102 : vector<1x32xf32> to vector<2x32xf32>
    %270 = arith.addf %268, %269 : vector<2x32xf32>
    %cst_91 = arith.constant dense<0.000000e+00> : vector<2x32xf32>
    %271 = tpu.matmul %264, %99, %cst_91 {dimension_numbers = #tpu.dot_dimension_numbers<[1], [0], [0], [1], [0, 0, 1, 1], [], []>} : vector<2x32xf32>, vector<32x32xf32>, vector<2x32xf32> -> vector<2x32xf32>
    %272 = vector.broadcast %103 : vector<1x32xf32> to vector<2x32xf32>
    %273 = arith.addf %271, %272 : vector<2x32xf32>
    %274 = vector.extract_strided_slice %93 {offsets = [10, 0], sizes = [2, 32], strides = [1, 1]} : vector<16x32xf32> to vector<2x32xf32>
    %275 = arith.addf %274, %267 : vector<2x32xf32>
    %276 = arith.negf %275 : vector<2x32xf32>
    %277 = math.exp %276 : vector<2x32xf32>
    %cst_92 = arith.constant 1.000000e+00 : f32
    %278 = vector.broadcast %cst_92 : f32 to vector<2x32xf32>
    %279 = arith.addf %278, %277 : vector<2x32xf32>
    %280 = arith.divf %278, %279 : vector<2x32xf32>
    %281 = vector.extract_strided_slice %94 {offsets = [10, 0], sizes = [2, 32], strides = [1, 1]} : vector<16x32xf32> to vector<2x32xf32>
    %282 = arith.addf %281, %270 : vector<2x32xf32>
    %283 = arith.negf %282 : vector<2x32xf32>
    %284 = math.exp %283 : vector<2x32xf32>
    %cst_93 = arith.constant 1.000000e+00 : f32
    %285 = vector.broadcast %cst_93 : f32 to vector<2x32xf32>
    %286 = arith.addf %285, %284 : vector<2x32xf32>
    %287 = arith.divf %285, %286 : vector<2x32xf32>
    %288 = vector.extract_strided_slice %95 {offsets = [10, 0], sizes = [2, 32], strides = [1, 1]} : vector<16x32xf32> to vector<2x32xf32>
    %289 = arith.mulf %280, %273 : vector<2x32xf32>
    %290 = arith.addf %288, %289 : vector<2x32xf32>
    %291 = math.tanh %290 : vector<2x32xf32>
    %cst_94 = arith.constant 1.000000e+00 : f32
    %292 = vector.broadcast %cst_94 : f32 to vector<2x32xf32>
    %293 = arith.subf %292, %287 : vector<2x32xf32>
    %294 = arith.mulf %293, %291 : vector<2x32xf32>
    %295 = arith.mulf %287, %264 : vector<2x32xf32>
    %296 = arith.addf %294, %295 : vector<2x32xf32>
    %cst_95 = arith.constant dense<0.000000e+00> : vector<2x32xf32>
    %297 = tpu.matmul %296, %97, %cst_95 {dimension_numbers = #tpu.dot_dimension_numbers<[1], [0], [0], [1], [0, 0, 1, 1], [], []>} : vector<2x32xf32>, vector<32x32xf32>, vector<2x32xf32> -> vector<2x32xf32>
    %298 = vector.broadcast %101 : vector<1x32xf32> to vector<2x32xf32>
    %299 = arith.addf %297, %298 : vector<2x32xf32>
    %cst_96 = arith.constant dense<0.000000e+00> : vector<2x32xf32>
    %300 = tpu.matmul %296, %98, %cst_96 {dimension_numbers = #tpu.dot_dimension_numbers<[1], [0], [0], [1], [0, 0, 1, 1], [], []>} : vector<2x32xf32>, vector<32x32xf32>, vector<2x32xf32> -> vector<2x32xf32>
    %301 = vector.broadcast %102 : vector<1x32xf32> to vector<2x32xf32>
    %302 = arith.addf %300, %301 : vector<2x32xf32>
    %cst_97 = arith.constant dense<0.000000e+00> : vector<2x32xf32>
    %303 = tpu.matmul %296, %99, %cst_97 {dimension_numbers = #tpu.dot_dimension_numbers<[1], [0], [0], [1], [0, 0, 1, 1], [], []>} : vector<2x32xf32>, vector<32x32xf32>, vector<2x32xf32> -> vector<2x32xf32>
    %304 = vector.broadcast %103 : vector<1x32xf32> to vector<2x32xf32>
    %305 = arith.addf %303, %304 : vector<2x32xf32>
    %306 = vector.extract_strided_slice %93 {offsets = [12, 0], sizes = [2, 32], strides = [1, 1]} : vector<16x32xf32> to vector<2x32xf32>
    %307 = arith.addf %306, %299 : vector<2x32xf32>
    %308 = arith.negf %307 : vector<2x32xf32>
    %309 = math.exp %308 : vector<2x32xf32>
    %cst_98 = arith.constant 1.000000e+00 : f32
    %310 = vector.broadcast %cst_98 : f32 to vector<2x32xf32>
    %311 = arith.addf %310, %309 : vector<2x32xf32>
    %312 = arith.divf %310, %311 : vector<2x32xf32>
    %313 = vector.extract_strided_slice %94 {offsets = [12, 0], sizes = [2, 32], strides = [1, 1]} : vector<16x32xf32> to vector<2x32xf32>
    %314 = arith.addf %313, %302 : vector<2x32xf32>
    %315 = arith.negf %314 : vector<2x32xf32>
    %316 = math.exp %315 : vector<2x32xf32>
    %cst_99 = arith.constant 1.000000e+00 : f32
    %317 = vector.broadcast %cst_99 : f32 to vector<2x32xf32>
    %318 = arith.addf %317, %316 : vector<2x32xf32>
    %319 = arith.divf %317, %318 : vector<2x32xf32>
    %320 = vector.extract_strided_slice %95 {offsets = [12, 0], sizes = [2, 32], strides = [1, 1]} : vector<16x32xf32> to vector<2x32xf32>
    %321 = arith.mulf %312, %305 : vector<2x32xf32>
    %322 = arith.addf %320, %321 : vector<2x32xf32>
    %323 = math.tanh %322 : vector<2x32xf32>
    %cst_100 = arith.constant 1.000000e+00 : f32
    %324 = vector.broadcast %cst_100 : f32 to vector<2x32xf32>
    %325 = arith.subf %324, %319 : vector<2x32xf32>
    %326 = arith.mulf %325, %323 : vector<2x32xf32>
    %327 = arith.mulf %319, %296 : vector<2x32xf32>
    %328 = arith.addf %326, %327 : vector<2x32xf32>
    %cst_101 = arith.constant dense<0.000000e+00> : vector<2x32xf32>
    %329 = tpu.matmul %328, %97, %cst_101 {dimension_numbers = #tpu.dot_dimension_numbers<[1], [0], [0], [1], [0, 0, 1, 1], [], []>} : vector<2x32xf32>, vector<32x32xf32>, vector<2x32xf32> -> vector<2x32xf32>
    %330 = vector.broadcast %101 : vector<1x32xf32> to vector<2x32xf32>
    %331 = arith.addf %329, %330 : vector<2x32xf32>
    %cst_102 = arith.constant dense<0.000000e+00> : vector<2x32xf32>
    %332 = tpu.matmul %328, %98, %cst_102 {dimension_numbers = #tpu.dot_dimension_numbers<[1], [0], [0], [1], [0, 0, 1, 1], [], []>} : vector<2x32xf32>, vector<32x32xf32>, vector<2x32xf32> -> vector<2x32xf32>
    %333 = vector.broadcast %102 : vector<1x32xf32> to vector<2x32xf32>
    %334 = arith.addf %332, %333 : vector<2x32xf32>
    %cst_103 = arith.constant dense<0.000000e+00> : vector<2x32xf32>
    %335 = tpu.matmul %328, %99, %cst_103 {dimension_numbers = #tpu.dot_dimension_numbers<[1], [0], [0], [1], [0, 0, 1, 1], [], []>} : vector<2x32xf32>, vector<32x32xf32>, vector<2x32xf32> -> vector<2x32xf32>
    %336 = vector.broadcast %103 : vector<1x32xf32> to vector<2x32xf32>
    %337 = arith.addf %335, %336 : vector<2x32xf32>
    %338 = vector.extract_strided_slice %93 {offsets = [14, 0], sizes = [2, 32], strides = [1, 1]} : vector<16x32xf32> to vector<2x32xf32>
    %339 = arith.addf %338, %331 : vector<2x32xf32>
    %340 = arith.negf %339 : vector<2x32xf32>
    %341 = math.exp %340 : vector<2x32xf32>
    %cst_104 = arith.constant 1.000000e+00 : f32
    %342 = vector.broadcast %cst_104 : f32 to vector<2x32xf32>
    %343 = arith.addf %342, %341 : vector<2x32xf32>
    %344 = arith.divf %342, %343 : vector<2x32xf32>
    %345 = vector.extract_strided_slice %94 {offsets = [14, 0], sizes = [2, 32], strides = [1, 1]} : vector<16x32xf32> to vector<2x32xf32>
    %346 = arith.addf %345, %334 : vector<2x32xf32>
    %347 = arith.negf %346 : vector<2x32xf32>
    %348 = math.exp %347 : vector<2x32xf32>
    %cst_105 = arith.constant 1.000000e+00 : f32
    %349 = vector.broadcast %cst_105 : f32 to vector<2x32xf32>
    %350 = arith.addf %349, %348 : vector<2x32xf32>
    %351 = arith.divf %349, %350 : vector<2x32xf32>
    %352 = vector.extract_strided_slice %95 {offsets = [14, 0], sizes = [2, 32], strides = [1, 1]} : vector<16x32xf32> to vector<2x32xf32>
    %353 = arith.mulf %344, %337 : vector<2x32xf32>
    %354 = arith.addf %352, %353 : vector<2x32xf32>
    %355 = math.tanh %354 : vector<2x32xf32>
    %cst_106 = arith.constant 1.000000e+00 : f32
    %356 = vector.broadcast %cst_106 : f32 to vector<2x32xf32>
    %357 = arith.subf %356, %351 : vector<2x32xf32>
    %358 = arith.mulf %357, %355 : vector<2x32xf32>
    %359 = arith.mulf %351, %328 : vector<2x32xf32>
    %360 = arith.addf %358, %359 : vector<2x32xf32>
    %c0_107 = arith.constant 0 : index
    %c0_108 = arith.constant 0 : index
    %361 = vector.load %arg19[%c0_107, %c0_108] : memref<32x32xf32, #tpu.memory_space<vmem>>, vector<32x32xf32>
    %cst_109 = arith.constant dense<0.000000e+00> : vector<2x32xf32>
    %362 = tpu.matmul %360, %361, %cst_109 {dimension_numbers = #tpu.dot_dimension_numbers<[1], [0], [0], [1], [0, 0, 1, 1], [], []>} : vector<2x32xf32>, vector<32x32xf32>, vector<2x32xf32> -> vector<2x32xf32>
    %c0_110 = arith.constant 0 : index
    %c0_111 = arith.constant 0 : index
    %363 = vector.load %arg20[%c0_110, %c0_111] : memref<1x32xf32, #tpu.memory_space<vmem>>, vector<1x32xf32>
    %364 = vector.broadcast %363 : vector<1x32xf32> to vector<2x32xf32>
    %365 = arith.addf %362, %364 : vector<2x32xf32>
    %c0_112 = arith.constant 0 : index
    %c0_113 = arith.constant 0 : index
    %366 = vector.load %arg21[%c0_112, %c0_113] : memref<1x32xf32, #tpu.memory_space<vmem>>, vector<1x32xf32>
    %c0_114 = arith.constant 0 : index
    %c0_115 = arith.constant 0 : index
    %367 = vector.load %arg22[%c0_114, %c0_115] : memref<1x32xf32, #tpu.memory_space<vmem>>, vector<1x32xf32>
    %cst_116 = arith.constant dense<0.000000e+00> : vector<2xf32>
    %368 = vector.multi_reduction <add>, %365, %cst_116 [1] : vector<2x32xf32> to vector<2xf32>
    %369 = vector.shape_cast %368 : vector<2xf32> to vector<2x1xf32>
    %cst_117 = arith.constant 3.200000e+01 : f32
    %370 = vector.broadcast %cst_117 : f32 to vector<2x1xf32>
    %371 = arith.divf %369, %370 : vector<2x1xf32>
    %372 = vector.broadcast %371 : vector<2x1xf32> to vector<2x32xf32>
    %373 = arith.subf %365, %372 : vector<2x32xf32>
    %374 = arith.mulf %373, %373 : vector<2x32xf32>
    %cst_118 = arith.constant dense<0.000000e+00> : vector<2xf32>
    %375 = vector.multi_reduction <add>, %374, %cst_118 [1] : vector<2x32xf32> to vector<2xf32>
    %376 = vector.shape_cast %375 : vector<2xf32> to vector<2x1xf32>
    %cst_119 = arith.constant 3.200000e+01 : f32
    %377 = vector.broadcast %cst_119 : f32 to vector<2x1xf32>
    %378 = arith.divf %376, %377 : vector<2x1xf32>
    %379 = vector.broadcast %371 : vector<2x1xf32> to vector<2x32xf32>
    %380 = arith.subf %365, %379 : vector<2x32xf32>
    %cst_120 = arith.constant 9.99999974E-6 : f32
    %381 = vector.broadcast %cst_120 : f32 to vector<2x1xf32>
    %382 = arith.addf %378, %381 : vector<2x1xf32>
    %383 = math.rsqrt %382 : vector<2x1xf32>
    %384 = vector.broadcast %383 : vector<2x1xf32> to vector<2x32xf32>
    %385 = arith.mulf %380, %384 : vector<2x32xf32>
    %386 = vector.broadcast %366 : vector<1x32xf32> to vector<2x32xf32>
    %387 = arith.mulf %385, %386 : vector<2x32xf32>
    %388 = vector.broadcast %367 : vector<1x32xf32> to vector<2x32xf32>
    %389 = arith.addf %387, %388 : vector<2x32xf32>
    %cst_121 = arith.constant 0.000000e+00 : f32
    %390 = vector.broadcast %cst_121 : f32 to vector<2x32xf32>
    %391 = arith.cmpf oge, %389, %390 : vector<2x32xf32>
    %cst_122 = arith.constant 0.00999999977 : f32
    %392 = vector.broadcast %cst_122 : f32 to vector<2x32xf32>
    %393 = arith.mulf %392, %389 : vector<2x32xf32>
    %394 = arith.select %391, %389, %393 : vector<2x32xi1>, vector<2x32xf32>
    %c0_123 = arith.constant 0 : index
    %c0_124 = arith.constant 0 : index
    %395 = vector.load %arg23[%c0_123, %c0_124] : memref<32x4xf32, #tpu.memory_space<vmem>>, vector<32x4xf32>
    %cst_125 = arith.constant dense<0.000000e+00> : vector<2x4xf32>
    %396 = tpu.matmul %394, %395, %cst_125 {dimension_numbers = #tpu.dot_dimension_numbers<[1], [0], [0], [1], [0, 0, 1, 1], [], []>} : vector<2x32xf32>, vector<32x4xf32>, vector<2x4xf32> -> vector<2x4xf32>
    %c0_126 = arith.constant 0 : index
    %c0_127 = arith.constant 0 : index
    %397 = vector.load %arg24[%c0_126, %c0_127] : memref<1x4xf32, #tpu.memory_space<vmem>>, vector<1x4xf32>
    %398 = vector.broadcast %397 : vector<1x4xf32> to vector<2x4xf32>
    %399 = arith.addf %396, %398 : vector<2x4xf32>
    %c0_128 = arith.constant 0 : index
    %c0_129 = arith.constant 0 : index
    %400 = vector.load %arg25[%c0_128, %c0_129] : memref<2x4xf32, #tpu.memory_space<vmem>>, vector<2x4xf32>
    tpu.vector_store %arg25[%c0_128, %c0_129], %399 {strides = array<i32>} : memref<2x4xf32, #tpu.memory_space<vmem>>, vector<2x4xf32>,
    return
  }
}

</mosaic_0001>

<llo_original>
// kernel: single_step_flow_rnn_forward.4
$region0: #{single_step_flow_rnn_forward.4}
  #allocation0 [shape = 'u32[]', space=smem, size = 0x4, offset = 0x4, fixed_abs, tag = 'smem constant byte address 0x4 - core index']
  #allocation1 [shape = 'u32[72,128]{1,0:T(1,128)}', space=vmem, size = 0x9000, scoped, tag = 'internal scratch']
  %s0 = inlined_call_operand.vmem [shape: bf16[784,50], index: 0, kind: input, shape index: {}]
  %s1 = inlined_call_operand.vmem [shape: bf16[50,32], index: 1, kind: input, shape index: {}]
  %s2 = inlined_call_operand.vmem [shape: f32[1,32], index: 2, kind: input, shape index: {}]
  %s3 = inlined_call_operand.vmem [shape: bf16[784,32], index: 3, kind: output, shape index: {}]
  %s4 = sld [smem:[#allocation0]]
  $region45: #{single_step_flow_rnn_forward.4} parent=0
    _
  %s6 = ssub.s32 1, %s4
  %s7 = scalar_select 0, %s6, %s4
  loop: start=0, step=1, limit=4
  $region2: #{single_step_flow_rnn_forward.4} parent=0 // loop_pre_header
    _
  $region3: #{single_step_flow_rnn_forward.4} parent=0 // loop_header
    %s9 = sphi 0, %s13
    %p10 = scmp.ge.s32.totalorder %s9, 4
    %s19 = sphi 0, %s21
    %s22 = sphi 0, %s19
    %s23 = sphi 0, %s22
    %s39 = sphi 0, %s23
    %s43 = sphi 0, %s43
    %s45 = sphi 0, %s43
    %s46 = sphi 0, %s45
    %s60 = sphi 0, %s46
    %s64 = sphi 0, %s64
    %s66 = sphi 0, %s64
    %s67 = sphi 0, %s66
    %s81 = sphi 0, %s67
    %s87 = sphi 0, %s89
    %s90 = sphi 0, %s87
    %s91 = sphi 0, %s90
    %s107 = sphi 0, %s91
  $region4: #{single_step_flow_rnn_forward.4} parent=0 // loop_header_branch
    %12 = sbr.rel (%p10) target = $region8
  $region5: #{single_step_flow_rnn_forward.4} parent=0 // loop_body
    %s14 = ssub.s32 %s9, 1
    %s15 = ssub.s32 %s9, 2
    %s16 = sadd.s32 %s9, 1
    %s17 = ssub.s32 %s9, %s16
    %p18 = scmp.eq.s32.totalorder %s17, 0
    %s20 = sadd.s32 %s19, 1
    %s21 = scalar_select %p18, %s19, %s20
    %p24 = pneg %p18
    %p25 = scmp.eq.s32.totalorder %s9, 1
    %p26 = por %p24, %p25
    %p27 = scmp.ne.s32.totalorder %s19, %s22
    %p28 = scmp.eq.s32.totalorder %s9, 0
    %p29 = por %p27, %p28
    %p30 = scmp.ne.s32.totalorder %s19, %s22
    %p31 = scmp.eq.s32.totalorder %s14, 1
    %p32 = por %p30, %p31
    %p33 = scmp.ne.s32.totalorder %s22, %s23
    %p34 = scmp.eq.s32.totalorder %s14, 0
    %p35 = por %p33, %p34
    %p36 = scmp.ne.s32.totalorder %s22, %s23
    %p37 = scmp.eq.s32.totalorder %s15, 1
    %p38 = por %p36, %p37
    %p40 = scmp.ne.s32.totalorder %s23, %s39
    %p41 = scmp.eq.s32.totalorder %s15, 0
    %p42 = por %p40, %p41
    %s44 = sadd.s32 %s43, 1
    %p47 = scmp.eq.s32.totalorder %s9, 1
    %p48 = scmp.ne.s32.totalorder %s43, %s45
    %p49 = scmp.eq.s32.totalorder %s9, 0
    %p50 = por %p48, %p49
    %p51 = scmp.ne.s32.totalorder %s43, %s45
    %p52 = scmp.eq.s32.totalorder %s14, 1
    %p53 = por %p51, %p52
    %p54 = scmp.ne.s32.totalorder %s45, %s46
    %p55 = scmp.eq.s32.totalorder %s14, 0
    %p56 = por %p54, %p55
    %p57 = scmp.ne.s32.totalorder %s45, %s46
    %p58 = scmp.eq.s32.totalorder %s15, 1
    %p59 = por %p57, %p58
    %p61 = scmp.ne.s32.totalorder %s46, %s60
    %p62 = scmp.eq.s32.totalorder %s15, 0
    %p63 = por %p61, %p62
    %s65 = sadd.s32 %s64, 1
    %p68 = scmp.eq.s32.totalorder %s9, 1
    %p69 = scmp.ne.s32.totalorder %s64, %s66
    %p70 = scmp.eq.s32.totalorder %s9, 0
    %p71 = por %p69, %p70
    %p72 = scmp.ne.s32.totalorder %s64, %s66
    %p73 = scmp.eq.s32.totalorder %s14, 1
    %p74 = por %p72, %p73
    %p75 = scmp.ne.s32.totalorder %s66, %s67
    %p76 = scmp.eq.s32.totalorder %s14, 0
    %p77 = por %p75, %p76
    %p78 = scmp.ne.s32.totalorder %s66, %s67
    %p79 = scmp.eq.s32.totalorder %s15, 1
    %p80 = por %p78, %p79
    %p82 = scmp.ne.s32.totalorder %s67, %s81
    %p83 = scmp.eq.s32.totalorder %s15, 0
    %p84 = por %p82, %p83
    %s85 = ssub.s32 %s9, %s16
    %p86 = scmp.eq.s32.totalorder %s85, 0
    %s88 = sadd.s32 %s87, 1
    %s89 = scalar_select %p86, %s87, %s88
    %p92 = pneg %p86
    %p93 = scmp.eq.s32.totalorder %s9, 1
    %p94 = por %p92, %p93
    %p95 = scmp.ne.s32.totalorder %s87, %s90
    %p96 = scmp.eq.s32.totalorder %s9, 0
    %p97 = por %p95, %p96
    %p98 = scmp.ne.s32.totalorder %s87, %s90
    %p99 = scmp.eq.s32.totalorder %s14, 1
    %p100 = por %p98, %p99
    %p101 = scmp.ne.s32.totalorder %s90, %s91
    %p102 = scmp.eq.s32.totalorder %s14, 0
    %p103 = por %p101, %p102
    %p104 = scmp.ne.s32.totalorder %s90, %s91
    %p105 = scmp.eq.s32.totalorder %s15, 1
    %p106 = por %p104, %p105
    %p108 = scmp.ne.s32.totalorder %s91, %s107
    %p109 = scmp.eq.s32.totalorder %s15, 0
    %p110 = por %p108, %p109
    %p111 = scmp.le.s32.totalorder 1, %s9
    %p112 = scmp.lt.s32.totalorder %s9, 3
    %p113 = pnand %p111, %p112
    %p114 = pneg %p113
    // Predicated region
    $region9: #{single_step_flow_rnn_forward.4} parent=5 // pred_check
      _
    $region10: #{single_step_flow_rnn_forward.4} parent=5 // pred_check_branch
      %116 = sbr.rel (%p113) target = $region12
    $region11: #{single_step_flow_rnn_forward.4} parent=5 // pred_region
      %s117 = ssub.s32 %s9, 1
      // Predicated region
      $region13: #{single_step_flow_rnn_forward.4} parent=11 // pred_check
        %p118 = pneg %p56
      $region14: #{single_step_flow_rnn_forward.4} parent=11 // pred_check_branch
        %120 = sbr.rel (%p118) target = $region16
      $region15: #{single_step_flow_rnn_forward.4} parent=11 // pred_region
        _
      $region16: #{single_step_flow_rnn_forward.4} parent=11 // pred_fallthru
        _
      // Predicated region
      $region17: #{single_step_flow_rnn_forward.4} parent=11 // pred_check
        %p121 = pneg %p77
      $region18: #{single_step_flow_rnn_forward.4} parent=11 // pred_check_branch
        %123 = sbr.rel (%p121) target = $region20
      $region19: #{single_step_flow_rnn_forward.4} parent=11 // pred_region
        _
      $region20: #{single_step_flow_rnn_forward.4} parent=11 // pred_fallthru
        _
    $region12: #{single_step_flow_rnn_forward.4} parent=5 // pred_fallthru
      _
    %p124 = scmp.lt.s32.totalorder %s9, 2
    // Predicated region
    $region21: #{single_step_flow_rnn_forward.4} parent=5 // pred_check
      %p125 = pneg %p124
    $region22: #{single_step_flow_rnn_forward.4} parent=5 // pred_check_branch
      %127 = sbr.rel (%p125) target = $region24
    $region23: #{single_step_flow_rnn_forward.4} parent=5 // pred_region
      // Predicated region
      $region25: #{single_step_flow_rnn_forward.4} parent=23 // pred_check
        %p128 = pneg %p29
      $region26: #{single_step_flow_rnn_forward.4} parent=23 // pred_check_branch
        %130 = sbr.rel (%p128) target = $region28
      $region27: #{single_step_flow_rnn_forward.4} parent=23 // pred_region
        %s131 = smul.u32 49, %s9
        %p132 = scmp.lt.s32.totalorder %s131, 97
        %s133 = scalar_select %p132, %s131, 97
        %s134 = smul.addr %s133, 4
        %s135 = scalar_lea.vmem %s0, %s134
        %s136 = smul.u32 49, %s9
      $region28: #{single_step_flow_rnn_forward.4} parent=23 // pred_fallthru
        _
    $region24: #{single_step_flow_rnn_forward.4} parent=5 // pred_fallthru
      _
    %p137 = scmp.le.s32.totalorder 1, %s9
    %p138 = scmp.lt.s32.totalorder %s9, 3
    %p139 = pnand %p137, %p138
    %p140 = pneg %p139
    // Predicated region
    $region29: #{single_step_flow_rnn_forward.4} parent=5 // pred_check
      _
    $region30: #{single_step_flow_rnn_forward.4} parent=5 // pred_check_branch
      %142 = sbr.rel (%p139) target = $region32
    $region31: #{single_step_flow_rnn_forward.4} parent=5 // pred_region
      %s143 = ssub.s32 %s9, 1
      %s144 = smul.u32 49, %s14
      %p145 = scmp.lt.s32.totalorder %s144, 97
      %s146 = scalar_select %p145, %s144, 97
      %s147 = smul.addr %s146, 4
      %s148 = scalar_lea.vmem %s0, %s147
      %p149 = pneg %p35
      %p150 = pneg %p32
      %p151 = pneg %p56
      %p152 = pneg %p53
      %p153 = pneg %p77
      %p154 = pneg %p74
      %p155 = pneg %p103
      %p156 = pneg %p100
      %s157 = smul.u32 49, %s14
      %p158 = scmp.lt.s32.totalorder %s157, 97
      %s159 = scalar_select %p158, %s157, 97
      %s160 = smul.addr %s159, 4
      %s161 = scalar_lea.vmem %s3, %s160
      %s162 = smul.u32 49, %s14
      %p163 = scmp.lt.s32.totalorder %s162, 97
      %s164 = scalar_select %p163, %s162, 97
      %s165 = smul.addr %s164, 4
      %s166 = scalar_lea.vmem %s0, %s165
      %s167 = smul.u32 49, %s14
      %s168 = smul.u32 49, %s14
      %p169 = scmp.lt.s32.totalorder %s168, 97
      %s170 = scalar_select %p169, %s168, 97
      %s171 = smul.addr %s170, 4
      %s172 = scalar_lea.vmem %s3, %s171
      %s173 = smul.u32 49, %s14
      %v175 = vld [vmem:[%s166] sm:$0xf]
      %v176 = vld [vmem:[%s166 + $0x4] sm:$0xf]
      %v177 = vld [vmem:[%s166 + $0x8] sm:$0xf]
      %v178 = vld [vmem:[%s166 + $0xc] sm:$0xf]
      %v179 = vld [vmem:[%s166 + $0x10] sm:$0xf]
      %v180 = vld [vmem:[%s166 + $0x14] sm:$0xf]
      %v181 = vld [vmem:[%s166 + $0x18] sm:$0xf]
      %v182 = vld [vmem:[%s166 + $0x1c] sm:$0xf]
      %v183 = vld [vmem:[%s166 + $0x20] sm:$0xf]
      %v184 = vld [vmem:[%s166 + $0x24] sm:$0xf]
      %v185 = vld [vmem:[%s166 + $0x28] sm:$0xf]
      %v186 = vld [vmem:[%s166 + $0x2c] sm:$0xf]
      %v187 = vld [vmem:[%s166 + $0x30] sm:$0xf]
      %v188 = vld [vmem:[%s166 + $0x34] sm:$0xf]
      %v189 = vld [vmem:[%s166 + $0x38] sm:$0xf]
      %v190 = vld [vmem:[%s166 + $0x3c] sm:$0xf]
      %v191 = vld [vmem:[%s166 + $0x40] sm:$0xf]
      %v192 = vld [vmem:[%s166 + $0x44] sm:$0xf]
      %v193 = vld [vmem:[%s166 + $0x48] sm:$0xf]
      %v194 = vld [vmem:[%s166 + $0x4c] sm:$0xf]
      %v195 = vld [vmem:[%s166 + $0x50] sm:$0xf]
      %v196 = vld [vmem:[%s166 + $0x54] sm:$0xf]
      %v197 = vld [vmem:[%s166 + $0x58] sm:$0xf]
      %v198 = vld [vmem:[%s166 + $0x5c] sm:$0xf]
      %v199 = vld [vmem:[%s166 + $0x60] sm:$0xf]
      %v200 = vld [vmem:[%s166 + $0x64] sm:$0xf]
      %v201 = vld [vmem:[%s166 + $0x68] sm:$0xf]
      %v202 = vld [vmem:[%s166 + $0x6c] sm:$0xf]
      %v203 = vld [vmem:[%s166 + $0x70] sm:$0xf]
      %v204 = vld [vmem:[%s166 + $0x74] sm:$0xf]
      %v205 = vld [vmem:[%s166 + $0x78] sm:$0xf]
      %v206 = vld [vmem:[%s166 + $0x7c] sm:$0xf]
      %v207 = vld [vmem:[%s166 + $0x80] sm:$0xf]
      %v208 = vld [vmem:[%s166 + $0x84] sm:$0xf]
      %v209 = vld [vmem:[%s166 + $0x88] sm:$0xf]
      %v210 = vld [vmem:[%s166 + $0x8c] sm:$0xf]
      %v211 = vld [vmem:[%s166 + $0x90] sm:$0xf]
      %v212 = vld [vmem:[%s166 + $0x94] sm:$0xf]
      %v213 = vld [vmem:[%s166 + $0x98] sm:$0xf]
      %v214 = vld [vmem:[%s166 + $0x9c] sm:$0xf]
      %v215 = vld [vmem:[%s166 + $0xa0] sm:$0xf]
      %v216 = vld [vmem:[%s166 + $0xa4] sm:$0xf]
      %v217 = vld [vmem:[%s166 + $0xa8] sm:$0xf]
      %v218 = vld [vmem:[%s166 + $0xac] sm:$0xf]
      %v219 = vld [vmem:[%s166 + $0xb0] sm:$0xf]
      %v220 = vld [vmem:[%s166 + $0xb4] sm:$0xf]
      %v221 = vld [vmem:[%s166 + $0xb8] sm:$0xf]
      %v222 = vld [vmem:[%s166 + $0xbc] sm:$0xf]
      %v223 = vld [vmem:[%s166 + $0xc0] sm:$0xf]
      %v224 = vld [vmem:[%s1] sm:$0xf]
      %v225 = vld [vmem:[%s1 + $0x4] sm:$0xf]
      %v226 = vld [vmem:[%s1 + $0x8] sm:$0xf]
      %v227 = vld [vmem:[%s1 + $0xc] sm:$0xf]
      %v228 = vld [vmem:[%s1 + $0x10] sm:$0xf]
      %v229 = vld [vmem:[%s1 + $0x14] sm:$0xf]
      %v230 = vld [vmem:[%s1 + $0x18] sm:$0x1]
      %v231 = vld [vmem:[%s2] sm:$0x1]
      %v233 = vperm.slane %v231, 0
      %v284 = vunpack.c.l.b16 %v175
      %v285 = vunpack.c.l.b16 %v176
      %v286 = vunpack.c.l.b16 %v177
      %v287 = vunpack.c.l.b16 %v178
      %v288 = vunpack.c.l.b16 %v179
      %v289 = vunpack.c.l.b16 %v180
      %v290 = vunpack.c.l.b16 %v181
      %v291 = vunpack.c.l.b16 %v182
      %v292 = vunpack.c.l.b16 %v183
      %v293 = vunpack.c.l.b16 %v184
      %v294 = vunpack.c.l.b16 %v185
      %v295 = vunpack.c.l.b16 %v186
      %v296 = vunpack.c.l.b16 %v187
      %v297 = vunpack.c.l.b16 %v188
      %v298 = vunpack.c.l.b16 %v189
      %v299 = vunpack.c.l.b16 %v190
      %v300 = vunpack.c.l.b16 %v191
      %v301 = vunpack.c.l.b16 %v192
      %v302 = vunpack.c.l.b16 %v193
      %v303 = vunpack.c.l.b16 %v194
      %v304 = vunpack.c.l.b16 %v195
      %v305 = vunpack.c.l.b16 %v196
      %v306 = vunpack.c.l.b16 %v197
      %v307 = vunpack.c.l.b16 %v198
      %v308 = vunpack.c.l.b16 %v199
      %v309 = vunpack.c.l.b16 %v200
      %v310 = vunpack.c.l.b16 %v201
      %v311 = vunpack.c.l.b16 %v202
      %v312 = vunpack.c.l.b16 %v203
      %v313 = vunpack.c.l.b16 %v204
      %v314 = vunpack.c.l.b16 %v205
      %v315 = vunpack.c.l.b16 %v206
      %v316 = vunpack.c.l.b16 %v207
      %v317 = vunpack.c.l.b16 %v208
      %v318 = vunpack.c.l.b16 %v209
      %v319 = vunpack.c.l.b16 %v210
      %v320 = vunpack.c.l.b16 %v211
      %v321 = vunpack.c.l.b16 %v212
      %v322 = vunpack.c.l.b16 %v213
      %v323 = vunpack.c.l.b16 %v214
      %v324 = vunpack.c.l.b16 %v215
      %v325 = vunpack.c.l.b16 %v216
      %v326 = vunpack.c.l.b16 %v217
      %v327 = vunpack.c.l.b16 %v218
      %v328 = vunpack.c.l.b16 %v219
      %v329 = vunpack.c.l.b16 %v220
      %v330 = vunpack.c.l.b16 %v221
      %v331 = vunpack.c.l.b16 %v222
      %v332 = vunpack.c.l.b16 %v223
      %v333 = vpack.c.b16 %v285, %v284
      %v334 = vpack.c.b16 %v287, %v286
      %v335 = vpack.c.b16 %v289, %v288
      %v336 = vpack.c.b16 %v291, %v290
      %v337 = vpack.c.b16 %v293, %v292
      %v338 = vpack.c.b16 %v295, %v294
      %v339 = vpack.c.b16 %v297, %v296
      %v340 = vpack.c.b16 %v299, %v298
      %v341 = vpack.c.b16 %v301, %v300
      %v342 = vpack.c.b16 %v303, %v302
      %v343 = vpack.c.b16 %v305, %v304
      %v344 = vpack.c.b16 %v307, %v306
      %v345 = vpack.c.b16 %v309, %v308
      %v346 = vpack.c.b16 %v311, %v310
      %v347 = vpack.c.b16 %v313, %v312
      %v348 = vpack.c.b16 %v315, %v314
      %v349 = vpack.c.b16 %v317, %v316
      %v350 = vpack.c.b16 %v319, %v318
      %v351 = vpack.c.b16 %v321, %v320
      %v352 = vpack.c.b16 %v323, %v322
      %v353 = vpack.c.b16 %v325, %v324
      %v354 = vpack.c.b16 %v327, %v326
      %v355 = vpack.c.b16 %v329, %v328
      %v356 = vpack.c.b16 %v331, %v330
      %v357 = vpack.c.b16 %v332, %v332
      %v365 = vunpack.c.l.b16 %v224
      %v366 = vunpack.c.l.b16 %v225
      %v367 = vunpack.c.l.b16 %v226
      %v368 = vunpack.c.l.b16 %v227
      %v369 = vunpack.c.l.b16 %v228
      %v370 = vunpack.c.l.b16 %v229
      %v371 = vunpack.c.l.b16 %v230
      %v372 = vpack.c.b16 %v366, %v365
      %v373 = vpack.c.b16 %v368, %v367
      %v374 = vpack.c.b16 %v370, %v369
      %v375 = vpack.c.b16 %v371, %v371
      %vm379 = vcmask 408576
      %v381 = vsel %vm379, %v333, 0
      %v384 = vsel %vm379, %v334, 0
      %v387 = vsel %vm379, %v335, 0
      %v390 = vsel %vm379, %v336, 0
      %v393 = vsel %vm379, %v337, 0
      %v396 = vsel %vm379, %v338, 0
      %v399 = vsel %vm379, %v339, 0
      %v402 = vsel %vm379, %v340, 0
      %v405 = vsel %vm379, %v341, 0
      %v408 = vsel %vm379, %v342, 0
      %v411 = vsel %vm379, %v343, 0
      %v414 = vsel %vm379, %v344, 0
      %v417 = vsel %vm379, %v345, 0
      %v420 = vsel %vm379, %v346, 0
      %v423 = vsel %vm379, %v347, 0
      %v426 = vsel %vm379, %v348, 0
      %v429 = vsel %vm379, %v349, 0
      %v432 = vsel %vm379, %v350, 0
      %v435 = vsel %vm379, %v351, 0
      %v438 = vsel %vm379, %v352, 0
      %v441 = vsel %vm379, %v353, 0
      %v444 = vsel %vm379, %v354, 0
      %v447 = vsel %vm379, %v355, 0
      %v450 = vsel %vm379, %v356, 0
      %v453 = vsel %vm379, %v357, 0
      %vm455 = vcmask 1040384
      %v457 = vsel %vm455, %v375, 0
      %459 = vmatpush.bf16.msra.mxu0 0
      %460 = vmatpush.bf16.msra.mxu0 0
      %461 = vmatpush.bf16.msra.mxu0 0
      %462 = vmatpush.bf16.msra.mxu0 0
      %463 = vmatpush.bf16.msra.mxu0 %v457
      %464 = vmatpush.bf16.msra.mxu0 %v374
      %465 = vmatpush.bf16.msra.mxu0 %v373
      %466 = vmatpush.bf16.msra.mxu0 %v372
      %467 = vmatmul.bf16.gmra.mxu0 %v381
      %v468 = vpop.f32.mrf.mxu0
      %v469 = vadd.f32 %v233, %v468
      %v470 = vpop.f32.mrf.mxu0
      %v471 = vadd.f32 %v233, %v470
      %472 = vmatmul.bf16.gmra.mxu0 %v384
      %v473 = vpop.f32.mrf.mxu0
      %v474 = vadd.f32 %v233, %v473
      %v475 = vpop.f32.mrf.mxu0
      %v476 = vadd.f32 %v233, %v475
      %477 = vmatmul.bf16.gmra.mxu0 %v387
      %v478 = vpop.f32.mrf.mxu0
      %v479 = vadd.f32 %v233, %v478
      %v480 = vpop.f32.mrf.mxu0
      %v481 = vadd.f32 %v233, %v480
      %482 = vmatmul.bf16.gmra.mxu0 %v390
      %v483 = vpop.f32.mrf.mxu0
      %v484 = vadd.f32 %v233, %v483
      %v485 = vpop.f32.mrf.mxu0
      %v486 = vadd.f32 %v233, %v485
      %487 = vmatmul.bf16.gmra.mxu0 %v393
      %v488 = vpop.f32.mrf.mxu0
      %v489 = vadd.f32 %v233, %v488
      %v490 = vpop.f32.mrf.mxu0
      %v491 = vadd.f32 %v233, %v490
      %492 = vmatmul.bf16.gmra.mxu0 %v396
      %v493 = vpop.f32.mrf.mxu0
      %v494 = vadd.f32 %v233, %v493
      %v495 = vpop.f32.mrf.mxu0
      %v496 = vadd.f32 %v233, %v495
      %497 = vmatmul.bf16.gmra.mxu0 %v399
      %v498 = vpop.f32.mrf.mxu0
      %v499 = vadd.f32 %v233, %v498
      %v500 = vpop.f32.mrf.mxu0
      %v501 = vadd.f32 %v233, %v500
      %502 = vmatmul.bf16.gmra.mxu0 %v402
      %v503 = vpop.f32.mrf.mxu0
      %v504 = vadd.f32 %v233, %v503
      %v505 = vpop.f32.mrf.mxu0
      %v506 = vadd.f32 %v233, %v505
      %507 = vmatmul.bf16.gmra.mxu0 %v405
      %v508 = vpop.f32.mrf.mxu0
      %v509 = vadd.f32 %v233, %v508
      %v510 = vpop.f32.mrf.mxu0
      %v511 = vadd.f32 %v233, %v510
      %512 = vmatmul.bf16.gmra.mxu0 %v408
      %v513 = vpop.f32.mrf.mxu0
      %v514 = vadd.f32 %v233, %v513
      %v515 = vpop.f32.mrf.mxu0
      %v516 = vadd.f32 %v233, %v515
      %517 = vmatmul.bf16.gmra.mxu0 %v411
      %v518 = vpop.f32.mrf.mxu0
      %v519 = vadd.f32 %v233, %v518
      %v520 = vpop.f32.mrf.mxu0
      %v521 = vadd.f32 %v233, %v520
      %522 = vmatmul.bf16.gmra.mxu0 %v414
      %v523 = vpop.f32.mrf.mxu0
      %v524 = vadd.f32 %v233, %v523
      %v525 = vpop.f32.mrf.mxu0
      %v526 = vadd.f32 %v233, %v525
      %527 = vmatmul.bf16.gmra.mxu0 %v417
      %v528 = vpop.f32.mrf.mxu0
      %v529 = vadd.f32 %v233, %v528
      %v530 = vpop.f32.mrf.mxu0
      %v531 = vadd.f32 %v233, %v530
      %532 = vmatmul.bf16.gmra.mxu0 %v420
      %v533 = vpop.f32.mrf.mxu0
      %v534 = vadd.f32 %v233, %v533
      %v535 = vpop.f32.mrf.mxu0
      %v536 = vadd.f32 %v233, %v535
      %537 = vmatmul.bf16.gmra.mxu0 %v423
      %v538 = vpop.f32.mrf.mxu0
      %v539 = vadd.f32 %v233, %v538
      %v540 = vpop.f32.mrf.mxu0
      %v541 = vadd.f32 %v233, %v540
      %542 = vmatmul.bf16.gmra.mxu0 %v426
      %v543 = vpop.f32.mrf.mxu0
      %v544 = vadd.f32 %v233, %v543
      %v545 = vpop.f32.mrf.mxu0
      %v546 = vadd.f32 %v233, %v545
      %547 = vmatmul.bf16.gmra.mxu0 %v429
      %v548 = vpop.f32.mrf.mxu0
      %v549 = vadd.f32 %v233, %v548
      %v550 = vpop.f32.mrf.mxu0
      %v551 = vadd.f32 %v233, %v550
      %552 = vmatmul.bf16.gmra.mxu0 %v432
      %v553 = vpop.f32.mrf.mxu0
      %v554 = vadd.f32 %v233, %v553
      %v555 = vpop.f32.mrf.mxu0
      %v556 = vadd.f32 %v233, %v555
      %557 = vmatmul.bf16.gmra.mxu0 %v435
      %v558 = vpop.f32.mrf.mxu0
      %v559 = vadd.f32 %v233, %v558
      %v560 = vpop.f32.mrf.mxu0
      %v561 = vadd.f32 %v233, %v560
      %562 = vmatmul.bf16.gmra.mxu0 %v438
      %v563 = vpop.f32.mrf.mxu0
      %v564 = vadd.f32 %v233, %v563
      %v565 = vpop.f32.mrf.mxu0
      %v566 = vadd.f32 %v233, %v565
      %567 = vmatmul.bf16.gmra.mxu0 %v441
      %v568 = vpop.f32.mrf.mxu0
      %v569 = vadd.f32 %v233, %v568
      %v570 = vpop.f32.mrf.mxu0
      %v571 = vadd.f32 %v233, %v570
      %572 = vmatmul.bf16.gmra.mxu0 %v444
      %v573 = vpop.f32.mrf.mxu0
      %v574 = vadd.f32 %v233, %v573
      %v575 = vpop.f32.mrf.mxu0
      %v576 = vadd.f32 %v233, %v575
      %577 = vmatmul.bf16.gmra.mxu0 %v447
      %v578 = vpop.f32.mrf.mxu0
      %v579 = vadd.f32 %v233, %v578
      %v580 = vpop.f32.mrf.mxu0
      %v581 = vadd.f32 %v233, %v580
      %582 = vmatmul.bf16.gmra.mxu0 %v450
      %v583 = vpop.f32.mrf.mxu0
      %v584 = vadd.f32 %v233, %v583
      %v585 = vpop.f32.mrf.mxu0
      %v586 = vadd.f32 %v233, %v585
      %587 = vmatmul.bf16.gmra.mxu0 %v453
      %v588 = vpop.f32.mrf.mxu0
      %v589 = vadd.f32 %v233, %v588
      %v590 = vpop.f32.mrf.mxu0
      %591 = vdwg.mxu0
      %v592 = vmax.f32 %v469, 0.0
      %v593 = vmax.f32 %v471, 0.0
      %v594 = vmax.f32 %v474, 0.0
      %v595 = vmax.f32 %v476, 0.0
      %v596 = vmax.f32 %v479, 0.0
      %v597 = vmax.f32 %v481, 0.0
      %v598 = vmax.f32 %v484, 0.0
      %v599 = vmax.f32 %v486, 0.0
      %v600 = vmax.f32 %v489, 0.0
      %v601 = vmax.f32 %v491, 0.0
      %v602 = vmax.f32 %v494, 0.0
      %v603 = vmax.f32 %v496, 0.0
      %v604 = vmax.f32 %v499, 0.0
      %v605 = vmax.f32 %v501, 0.0
      %v606 = vmax.f32 %v504, 0.0
      %v607 = vmax.f32 %v506, 0.0
      %v608 = vmax.f32 %v509, 0.0
      %v609 = vmax.f32 %v511, 0.0
      %v610 = vmax.f32 %v514, 0.0
      %v611 = vmax.f32 %v516, 0.0
      %v612 = vmax.f32 %v519, 0.0
      %v613 = vmax.f32 %v521, 0.0
      %v614 = vmax.f32 %v524, 0.0
      %v615 = vmax.f32 %v526, 0.0
      %v616 = vmax.f32 %v529, 0.0
      %v617 = vmax.f32 %v531, 0.0
      %v618 = vmax.f32 %v534, 0.0
      %v619 = vmax.f32 %v536, 0.0
      %v620 = vmax.f32 %v539, 0.0
      %v621 = vmax.f32 %v541, 0.0
      %v622 = vmax.f32 %v544, 0.0
      %v623 = vmax.f32 %v546, 0.0
      %v624 = vmax.f32 %v549, 0.0
      %v625 = vmax.f32 %v551, 0.0
      %v626 = vmax.f32 %v554, 0.0
      %v627 = vmax.f32 %v556, 0.0
      %v628 = vmax.f32 %v559, 0.0
      %v629 = vmax.f32 %v561, 0.0
      %v630 = vmax.f32 %v564, 0.0
      %v631 = vmax.f32 %v566, 0.0
      %v632 = vmax.f32 %v569, 0.0
      %v633 = vmax.f32 %v571, 0.0
      %v634 = vmax.f32 %v574, 0.0
      %v635 = vmax.f32 %v576, 0.0
      %v636 = vmax.f32 %v579, 0.0
      %v637 = vmax.f32 %v581, 0.0
      %v638 = vmax.f32 %v584, 0.0
      %v639 = vmax.f32 %v586, 0.0
      %v640 = vmax.f32 %v589, 0.0
      %v641 = vpack.c.bf16 %v592, %v592
      %v642 = vpack.c.bf16 %v593, %v593
      %v643 = vpack.c.bf16 %v594, %v594
      %v644 = vpack.c.bf16 %v595, %v595
      %v645 = vpack.c.bf16 %v596, %v596
      %v646 = vpack.c.bf16 %v597, %v597
      %v647 = vpack.c.bf16 %v598, %v598
      %v648 = vpack.c.bf16 %v599, %v599
      %v649 = vpack.c.bf16 %v600, %v600
      %v650 = vpack.c.bf16 %v601, %v601
      %v651 = vpack.c.bf16 %v602, %v602
      %v652 = vpack.c.bf16 %v603, %v603
      %v653 = vpack.c.bf16 %v604, %v604
      %v654 = vpack.c.bf16 %v605, %v605
      %v655 = vpack.c.bf16 %v606, %v606
      %v656 = vpack.c.bf16 %v607, %v607
      %v657 = vpack.c.bf16 %v608, %v608
      %v658 = vpack.c.bf16 %v609, %v609
      %v659 = vpack.c.bf16 %v610, %v610
      %v660 = vpack.c.bf16 %v611, %v611
      %v661 = vpack.c.bf16 %v612, %v612
      %v662 = vpack.c.bf16 %v613, %v613
      %v663 = vpack.c.bf16 %v614, %v614
      %v664 = vpack.c.bf16 %v615, %v615
      %v665 = vpack.c.bf16 %v616, %v616
      %v666 = vpack.c.bf16 %v617, %v617
      %v667 = vpack.c.bf16 %v618, %v618
      %v668 = vpack.c.bf16 %v619, %v619
      %v669 = vpack.c.bf16 %v620, %v620
      %v670 = vpack.c.bf16 %v621, %v621
      %v671 = vpack.c.bf16 %v622, %v622
      %v672 = vpack.c.bf16 %v623, %v623
      %v673 = vpack.c.bf16 %v624, %v624
      %v674 = vpack.c.bf16 %v625, %v625
      %v675 = vpack.c.bf16 %v626, %v626
      %v676 = vpack.c.bf16 %v627, %v627
      %v677 = vpack.c.bf16 %v628, %v628
      %v678 = vpack.c.bf16 %v629, %v629
      %v679 = vpack.c.bf16 %v630, %v630
      %v680 = vpack.c.bf16 %v631, %v631
      %v681 = vpack.c.bf16 %v632, %v632
      %v682 = vpack.c.bf16 %v633, %v633
      %v683 = vpack.c.bf16 %v634, %v634
      %v684 = vpack.c.bf16 %v635, %v635
      %v685 = vpack.c.bf16 %v636, %v636
      %v686 = vpack.c.bf16 %v637, %v637
      %v687 = vpack.c.bf16 %v638, %v638
      %v688 = vpack.c.bf16 %v639, %v639
      %v689 = vpack.c.bf16 %v640, %v640
      %vm690 = vcmask 257024
      %691 = vst.msk [vmem:[%s172] sm:$0xf] %vm690, %v641
      %692 = vst.msk [vmem:[%s172 + $0x4] sm:$0xf] %vm690, %v642
      %693 = vst.msk [vmem:[%s172 + $0x8] sm:$0xf] %vm690, %v643
      %694 = vst.msk [vmem:[%s172 + $0xc] sm:$0xf] %vm690, %v644
      %695 = vst.msk [vmem:[%s172 + $0x10] sm:$0xf] %vm690, %v645
      %696 = vst.msk [vmem:[%s172 + $0x14] sm:$0xf] %vm690, %v646
      %697 = vst.msk [vmem:[%s172 + $0x18] sm:$0xf] %vm690, %v647
      %698 = vst.msk [vmem:[%s172 + $0x1c] sm:$0xf] %vm690, %v648
      %699 = vst.msk [vmem:[%s172 + $0x20] sm:$0xf] %vm690, %v649
      %700 = vst.msk [vmem:[%s172 + $0x24] sm:$0xf] %vm690, %v650
      %701 = vst.msk [vmem:[%s172 + $0x28] sm:$0xf] %vm690, %v651
      %702 = vst.msk [vmem:[%s172 + $0x2c] sm:$0xf] %vm690, %v652
      %703 = vst.msk [vmem:[%s172 + $0x30] sm:$0xf] %vm690, %v653
      %704 = vst.msk [vmem:[%s172 + $0x34] sm:$0xf] %vm690, %v654
      %705 = vst.msk [vmem:[%s172 + $0x38] sm:$0xf] %vm690, %v655
      %706 = vst.msk [vmem:[%s172 + $0x3c] sm:$0xf] %vm690, %v656
      %707 = vst.msk [vmem:[%s172 + $0x40] sm:$0xf] %vm690, %v657
      %708 = vst.msk [vmem:[%s172 + $0x44] sm:$0xf] %vm690, %v658
      %709 = vst.msk [vmem:[%s172 + $0x48] sm:$0xf] %vm690, %v659
      %710 = vst.msk [vmem:[%s172 + $0x4c] sm:$0xf] %vm690, %v660
      %711 = vst.msk [vmem:[%s172 + $0x50] sm:$0xf] %vm690, %v661
      %712 = vst.msk [vmem:[%s172 + $0x54] sm:$0xf] %vm690, %v662
      %713 = vst.msk [vmem:[%s172 + $0x58] sm:$0xf] %vm690, %v663
      %714 = vst.msk [vmem:[%s172 + $0x5c] sm:$0xf] %vm690, %v664
      %715 = vst.msk [vmem:[%s172 + $0x60] sm:$0xf] %vm690, %v665
      %716 = vst.msk [vmem:[%s172 + $0x64] sm:$0xf] %vm690, %v666
      %717 = vst.msk [vmem:[%s172 + $0x68] sm:$0xf] %vm690, %v667
      %718 = vst.msk [vmem:[%s172 + $0x6c] sm:$0xf] %vm690, %v668
      %719 = vst.msk [vmem:[%s172 + $0x70] sm:$0xf] %vm690, %v669
      %720 = vst.msk [vmem:[%s172 + $0x74] sm:$0xf] %vm690, %v670
      %721 = vst.msk [vmem:[%s172 + $0x78] sm:$0xf] %vm690, %v671
      %722 = vst.msk [vmem:[%s172 + $0x7c] sm:$0xf] %vm690, %v672
      %723 = vst.msk [vmem:[%s172 + $0x80] sm:$0xf] %vm690, %v673
      %724 = vst.msk [vmem:[%s172 + $0x84] sm:$0xf] %vm690, %v674
      %725 = vst.msk [vmem:[%s172 + $0x88] sm:$0xf] %vm690, %v675
      %726 = vst.msk [vmem:[%s172 + $0x8c] sm:$0xf] %vm690, %v676
      %727 = vst.msk [vmem:[%s172 + $0x90] sm:$0xf] %vm690, %v677
      %728 = vst.msk [vmem:[%s172 + $0x94] sm:$0xf] %vm690, %v678
      %729 = vst.msk [vmem:[%s172 + $0x98] sm:$0xf] %vm690, %v679
      %730 = vst.msk [vmem:[%s172 + $0x9c] sm:$0xf] %vm690, %v680
      %731 = vst.msk [vmem:[%s172 + $0xa0] sm:$0xf] %vm690, %v681
      %732 = vst.msk [vmem:[%s172 + $0xa4] sm:$0xf] %vm690, %v682
      %733 = vst.msk [vmem:[%s172 + $0xa8] sm:$0xf] %vm690, %v683
      %734 = vst.msk [vmem:[%s172 + $0xac] sm:$0xf] %vm690, %v684
      %735 = vst.msk [vmem:[%s172 + $0xb0] sm:$0xf] %vm690, %v685
      %736 = vst.msk [vmem:[%s172 + $0xb4] sm:$0xf] %vm690, %v686
      %737 = vst.msk [vmem:[%s172 + $0xb8] sm:$0xf] %vm690, %v687
      %738 = vst.msk [vmem:[%s172 + $0xbc] sm:$0xf] %vm690, %v688
      %739 = vst.msk [vmem:[%s172 + $0xc0] sm:$0xf] %vm690, %v689
      %s740 = smul.u32 49, %s14
      %p741 = scmp.lt.s32.totalorder %s740, 97
      %s742 = scalar_select %p741, %s740, 97
      %s743 = smul.addr %s742, 4
      %s744 = scalar_lea.vmem %s3, %s743
      // Predicated region
      $region33: #{single_step_flow_rnn_forward.4} parent=31 // pred_check
        %p745 = pneg %p100
      $region34: #{single_step_flow_rnn_forward.4} parent=31 // pred_check_branch
        %747 = sbr.rel (%p745) target = $region36
      $region35: #{single_step_flow_rnn_forward.4} parent=31 // pred_region
        %s748 = smul.u32 49, %s14
      $region36: #{single_step_flow_rnn_forward.4} parent=31 // pred_fallthru
        _
    $region32: #{single_step_flow_rnn_forward.4} parent=5 // pred_fallthru
      _
    %p749 = scmp.le.s32.totalorder 2, %s9
    // Predicated region
    $region37: #{single_step_flow_rnn_forward.4} parent=5 // pred_check
      %p750 = pneg %p749
    $region38: #{single_step_flow_rnn_forward.4} parent=5 // pred_check_branch
      %752 = sbr.rel (%p750) target = $region40
    $region39: #{single_step_flow_rnn_forward.4} parent=5 // pred_region
      %s753 = ssub.s32 %s9, 2
      // Predicated region
      $region41: #{single_step_flow_rnn_forward.4} parent=39 // pred_check
        %p754 = pneg %p106
      $region42: #{single_step_flow_rnn_forward.4} parent=39 // pred_check_branch
        %756 = sbr.rel (%p754) target = $region44
      $region43: #{single_step_flow_rnn_forward.4} parent=39 // pred_region
        %s757 = smul.u32 49, %s15
        %p758 = scmp.lt.s32.totalorder %s757, 97
        %s759 = scalar_select %p758, %s757, 97
        %s760 = smul.addr %s759, 4
        %s761 = scalar_lea.vmem %s3, %s760
      $region44: #{single_step_flow_rnn_forward.4} parent=39 // pred_fallthru
        _
    $region40: #{single_step_flow_rnn_forward.4} parent=5 // pred_fallthru
      _
  $region6: #{single_step_flow_rnn_forward.4} parent=0 // loop_footer
    %s13 = sadd.s32 1, %s9
  $region7: #{single_step_flow_rnn_forward.4} parent=0 // loop_footer_branch
    %8 = sbr.rel target = $region3
  $region8: #{single_step_flow_rnn_forward.4} parent=0 // loop_exit
    _

// kernel: single_step_flow_rnn_forward.5
$region0: #{single_step_flow_rnn_forward.5}
  #allocation0 [shape = 'u32[]', space=smem, size = 0x4, offset = 0x4, fixed_abs, tag = 'smem constant byte address 0x4 - core index']
  #allocation1 [shape = 'u32[72,128]{1,0:T(1,128)}', space=vmem, size = 0x9000, scoped, tag = 'internal scratch']
  %s0 = inlined_call_operand.vmem [shape: bf16[256,288], index: 0, kind: input, shape index: {}]
  %s1 = inlined_call_operand.vmem [shape: bf16[288,64], index: 1, kind: input, shape index: {}]
  %s2 = inlined_call_operand.vmem [shape: f32[1,64], index: 2, kind: input, shape index: {}]
  %s3 = inlined_call_operand.vmem [shape: bf16[256,64], index: 3, kind: output, shape index: {}]
  %s4 = sld [smem:[#allocation0]]
  $region45: #{single_step_flow_rnn_forward.5} parent=0
    _
  %s6 = ssub.s32 1, %s4
  %s7 = scalar_select 0, %s6, %s4
  loop: start=0, step=1, limit=4
  $region2: #{single_step_flow_rnn_forward.5} parent=0 // loop_pre_header
    _
  $region3: #{single_step_flow_rnn_forward.5} parent=0 // loop_header
    %s9 = sphi 0, %s13
    %p10 = scmp.ge.s32.totalorder %s9, 4
    %s19 = sphi 0, %s21
    %s22 = sphi 0, %s19
    %s23 = sphi 0, %s22
    %s39 = sphi 0, %s23
    %s43 = sphi 0, %s43
    %s45 = sphi 0, %s43
    %s46 = sphi 0, %s45
    %s60 = sphi 0, %s46
    %s64 = sphi 0, %s64
    %s66 = sphi 0, %s64
    %s67 = sphi 0, %s66
    %s81 = sphi 0, %s67
    %s87 = sphi 0, %s89
    %s90 = sphi 0, %s87
    %s91 = sphi 0, %s90
    %s107 = sphi 0, %s91
  $region4: #{single_step_flow_rnn_forward.5} parent=0 // loop_header_branch
    %12 = sbr.rel (%p10) target = $region8
  $region5: #{single_step_flow_rnn_forward.5} parent=0 // loop_body
    %s14 = ssub.s32 %s9, 1
    %s15 = ssub.s32 %s9, 2
    %s16 = sadd.s32 %s9, 1
    %s17 = ssub.s32 %s9, %s16
    %p18 = scmp.eq.s32.totalorder %s17, 0
    %s20 = sadd.s32 %s19, 1
    %s21 = scalar_select %p18, %s19, %s20
    %p24 = pneg %p18
    %p25 = scmp.eq.s32.totalorder %s9, 1
    %p26 = por %p24, %p25
    %p27 = scmp.ne.s32.totalorder %s19, %s22
    %p28 = scmp.eq.s32.totalorder %s9, 0
    %p29 = por %p27, %p28
    %p30 = scmp.ne.s32.totalorder %s19, %s22
    %p31 = scmp.eq.s32.totalorder %s14, 1
    %p32 = por %p30, %p31
    %p33 = scmp.ne.s32.totalorder %s22, %s23
    %p34 = scmp.eq.s32.totalorder %s14, 0
    %p35 = por %p33, %p34
    %p36 = scmp.ne.s32.totalorder %s22, %s23
    %p37 = scmp.eq.s32.totalorder %s15, 1
    %p38 = por %p36, %p37
    %p40 = scmp.ne.s32.totalorder %s23, %s39
    %p41 = scmp.eq.s32.totalorder %s15, 0
    %p42 = por %p40, %p41
    %s44 = sadd.s32 %s43, 1
    %p47 = scmp.eq.s32.totalorder %s9, 1
    %p48 = scmp.ne.s32.totalorder %s43, %s45
    %p49 = scmp.eq.s32.totalorder %s9, 0
    %p50 = por %p48, %p49
    %p51 = scmp.ne.s32.totalorder %s43, %s45
    %p52 = scmp.eq.s32.totalorder %s14, 1
    %p53 = por %p51, %p52
    %p54 = scmp.ne.s32.totalorder %s45, %s46
    %p55 = scmp.eq.s32.totalorder %s14, 0
    %p56 = por %p54, %p55
    %p57 = scmp.ne.s32.totalorder %s45, %s46
    %p58 = scmp.eq.s32.totalorder %s15, 1
    %p59 = por %p57, %p58
    %p61 = scmp.ne.s32.totalorder %s46, %s60
    %p62 = scmp.eq.s32.totalorder %s15, 0
    %p63 = por %p61, %p62
    %s65 = sadd.s32 %s64, 1
    %p68 = scmp.eq.s32.totalorder %s9, 1
    %p69 = scmp.ne.s32.totalorder %s64, %s66
    %p70 = scmp.eq.s32.totalorder %s9, 0
    %p71 = por %p69, %p70
    %p72 = scmp.ne.s32.totalorder %s64, %s66
    %p73 = scmp.eq.s32.totalorder %s14, 1
    %p74 = por %p72, %p73
    %p75 = scmp.ne.s32.totalorder %s66, %s67
    %p76 = scmp.eq.s32.totalorder %s14, 0
    %p77 = por %p75, %p76
    %p78 = scmp.ne.s32.totalorder %s66, %s67
    %p79 = scmp.eq.s32.totalorder %s15, 1
    %p80 = por %p78, %p79
    %p82 = scmp.ne.s32.totalorder %s67, %s81
    %p83 = scmp.eq.s32.totalorder %s15, 0
    %p84 = por %p82, %p83
    %s85 = ssub.s32 %s9, %s16
    %p86 = scmp.eq.s32.totalorder %s85, 0
    %s88 = sadd.s32 %s87, 1
    %s89 = scalar_select %p86, %s87, %s88
    %p92 = pneg %p86
    %p93 = scmp.eq.s32.totalorder %s9, 1
    %p94 = por %p92, %p93
    %p95 = scmp.ne.s32.totalorder %s87, %s90
    %p96 = scmp.eq.s32.totalorder %s9, 0
    %p97 = por %p95, %p96
    %p98 = scmp.ne.s32.totalorder %s87, %s90
    %p99 = scmp.eq.s32.totalorder %s14, 1
    %p100 = por %p98, %p99
    %p101 = scmp.ne.s32.totalorder %s90, %s91
    %p102 = scmp.eq.s32.totalorder %s14, 0
    %p103 = por %p101, %p102
    %p104 = scmp.ne.s32.totalorder %s90, %s91
    %p105 = scmp.eq.s32.totalorder %s15, 1
    %p106 = por %p104, %p105
    %p108 = scmp.ne.s32.totalorder %s91, %s107
    %p109 = scmp.eq.s32.totalorder %s15, 0
    %p110 = por %p108, %p109
    %p111 = scmp.le.s32.totalorder 1, %s9
    %p112 = scmp.lt.s32.totalorder %s9, 3
    %p113 = pnand %p111, %p112
    %p114 = pneg %p113
    // Predicated region
    $region9: #{single_step_flow_rnn_forward.5} parent=5 // pred_check
      _
    $region10: #{single_step_flow_rnn_forward.5} parent=5 // pred_check_branch
      %116 = sbr.rel (%p113) target = $region12
    $region11: #{single_step_flow_rnn_forward.5} parent=5 // pred_region
      %s117 = ssub.s32 %s9, 1
      // Predicated region
      $region13: #{single_step_flow_rnn_forward.5} parent=11 // pred_check
        %p118 = pneg %p56
      $region14: #{single_step_flow_rnn_forward.5} parent=11 // pred_check_branch
        %120 = sbr.rel (%p118) target = $region16
      $region15: #{single_step_flow_rnn_forward.5} parent=11 // pred_region
        _
      $region16: #{single_step_flow_rnn_forward.5} parent=11 // pred_fallthru
        _
      // Predicated region
      $region17: #{single_step_flow_rnn_forward.5} parent=11 // pred_check
        %p121 = pneg %p77
      $region18: #{single_step_flow_rnn_forward.5} parent=11 // pred_check_branch
        %123 = sbr.rel (%p121) target = $region20
      $region19: #{single_step_flow_rnn_forward.5} parent=11 // pred_region
        _
      $region20: #{single_step_flow_rnn_forward.5} parent=11 // pred_fallthru
        _
    $region12: #{single_step_flow_rnn_forward.5} parent=5 // pred_fallthru
      _
    %p124 = scmp.lt.s32.totalorder %s9, 2
    // Predicated region
    $region21: #{single_step_flow_rnn_forward.5} parent=5 // pred_check
      %p125 = pneg %p124
    $region22: #{single_step_flow_rnn_forward.5} parent=5 // pred_check_branch
      %127 = sbr.rel (%p125) target = $region24
    $region23: #{single_step_flow_rnn_forward.5} parent=5 // pred_region
      // Predicated region
      $region25: #{single_step_flow_rnn_forward.5} parent=23 // pred_check
        %p128 = pneg %p29
      $region26: #{single_step_flow_rnn_forward.5} parent=23 // pred_check_branch
        %130 = sbr.rel (%p128) target = $region28
      $region27: #{single_step_flow_rnn_forward.5} parent=23 // pred_region
        %s131 = smul.u32 16, %s9
        %p132 = scmp.lt.s32.totalorder %s131, 31
        %s133 = scalar_select %p132, %s131, 31
        %s134 = smul.addr %s133, 3
        %s135 = smul.addr %s134, 4
        %s136 = scalar_lea.vmem %s0, %s135
        %s137 = smul.u32 16, %s9
      $region28: #{single_step_flow_rnn_forward.5} parent=23 // pred_fallthru
        _
    $region24: #{single_step_flow_rnn_forward.5} parent=5 // pred_fallthru
      _
    %p138 = scmp.le.s32.totalorder 1, %s9
    %p139 = scmp.lt.s32.totalorder %s9, 3
    %p140 = pnand %p138, %p139
    %p141 = pneg %p140
    // Predicated region
    $region29: #{single_step_flow_rnn_forward.5} parent=5 // pred_check
      _
    $region30: #{single_step_flow_rnn_forward.5} parent=5 // pred_check_branch
      %143 = sbr.rel (%p140) target = $region32
    $region31: #{single_step_flow_rnn_forward.5} parent=5 // pred_region
      %s144 = ssub.s32 %s9, 1
      %s145 = smul.u32 16, %s14
      %p146 = scmp.lt.s32.totalorder %s145, 31
      %s147 = scalar_select %p146, %s145, 31
      %s148 = smul.addr %s147, 3
      %s149 = smul.addr %s148, 4
      %s150 = scalar_lea.vmem %s0, %s149
      %p151 = pneg %p35
      %p152 = pneg %p32
      %p153 = pneg %p56
      %p154 = pneg %p53
      %p155 = pneg %p77
      %p156 = pneg %p74
      %p157 = pneg %p103
      %p158 = pneg %p100
      %s159 = smul.u32 16, %s14
      %p160 = scmp.lt.s32.totalorder %s159, 31
      %s161 = scalar_select %p160, %s159, 31
      %s162 = smul.addr %s161, 4
      %s163 = scalar_lea.vmem %s3, %s162
      %s164 = smul.u32 16, %s14
      %p165 = scmp.lt.s32.totalorder %s164, 31
      %s166 = scalar_select %p165, %s164, 31
      %s167 = smul.addr %s166, 3
      %s168 = smul.addr %s167, 4
      %s169 = scalar_lea.vmem %s0, %s168
      %s170 = smul.u32 16, %s14
      %s171 = smul.u32 16, %s14
      %p172 = scmp.lt.s32.totalorder %s171, 31
      %s173 = scalar_select %p172, %s171, 31
      %s174 = smul.addr %s173, 4
      %s175 = scalar_lea.vmem %s3, %s174
      %s176 = smul.u32 16, %s14
      %v178 = vld [vmem:[%s169] sm:$0xff]
      %v179 = vld [vmem:[%s169 + $0x8] sm:$0xf]
      %v180 = vld [vmem:[%s169 + $0xc] sm:$0xff]
      %v181 = vld [vmem:[%s169 + $0x14] sm:$0xf]
      %v182 = vld [vmem:[%s169 + $0x18] sm:$0xff]
      %v183 = vld [vmem:[%s169 + $0x20] sm:$0xf]
      %v184 = vld [vmem:[%s169 + $0x24] sm:$0xff]
      %v185 = vld [vmem:[%s169 + $0x2c] sm:$0xf]
      %v186 = vld [vmem:[%s169 + $0x30] sm:$0xff]
      %v187 = vld [vmem:[%s169 + $0x38] sm:$0xf]
      %v188 = vld [vmem:[%s169 + $0x3c] sm:$0xff]
      %v189 = vld [vmem:[%s169 + $0x44] sm:$0xf]
      %v190 = vld [vmem:[%s169 + $0x48] sm:$0xff]
      %v191 = vld [vmem:[%s169 + $0x50] sm:$0xf]
      %v192 = vld [vmem:[%s169 + $0x54] sm:$0xff]
      %v193 = vld [vmem:[%s169 + $0x5c] sm:$0xf]
      %v194 = vld [vmem:[%s169 + $0x60] sm:$0xff]
      %v195 = vld [vmem:[%s169 + $0x68] sm:$0xf]
      %v196 = vld [vmem:[%s169 + $0x6c] sm:$0xff]
      %v197 = vld [vmem:[%s169 + $0x74] sm:$0xf]
      %v198 = vld [vmem:[%s169 + $0x78] sm:$0xff]
      %v199 = vld [vmem:[%s169 + $0x80] sm:$0xf]
      %v200 = vld [vmem:[%s169 + $0x84] sm:$0xff]
      %v201 = vld [vmem:[%s169 + $0x8c] sm:$0xf]
      %v202 = vld [vmem:[%s169 + $0x90] sm:$0xff]
      %v203 = vld [vmem:[%s169 + $0x98] sm:$0xf]
      %v204 = vld [vmem:[%s169 + $0x9c] sm:$0xff]
      %v205 = vld [vmem:[%s169 + $0xa4] sm:$0xf]
      %v206 = vld [vmem:[%s169 + $0xa8] sm:$0xff]
      %v207 = vld [vmem:[%s169 + $0xb0] sm:$0xf]
      %v208 = vld [vmem:[%s169 + $0xb4] sm:$0xff]
      %v209 = vld [vmem:[%s169 + $0xbc] sm:$0xf]
      %v210 = vld [vmem:[%s1] sm:$0xf]
      %v211 = vld [vmem:[%s1 + $0x4] sm:$0xf]
      %v212 = vld [vmem:[%s1 + $0x8] sm:$0xf]
      %v213 = vld [vmem:[%s1 + $0xc] sm:$0xf]
      %v214 = vld [vmem:[%s1 + $0x10] sm:$0xf]
      %v215 = vld [vmem:[%s1 + $0x14] sm:$0xf]
      %v216 = vld [vmem:[%s1 + $0x18] sm:$0xf]
      %v217 = vld [vmem:[%s1 + $0x1c] sm:$0xf]
      %v218 = vld [vmem:[%s1 + $0x20] sm:$0xf]
      %v219 = vld [vmem:[%s1 + $0x24] sm:$0xf]
      %v220 = vld [vmem:[%s1 + $0x28] sm:$0xf]
      %v221 = vld [vmem:[%s1 + $0x2c] sm:$0xf]
      %v222 = vld [vmem:[%s1 + $0x30] sm:$0xf]
      %v223 = vld [vmem:[%s1 + $0x34] sm:$0xf]
      %v224 = vld [vmem:[%s1 + $0x38] sm:$0xf]
      %v225 = vld [vmem:[%s1 + $0x3c] sm:$0xf]
      %v226 = vld [vmem:[%s1 + $0x40] sm:$0xf]
      %v227 = vld [vmem:[%s1 + $0x44] sm:$0xf]
      %v228 = vld [vmem:[%s1 + $0x48] sm:$0xf]
      %v229 = vld [vmem:[%s1 + $0x4c] sm:$0xf]
      %v230 = vld [vmem:[%s1 + $0x50] sm:$0xf]
      %v231 = vld [vmem:[%s1 + $0x54] sm:$0xf]
      %v232 = vld [vmem:[%s1 + $0x58] sm:$0xf]
      %v233 = vld [vmem:[%s1 + $0x5c] sm:$0xf]
      %v234 = vld [vmem:[%s1 + $0x60] sm:$0xf]
      %v235 = vld [vmem:[%s1 + $0x64] sm:$0xf]
      %v236 = vld [vmem:[%s1 + $0x68] sm:$0xf]
      %v237 = vld [vmem:[%s1 + $0x6c] sm:$0xf]
      %v238 = vld [vmem:[%s1 + $0x70] sm:$0xf]
      %v239 = vld [vmem:[%s1 + $0x74] sm:$0xf]
      %v240 = vld [vmem:[%s1 + $0x78] sm:$0xf]
      %v241 = vld [vmem:[%s1 + $0x7c] sm:$0xf]
      %v242 = vld [vmem:[%s1 + $0x80] sm:$0xf]
      %v243 = vld [vmem:[%s1 + $0x84] sm:$0xf]
      %v244 = vld [vmem:[%s1 + $0x88] sm:$0xf]
      %v245 = vld [vmem:[%s1 + $0x8c] sm:$0xf]
      %v246 = vld [vmem:[%s2] sm:$0x1]
      %v248 = vperm.slane %v246, 0
      %v282 = vunpack.c.l.b16 %v178
      %v283 = vunpack.c.h.b16 %v178
      %v284 = vunpack.c.l.b16 %v179
      %v285 = vunpack.c.l.b16 %v180
      %v286 = vunpack.c.h.b16 %v180
      %v287 = vunpack.c.l.b16 %v181
      %v288 = vunpack.c.l.b16 %v182
      %v289 = vunpack.c.h.b16 %v182
      %v290 = vunpack.c.l.b16 %v183
      %v291 = vunpack.c.l.b16 %v184
      %v292 = vunpack.c.h.b16 %v184
      %v293 = vunpack.c.l.b16 %v185
      %v294 = vunpack.c.l.b16 %v186
      %v295 = vunpack.c.h.b16 %v186
      %v296 = vunpack.c.l.b16 %v187
      %v297 = vunpack.c.l.b16 %v188
      %v298 = vunpack.c.h.b16 %v188
      %v299 = vunpack.c.l.b16 %v189
      %v300 = vunpack.c.l.b16 %v190
      %v301 = vunpack.c.h.b16 %v190
      %v302 = vunpack.c.l.b16 %v191
      %v303 = vunpack.c.l.b16 %v192
      %v304 = vunpack.c.h.b16 %v192
      %v305 = vunpack.c.l.b16 %v193
      %v306 = vunpack.c.l.b16 %v194
      %v307 = vunpack.c.h.b16 %v194
      %v308 = vunpack.c.l.b16 %v195
      %v309 = vunpack.c.l.b16 %v196
      %v310 = vunpack.c.h.b16 %v196
      %v311 = vunpack.c.l.b16 %v197
      %v312 = vunpack.c.l.b16 %v198
      %v313 = vunpack.c.h.b16 %v198
      %v314 = vunpack.c.l.b16 %v199
      %v315 = vunpack.c.l.b16 %v200
      %v316 = vunpack.c.h.b16 %v200
      %v317 = vunpack.c.l.b16 %v201
      %v318 = vunpack.c.l.b16 %v202
      %v319 = vunpack.c.h.b16 %v202
      %v320 = vunpack.c.l.b16 %v203
      %v321 = vunpack.c.l.b16 %v204
      %v322 = vunpack.c.h.b16 %v204
      %v323 = vunpack.c.l.b16 %v205
      %v324 = vunpack.c.l.b16 %v206
      %v325 = vunpack.c.h.b16 %v206
      %v326 = vunpack.c.l.b16 %v207
      %v327 = vunpack.c.l.b16 %v208
      %v328 = vunpack.c.h.b16 %v208
      %v329 = vunpack.c.l.b16 %v209
      %v330 = vpack.c.b16 %v285, %v282
      %v331 = vpack.c.b16 %v286, %v283
      %v332 = vpack.c.b16 %v287, %v284
      %v333 = vpack.c.b16 %v291, %v288
      %v334 = vpack.c.b16 %v292, %v289
      %v335 = vpack.c.b16 %v293, %v290
      %v336 = vpack.c.b16 %v297, %v294
      %v337 = vpack.c.b16 %v298, %v295
      %v338 = vpack.c.b16 %v299, %v296
      %v339 = vpack.c.b16 %v303, %v300
      %v340 = vpack.c.b16 %v304, %v301
      %v341 = vpack.c.b16 %v305, %v302
      %v342 = vpack.c.b16 %v309, %v306
      %v343 = vpack.c.b16 %v310, %v307
      %v344 = vpack.c.b16 %v311, %v308
      %v345 = vpack.c.b16 %v315, %v312
      %v346 = vpack.c.b16 %v316, %v313
      %v347 = vpack.c.b16 %v317, %v314
      %v348 = vpack.c.b16 %v321, %v318
      %v349 = vpack.c.b16 %v322, %v319
      %v350 = vpack.c.b16 %v323, %v320
      %v351 = vpack.c.b16 %v327, %v324
      %v352 = vpack.c.b16 %v328, %v325
      %v353 = vpack.c.b16 %v329, %v326
      %v406 = vunpack.c.l.b16 %v210
      %v407 = vunpack.c.l.b16 %v211
      %v408 = vunpack.c.l.b16 %v212
      %v409 = vunpack.c.l.b16 %v213
      %v410 = vunpack.c.l.b16 %v214
      %v411 = vunpack.c.l.b16 %v215
      %v412 = vunpack.c.l.b16 %v216
      %v413 = vunpack.c.l.b16 %v217
      %v414 = vunpack.c.l.b16 %v218
      %v415 = vunpack.c.l.b16 %v219
      %v416 = vunpack.c.l.b16 %v220
      %v417 = vunpack.c.l.b16 %v221
      %v418 = vunpack.c.l.b16 %v222
      %v419 = vunpack.c.l.b16 %v223
      %v420 = vunpack.c.l.b16 %v224
      %v421 = vunpack.c.l.b16 %v225
      %v422 = vunpack.c.l.b16 %v226
      %v423 = vunpack.c.l.b16 %v227
      %v424 = vunpack.c.l.b16 %v228
      %v425 = vunpack.c.l.b16 %v229
      %v426 = vunpack.c.l.b16 %v230
      %v427 = vunpack.c.l.b16 %v231
      %v428 = vunpack.c.l.b16 %v232
      %v429 = vunpack.c.l.b16 %v233
      %v430 = vunpack.c.l.b16 %v234
      %v431 = vunpack.c.l.b16 %v235
      %v432 = vunpack.c.l.b16 %v236
      %v433 = vunpack.c.l.b16 %v237
      %v434 = vunpack.c.l.b16 %v238
      %v435 = vunpack.c.l.b16 %v239
      %v436 = vunpack.c.l.b16 %v240
      %v437 = vunpack.c.l.b16 %v241
      %v438 = vunpack.c.l.b16 %v242
      %v439 = vunpack.c.l.b16 %v243
      %v440 = vunpack.c.l.b16 %v244
      %v441 = vunpack.c.l.b16 %v245
      %v442 = vpack.c.b16 %v407, %v406
      %v443 = vpack.c.b16 %v409, %v408
      %v444 = vpack.c.b16 %v411, %v410
      %v445 = vpack.c.b16 %v413, %v412
      %v446 = vpack.c.b16 %v415, %v414
      %v447 = vpack.c.b16 %v417, %v416
      %v448 = vpack.c.b16 %v419, %v418
      %v449 = vpack.c.b16 %v421, %v420
      %v450 = vpack.c.b16 %v423, %v422
      %v451 = vpack.c.b16 %v425, %v424
      %v452 = vpack.c.b16 %v427, %v426
      %v453 = vpack.c.b16 %v429, %v428
      %v454 = vpack.c.b16 %v431, %v430
      %v455 = vpack.c.b16 %v433, %v432
      %v456 = vpack.c.b16 %v435, %v434
      %v457 = vpack.c.b16 %v437, %v436
      %v458 = vpack.c.b16 %v439, %v438
      %v459 = vpack.c.b16 %v441, %v440
      %vm478 = vcmask 261120
      %v480 = vsel %vm478, %v332, 0
      %v483 = vsel %vm478, %v335, 0
      %v486 = vsel %vm478, %v338, 0
      %v489 = vsel %vm478, %v341, 0
      %v492 = vsel %vm478, %v344, 0
      %v495 = vsel %vm478, %v347, 0
      %v498 = vsel %vm478, %v350, 0
      %v501 = vsel %vm478, %v353, 0
      %503 = vmatpush.bf16.msra.mxu0 %v449
      %504 = vmatpush.bf16.msra.mxu0 %v448
      %505 = vmatpush.bf16.msra.mxu0 %v447
      %506 = vmatpush.bf16.msra.mxu0 %v446
      %507 = vmatpush.bf16.msra.mxu0 %v445
      %508 = vmatpush.bf16.msra.mxu0 %v444
      %509 = vmatpush.bf16.msra.mxu0 %v443
      %510 = vmatpush.bf16.msra.mxu0 %v442
      %511 = vmatmul.bf16.gmra.mxu0 %v330
      %v512 = vpop.f32.mrf.mxu0
      %v513 = vadd.f32 %v248, %v512
      %v514 = vpop.f32.mrf.mxu0
      %v515 = vadd.f32 %v248, %v514
      %516 = vmatmul.bf16.gmra.mxu0 %v333
      %v517 = vpop.f32.mrf.mxu0
      %v518 = vadd.f32 %v248, %v517
      %v519 = vpop.f32.mrf.mxu0
      %v520 = vadd.f32 %v248, %v519
      %521 = vmatmul.bf16.gmra.mxu0 %v336
      %v522 = vpop.f32.mrf.mxu0
      %v523 = vadd.f32 %v248, %v522
      %v524 = vpop.f32.mrf.mxu0
      %v525 = vadd.f32 %v248, %v524
      %526 = vmatmul.bf16.gmra.mxu0 %v339
      %v527 = vpop.f32.mrf.mxu0
      %v528 = vadd.f32 %v248, %v527
      %v529 = vpop.f32.mrf.mxu0
      %v530 = vadd.f32 %v248, %v529
      %531 = vmatmul.bf16.gmra.mxu0 %v342
      %v532 = vpop.f32.mrf.mxu0
      %v533 = vadd.f32 %v248, %v532
      %v534 = vpop.f32.mrf.mxu0
      %v535 = vadd.f32 %v248, %v534
      %536 = vmatmul.bf16.gmra.mxu0 %v345
      %v537 = vpop.f32.mrf.mxu0
      %v538 = vadd.f32 %v248, %v537
      %v539 = vpop.f32.mrf.mxu0
      %v540 = vadd.f32 %v248, %v539
      %541 = vmatmul.bf16.gmra.mxu0 %v348
      %v542 = vpop.f32.mrf.mxu0
      %v543 = vadd.f32 %v248, %v542
      %v544 = vpop.f32.mrf.mxu0
      %v545 = vadd.f32 %v248, %v544
      %546 = vmatmul.bf16.gmra.mxu0 %v351
      %v547 = vpop.f32.mrf.mxu0
      %v548 = vadd.f32 %v248, %v547
      %v549 = vpop.f32.mrf.mxu0
      %v550 = vadd.f32 %v248, %v549
      %551 = vdwg.mxu0
      %552 = vmatpush.bf16.msra.mxu0 %v457
      %553 = vmatpush.bf16.msra.mxu0 %v456
      %554 = vmatpush.bf16.msra.mxu0 %v455
      %555 = vmatpush.bf16.msra.mxu0 %v454
      %556 = vmatpush.bf16.msra.mxu0 %v453
      %557 = vmatpush.bf16.msra.mxu0 %v452
      %558 = vmatpush.bf16.msra.mxu0 %v451
      %559 = vmatpush.bf16.msra.mxu0 %v450
      %560 = vmatmul.bf16.gmra.mxu0 %v331
      %v561 = vpop.f32.mrf.mxu0
      %v562 = vadd.f32 %v513, %v561
      %v563 = vpop.f32.mrf.mxu0
      %v564 = vadd.f32 %v515, %v563
      %565 = vmatmul.bf16.gmra.mxu0 %v334
      %v566 = vpop.f32.mrf.mxu0
      %v567 = vadd.f32 %v518, %v566
      %v568 = vpop.f32.mrf.mxu0
      %v569 = vadd.f32 %v520, %v568
      %570 = vmatmul.bf16.gmra.mxu0 %v337
      %v571 = vpop.f32.mrf.mxu0
      %v572 = vadd.f32 %v523, %v571
      %v573 = vpop.f32.mrf.mxu0
      %v574 = vadd.f32 %v525, %v573
      %575 = vmatmul.bf16.gmra.mxu0 %v340
      %v576 = vpop.f32.mrf.mxu0
      %v577 = vadd.f32 %v528, %v576
      %v578 = vpop.f32.mrf.mxu0
      %v579 = vadd.f32 %v530, %v578
      %580 = vmatmul.bf16.gmra.mxu0 %v343
      %v581 = vpop.f32.mrf.mxu0
      %v582 = vadd.f32 %v533, %v581
      %v583 = vpop.f32.mrf.mxu0
      %v584 = vadd.f32 %v535, %v583
      %585 = vmatmul.bf16.gmra.mxu0 %v346
      %v586 = vpop.f32.mrf.mxu0
      %v587 = vadd.f32 %v538, %v586
      %v588 = vpop.f32.mrf.mxu0
      %v589 = vadd.f32 %v540, %v588
      %590 = vmatmul.bf16.gmra.mxu0 %v349
      %v591 = vpop.f32.mrf.mxu0
      %v592 = vadd.f32 %v543, %v591
      %v593 = vpop.f32.mrf.mxu0
      %v594 = vadd.f32 %v545, %v593
      %595 = vmatmul.bf16.gmra.mxu0 %v352
      %v596 = vpop.f32.mrf.mxu0
      %v597 = vadd.f32 %v548, %v596
      %v598 = vpop.f32.mrf.mxu0
      %v599 = vadd.f32 %v550, %v598
      %600 = vdwg.mxu0
      %601 = vmatpush.bf16.msra.mxu0 0
      %602 = vmatpush.bf16.msra.mxu0 0
      %603 = vmatpush.bf16.msra.mxu0 0
      %604 = vmatpush.bf16.msra.mxu0 0
      %605 = vmatpush.bf16.msra.mxu0 0
      %606 = vmatpush.bf16.msra.mxu0 0
      %607 = vmatpush.bf16.msra.mxu0 %v459
      %608 = vmatpush.bf16.msra.mxu0 %v458
      %609 = vmatmul.bf16.gmra.mxu0 %v480
      %v610 = vpop.f32.mrf.mxu0
      %v611 = vadd.f32 %v562, %v610
      %v612 = vpop.f32.mrf.mxu0
      %v613 = vadd.f32 %v564, %v612
      %614 = vmatmul.bf16.gmra.mxu0 %v483
      %v615 = vpop.f32.mrf.mxu0
      %v616 = vadd.f32 %v567, %v615
      %v617 = vpop.f32.mrf.mxu0
      %v618 = vadd.f32 %v569, %v617
      %619 = vmatmul.bf16.gmra.mxu0 %v486
      %v620 = vpop.f32.mrf.mxu0
      %v621 = vadd.f32 %v572, %v620
      %v622 = vpop.f32.mrf.mxu0
      %v623 = vadd.f32 %v574, %v622
      %624 = vmatmul.bf16.gmra.mxu0 %v489
      %v625 = vpop.f32.mrf.mxu0
      %v626 = vadd.f32 %v577, %v625
      %v627 = vpop.f32.mrf.mxu0
      %v628 = vadd.f32 %v579, %v627
      %629 = vmatmul.bf16.gmra.mxu0 %v492
      %v630 = vpop.f32.mrf.mxu0
      %v631 = vadd.f32 %v582, %v630
      %v632 = vpop.f32.mrf.mxu0
      %v633 = vadd.f32 %v584, %v632
      %634 = vmatmul.bf16.gmra.mxu0 %v495
      %v635 = vpop.f32.mrf.mxu0
      %v636 = vadd.f32 %v587, %v635
      %v637 = vpop.f32.mrf.mxu0
      %v638 = vadd.f32 %v589, %v637
      %639 = vmatmul.bf16.gmra.mxu0 %v498
      %v640 = vpop.f32.mrf.mxu0
      %v641 = vadd.f32 %v592, %v640
      %v642 = vpop.f32.mrf.mxu0
      %v643 = vadd.f32 %v594, %v642
      %644 = vmatmul.bf16.gmra.mxu0 %v501
      %v645 = vpop.f32.mrf.mxu0
      %v646 = vadd.f32 %v597, %v645
      %v647 = vpop.f32.mrf.mxu0
      %v648 = vadd.f32 %v599, %v647
      %649 = vdwg.mxu0
      %v650 = vmax.f32 %v611, 0.0
      %v651 = vmax.f32 %v613, 0.0
      %v652 = vmax.f32 %v616, 0.0
      %v653 = vmax.f32 %v618, 0.0
      %v654 = vmax.f32 %v621, 0.0
      %v655 = vmax.f32 %v623, 0.0
      %v656 = vmax.f32 %v626, 0.0
      %v657 = vmax.f32 %v628, 0.0
      %v658 = vmax.f32 %v631, 0.0
      %v659 = vmax.f32 %v633, 0.0
      %v660 = vmax.f32 %v636, 0.0
      %v661 = vmax.f32 %v638, 0.0
      %v662 = vmax.f32 %v641, 0.0
      %v663 = vmax.f32 %v643, 0.0
      %v664 = vmax.f32 %v646, 0.0
      %v665 = vmax.f32 %v648, 0.0
      %v666 = vpack.c.bf16 %v650, %v650
      %v667 = vpack.c.bf16 %v651, %v651
      %v668 = vpack.c.bf16 %v652, %v652
      %v669 = vpack.c.bf16 %v653, %v653
      %v670 = vpack.c.bf16 %v654, %v654
      %v671 = vpack.c.bf16 %v655, %v655
      %v672 = vpack.c.bf16 %v656, %v656
      %v673 = vpack.c.bf16 %v657, %v657
      %v674 = vpack.c.bf16 %v658, %v658
      %v675 = vpack.c.bf16 %v659, %v659
      %v676 = vpack.c.bf16 %v660, %v660
      %v677 = vpack.c.bf16 %v661, %v661
      %v678 = vpack.c.bf16 %v662, %v662
      %v679 = vpack.c.bf16 %v663, %v663
      %v680 = vpack.c.bf16 %v664, %v664
      %v681 = vpack.c.bf16 %v665, %v665
      %vm682 = vcmask 519168
      %683 = vst.msk [vmem:[%s175] sm:$0xf] %vm682, %v666
      %684 = vst.msk [vmem:[%s175 + $0x4] sm:$0xf] %vm682, %v667
      %685 = vst.msk [vmem:[%s175 + $0x8] sm:$0xf] %vm682, %v668
      %686 = vst.msk [vmem:[%s175 + $0xc] sm:$0xf] %vm682, %v669
      %687 = vst.msk [vmem:[%s175 + $0x10] sm:$0xf] %vm682, %v670
      %688 = vst.msk [vmem:[%s175 + $0x14] sm:$0xf] %vm682, %v671
      %689 = vst.msk [vmem:[%s175 + $0x18] sm:$0xf] %vm682, %v672
      %690 = vst.msk [vmem:[%s175 + $0x1c] sm:$0xf] %vm682, %v673
      %691 = vst.msk [vmem:[%s175 + $0x20] sm:$0xf] %vm682, %v674
      %692 = vst.msk [vmem:[%s175 + $0x24] sm:$0xf] %vm682, %v675
      %693 = vst.msk [vmem:[%s175 + $0x28] sm:$0xf] %vm682, %v676
      %694 = vst.msk [vmem:[%s175 + $0x2c] sm:$0xf] %vm682, %v677
      %695 = vst.msk [vmem:[%s175 + $0x30] sm:$0xf] %vm682, %v678
      %696 = vst.msk [vmem:[%s175 + $0x34] sm:$0xf] %vm682, %v679
      %697 = vst.msk [vmem:[%s175 + $0x38] sm:$0xf] %vm682, %v680
      %698 = vst.msk [vmem:[%s175 + $0x3c] sm:$0xf] %vm682, %v681
      %s699 = smul.u32 16, %s14
      %p700 = scmp.lt.s32.totalorder %s699, 31
      %s701 = scalar_select %p700, %s699, 31
      %s702 = smul.addr %s701, 4
      %s703 = scalar_lea.vmem %s3, %s702
      // Predicated region
      $region33: #{single_step_flow_rnn_forward.5} parent=31 // pred_check
        %p704 = pneg %p100
      $region34: #{single_step_flow_rnn_forward.5} parent=31 // pred_check_branch
        %706 = sbr.rel (%p704) target = $region36
      $region35: #{single_step_flow_rnn_forward.5} parent=31 // pred_region
        %s707 = smul.u32 16, %s14
      $region36: #{single_step_flow_rnn_forward.5} parent=31 // pred_fallthru
        _
    $region32: #{single_step_flow_rnn_forward.5} parent=5 // pred_fallthru
      _
    %p708 = scmp.le.s32.totalorder 2, %s9
    // Predicated region
    $region37: #{single_step_flow_rnn_forward.5} parent=5 // pred_check
      %p709 = pneg %p708
    $region38: #{single_step_flow_rnn_forward.5} parent=5 // pred_check_branch
      %711 = sbr.rel (%p709) target = $region40
    $region39: #{single_step_flow_rnn_forward.5} parent=5 // pred_region
      %s712 = ssub.s32 %s9, 2
      // Predicated region
      $region41: #{single_step_flow_rnn_forward.5} parent=39 // pred_check
        %p713 = pneg %p106
      $region42: #{single_step_flow_rnn_forward.5} parent=39 // pred_check_branch
        %715 = sbr.rel (%p713) target = $region44
      $region43: #{single_step_flow_rnn_forward.5} parent=39 // pred_region
        %s716 = smul.u32 16, %s15
        %p717 = scmp.lt.s32.totalorder %s716, 31
        %s718 = scalar_select %p717, %s716, 31
        %s719 = smul.addr %s718, 4
        %s720 = scalar_lea.vmem %s3, %s719
      $region44: #{single_step_flow_rnn_forward.5} parent=39 // pred_fallthru
        _
    $region40: #{single_step_flow_rnn_forward.5} parent=5 // pred_fallthru
      _
  $region6: #{single_step_flow_rnn_forward.5} parent=0 // loop_footer
    %s13 = sadd.s32 1, %s9
  $region7: #{single_step_flow_rnn_forward.5} parent=0 // loop_footer_branch
    %8 = sbr.rel target = $region3
  $region8: #{single_step_flow_rnn_forward.5} parent=0 // loop_exit
    _

// kernel: single_step_flow_rnn_forward.6
$region0: #{single_step_flow_rnn_forward.6}
  #allocation0 [shape = 'u32[]', space=smem, size = 0x4, offset = 0x4, fixed_abs, tag = 'smem constant byte address 0x4 - core index']
  #allocation1 [shape = 'u32[72,128]{1,0:T(1,128)}', space=vmem, size = 0x9000, scoped, tag = 'internal scratch']
  %s0 = inlined_call_operand.vmem [shape: bf16[64,576], index: 0, kind: input, shape index: {}]
  %s1 = inlined_call_operand.vmem [shape: bf16[576,32], index: 1, kind: input, shape index: {}]
  %s2 = inlined_call_operand.vmem [shape: f32[1,32], index: 2, kind: input, shape index: {}]
  %s3 = inlined_call_operand.vmem [shape: bf16[64,32], index: 3, kind: output, shape index: {}]
  %s4 = sld [smem:[#allocation0]]
  $region45: #{single_step_flow_rnn_forward.6} parent=0
    _
  %s6 = ssub.s32 1, %s4
  %s7 = scalar_select 0, %s6, %s4
  loop: start=0, step=1, limit=4
  $region2: #{single_step_flow_rnn_forward.6} parent=0 // loop_pre_header
    _
  $region3: #{single_step_flow_rnn_forward.6} parent=0 // loop_header
    %s9 = sphi 0, %s13
    %p10 = scmp.ge.s32.totalorder %s9, 4
    %s19 = sphi 0, %s21
    %s22 = sphi 0, %s19
    %s23 = sphi 0, %s22
    %s39 = sphi 0, %s23
    %s43 = sphi 0, %s43
    %s45 = sphi 0, %s43
    %s46 = sphi 0, %s45
    %s60 = sphi 0, %s46
    %s64 = sphi 0, %s64
    %s66 = sphi 0, %s64
    %s67 = sphi 0, %s66
    %s81 = sphi 0, %s67
    %s87 = sphi 0, %s89
    %s90 = sphi 0, %s87
    %s91 = sphi 0, %s90
    %s107 = sphi 0, %s91
  $region4: #{single_step_flow_rnn_forward.6} parent=0 // loop_header_branch
    %12 = sbr.rel (%p10) target = $region8
  $region5: #{single_step_flow_rnn_forward.6} parent=0 // loop_body
    %s14 = ssub.s32 %s9, 1
    %s15 = ssub.s32 %s9, 2
    %s16 = sadd.s32 %s9, 1
    %s17 = ssub.s32 %s9, %s16
    %p18 = scmp.eq.s32.totalorder %s17, 0
    %s20 = sadd.s32 %s19, 1
    %s21 = scalar_select %p18, %s19, %s20
    %p24 = pneg %p18
    %p25 = scmp.eq.s32.totalorder %s9, 1
    %p26 = por %p24, %p25
    %p27 = scmp.ne.s32.totalorder %s19, %s22
    %p28 = scmp.eq.s32.totalorder %s9, 0
    %p29 = por %p27, %p28
    %p30 = scmp.ne.s32.totalorder %s19, %s22
    %p31 = scmp.eq.s32.totalorder %s14, 1
    %p32 = por %p30, %p31
    %p33 = scmp.ne.s32.totalorder %s22, %s23
    %p34 = scmp.eq.s32.totalorder %s14, 0
    %p35 = por %p33, %p34
    %p36 = scmp.ne.s32.totalorder %s22, %s23
    %p37 = scmp.eq.s32.totalorder %s15, 1
    %p38 = por %p36, %p37
    %p40 = scmp.ne.s32.totalorder %s23, %s39
    %p41 = scmp.eq.s32.totalorder %s15, 0
    %p42 = por %p40, %p41
    %s44 = sadd.s32 %s43, 1
    %p47 = scmp.eq.s32.totalorder %s9, 1
    %p48 = scmp.ne.s32.totalorder %s43, %s45
    %p49 = scmp.eq.s32.totalorder %s9, 0
    %p50 = por %p48, %p49
    %p51 = scmp.ne.s32.totalorder %s43, %s45
    %p52 = scmp.eq.s32.totalorder %s14, 1
    %p53 = por %p51, %p52
    %p54 = scmp.ne.s32.totalorder %s45, %s46
    %p55 = scmp.eq.s32.totalorder %s14, 0
    %p56 = por %p54, %p55
    %p57 = scmp.ne.s32.totalorder %s45, %s46
    %p58 = scmp.eq.s32.totalorder %s15, 1
    %p59 = por %p57, %p58
    %p61 = scmp.ne.s32.totalorder %s46, %s60
    %p62 = scmp.eq.s32.totalorder %s15, 0
    %p63 = por %p61, %p62
    %s65 = sadd.s32 %s64, 1
    %p68 = scmp.eq.s32.totalorder %s9, 1
    %p69 = scmp.ne.s32.totalorder %s64, %s66
    %p70 = scmp.eq.s32.totalorder %s9, 0
    %p71 = por %p69, %p70
    %p72 = scmp.ne.s32.totalorder %s64, %s66
    %p73 = scmp.eq.s32.totalorder %s14, 1
    %p74 = por %p72, %p73
    %p75 = scmp.ne.s32.totalorder %s66, %s67
    %p76 = scmp.eq.s32.totalorder %s14, 0
    %p77 = por %p75, %p76
    %p78 = scmp.ne.s32.totalorder %s66, %s67
    %p79 = scmp.eq.s32.totalorder %s15, 1
    %p80 = por %p78, %p79
    %p82 = scmp.ne.s32.totalorder %s67, %s81
    %p83 = scmp.eq.s32.totalorder %s15, 0
    %p84 = por %p82, %p83
    %s85 = ssub.s32 %s9, %s16
    %p86 = scmp.eq.s32.totalorder %s85, 0
    %s88 = sadd.s32 %s87, 1
    %s89 = scalar_select %p86, %s87, %s88
    %p92 = pneg %p86
    %p93 = scmp.eq.s32.totalorder %s9, 1
    %p94 = por %p92, %p93
    %p95 = scmp.ne.s32.totalorder %s87, %s90
    %p96 = scmp.eq.s32.totalorder %s9, 0
    %p97 = por %p95, %p96
    %p98 = scmp.ne.s32.totalorder %s87, %s90
    %p99 = scmp.eq.s32.totalorder %s14, 1
    %p100 = por %p98, %p99
    %p101 = scmp.ne.s32.totalorder %s90, %s91
    %p102 = scmp.eq.s32.totalorder %s14, 0
    %p103 = por %p101, %p102
    %p104 = scmp.ne.s32.totalorder %s90, %s91
    %p105 = scmp.eq.s32.totalorder %s15, 1
    %p106 = por %p104, %p105
    %p108 = scmp.ne.s32.totalorder %s91, %s107
    %p109 = scmp.eq.s32.totalorder %s15, 0
    %p110 = por %p108, %p109
    %p111 = scmp.le.s32.totalorder 1, %s9
    %p112 = scmp.lt.s32.totalorder %s9, 3
    %p113 = pnand %p111, %p112
    %p114 = pneg %p113
    // Predicated region
    $region9: #{single_step_flow_rnn_forward.6} parent=5 // pred_check
      _
    $region10: #{single_step_flow_rnn_forward.6} parent=5 // pred_check_branch
      %116 = sbr.rel (%p113) target = $region12
    $region11: #{single_step_flow_rnn_forward.6} parent=5 // pred_region
      %s117 = ssub.s32 %s9, 1
      // Predicated region
      $region13: #{single_step_flow_rnn_forward.6} parent=11 // pred_check
        %p118 = pneg %p56
      $region14: #{single_step_flow_rnn_forward.6} parent=11 // pred_check_branch
        %120 = sbr.rel (%p118) target = $region16
      $region15: #{single_step_flow_rnn_forward.6} parent=11 // pred_region
        _
      $region16: #{single_step_flow_rnn_forward.6} parent=11 // pred_fallthru
        _
      // Predicated region
      $region17: #{single_step_flow_rnn_forward.6} parent=11 // pred_check
        %p121 = pneg %p77
      $region18: #{single_step_flow_rnn_forward.6} parent=11 // pred_check_branch
        %123 = sbr.rel (%p121) target = $region20
      $region19: #{single_step_flow_rnn_forward.6} parent=11 // pred_region
        _
      $region20: #{single_step_flow_rnn_forward.6} parent=11 // pred_fallthru
        _
    $region12: #{single_step_flow_rnn_forward.6} parent=5 // pred_fallthru
      _
    %p124 = scmp.lt.s32.totalorder %s9, 2
    // Predicated region
    $region21: #{single_step_flow_rnn_forward.6} parent=5 // pred_check
      %p125 = pneg %p124
    $region22: #{single_step_flow_rnn_forward.6} parent=5 // pred_check_branch
      %127 = sbr.rel (%p125) target = $region24
    $region23: #{single_step_flow_rnn_forward.6} parent=5 // pred_region
      // Predicated region
      $region25: #{single_step_flow_rnn_forward.6} parent=23 // pred_check
        %p128 = pneg %p29
      $region26: #{single_step_flow_rnn_forward.6} parent=23 // pred_check_branch
        %130 = sbr.rel (%p128) target = $region28
      $region27: #{single_step_flow_rnn_forward.6} parent=23 // pred_region
        %s131 = smul.u32 4, %s9
        %p132 = scmp.lt.s32.totalorder %s131, 7
        %s133 = scalar_select %p132, %s131, 7
        %s134 = smul.addr %s133, 5
        %s135 = smul.addr %s134, 4
        %s136 = scalar_lea.vmem %s0, %s135
        %s137 = smul.u32 4, %s9
      $region28: #{single_step_flow_rnn_forward.6} parent=23 // pred_fallthru
        _
    $region24: #{single_step_flow_rnn_forward.6} parent=5 // pred_fallthru
      _
    %p138 = scmp.le.s32.totalorder 1, %s9
    %p139 = scmp.lt.s32.totalorder %s9, 3
    %p140 = pnand %p138, %p139
    %p141 = pneg %p140
    // Predicated region
    $region29: #{single_step_flow_rnn_forward.6} parent=5 // pred_check
      _
    $region30: #{single_step_flow_rnn_forward.6} parent=5 // pred_check_branch
      %143 = sbr.rel (%p140) target = $region32
    $region31: #{single_step_flow_rnn_forward.6} parent=5 // pred_region
      %s144 = ssub.s32 %s9, 1
      %s145 = smul.u32 4, %s14
      %p146 = scmp.lt.s32.totalorder %s145, 7
      %s147 = scalar_select %p146, %s145, 7
      %s148 = smul.addr %s147, 5
      %s149 = smul.addr %s148, 4
      %s150 = scalar_lea.vmem %s0, %s149
      %p151 = pneg %p35
      %p152 = pneg %p32
      %p153 = pneg %p56
      %p154 = pneg %p53
      %p155 = pneg %p77
      %p156 = pneg %p74
      %p157 = pneg %p103
      %p158 = pneg %p100
      %s159 = smul.u32 4, %s14
      %p160 = scmp.lt.s32.totalorder %s159, 7
      %s161 = scalar_select %p160, %s159, 7
      %s162 = smul.addr %s161, 4
      %s163 = scalar_lea.vmem %s3, %s162
      %s164 = smul.u32 4, %s14
      %p165 = scmp.lt.s32.totalorder %s164, 7
      %s166 = scalar_select %p165, %s164, 7
      %s167 = smul.addr %s166, 5
      %s168 = smul.addr %s167, 4
      %s169 = scalar_lea.vmem %s0, %s168
      %s170 = smul.u32 4, %s14
      %s171 = smul.u32 4, %s14
      %p172 = scmp.lt.s32.totalorder %s171, 7
      %s173 = scalar_select %p172, %s171, 7
      %s174 = smul.addr %s173, 4
      %s175 = scalar_lea.vmem %s3, %s174
      %s176 = smul.u32 4, %s14
      %v178 = vld [vmem:[%s169] sm:$0xff]
      %v179 = vld [vmem:[%s169 + $0x8] sm:$0xff]
      %v180 = vld [vmem:[%s169 + $0x10] sm:$0xf]
      %v181 = vld [vmem:[%s169 + $0x14] sm:$0xff]
      %v182 = vld [vmem:[%s169 + $0x1c] sm:$0xff]
      %v183 = vld [vmem:[%s169 + $0x24] sm:$0xf]
      %v184 = vld [vmem:[%s169 + $0x28] sm:$0xff]
      %v185 = vld [vmem:[%s169 + $0x30] sm:$0xff]
      %v186 = vld [vmem:[%s169 + $0x38] sm:$0xf]
      %v187 = vld [vmem:[%s169 + $0x3c] sm:$0xff]
      %v188 = vld [vmem:[%s169 + $0x44] sm:$0xff]
      %v189 = vld [vmem:[%s169 + $0x4c] sm:$0xf]
      %v190 = vld [vmem:[%s1] sm:$0xf]
      %v191 = vld [vmem:[%s1 + $0x4] sm:$0xf]
      %v192 = vld [vmem:[%s1 + $0x8] sm:$0xf]
      %v193 = vld [vmem:[%s1 + $0xc] sm:$0xf]
      %v194 = vld [vmem:[%s1 + $0x10] sm:$0xf]
      %v195 = vld [vmem:[%s1 + $0x14] sm:$0xf]
      %v196 = vld [vmem:[%s1 + $0x18] sm:$0xf]
      %v197 = vld [vmem:[%s1 + $0x1c] sm:$0xf]
      %v198 = vld [vmem:[%s1 + $0x20] sm:$0xf]
      %v199 = vld [vmem:[%s1 + $0x24] sm:$0xf]
      %v200 = vld [vmem:[%s1 + $0x28] sm:$0xf]
      %v201 = vld [vmem:[%s1 + $0x2c] sm:$0xf]
      %v202 = vld [vmem:[%s1 + $0x30] sm:$0xf]
      %v203 = vld [vmem:[%s1 + $0x34] sm:$0xf]
      %v204 = vld [vmem:[%s1 + $0x38] sm:$0xf]
      %v205 = vld [vmem:[%s1 + $0x3c] sm:$0xf]
      %v206 = vld [vmem:[%s1 + $0x40] sm:$0xf]
      %v207 = vld [vmem:[%s1 + $0x44] sm:$0xf]
      %v208 = vld [vmem:[%s1 + $0x48] sm:$0xf]
      %v209 = vld [vmem:[%s1 + $0x4c] sm:$0xf]
      %v210 = vld [vmem:[%s1 + $0x50] sm:$0xf]
      %v211 = vld [vmem:[%s1 + $0x54] sm:$0xf]
      %v212 = vld [vmem:[%s1 + $0x58] sm:$0xf]
      %v213 = vld [vmem:[%s1 + $0x5c] sm:$0xf]
      %v214 = vld [vmem:[%s1 + $0x60] sm:$0xf]
      %v215 = vld [vmem:[%s1 + $0x64] sm:$0xf]
      %v216 = vld [vmem:[%s1 + $0x68] sm:$0xf]
      %v217 = vld [vmem:[%s1 + $0x6c] sm:$0xf]
      %v218 = vld [vmem:[%s1 + $0x70] sm:$0xf]
      %v219 = vld [vmem:[%s1 + $0x74] sm:$0xf]
      %v220 = vld [vmem:[%s1 + $0x78] sm:$0xf]
      %v221 = vld [vmem:[%s1 + $0x7c] sm:$0xf]
      %v222 = vld [vmem:[%s1 + $0x80] sm:$0xf]
      %v223 = vld [vmem:[%s1 + $0x84] sm:$0xf]
      %v224 = vld [vmem:[%s1 + $0x88] sm:$0xf]
      %v225 = vld [vmem:[%s1 + $0x8c] sm:$0xf]
      %v226 = vld [vmem:[%s1 + $0x90] sm:$0xf]
      %v227 = vld [vmem:[%s1 + $0x94] sm:$0xf]
      %v228 = vld [vmem:[%s1 + $0x98] sm:$0xf]
      %v229 = vld [vmem:[%s1 + $0x9c] sm:$0xf]
      %v230 = vld [vmem:[%s1 + $0xa0] sm:$0xf]
      %v231 = vld [vmem:[%s1 + $0xa4] sm:$0xf]
      %v232 = vld [vmem:[%s1 + $0xa8] sm:$0xf]
      %v233 = vld [vmem:[%s1 + $0xac] sm:$0xf]
      %v234 = vld [vmem:[%s1 + $0xb0] sm:$0xf]
      %v235 = vld [vmem:[%s1 + $0xb4] sm:$0xf]
      %v236 = vld [vmem:[%s1 + $0xb8] sm:$0xf]
      %v237 = vld [vmem:[%s1 + $0xbc] sm:$0xf]
      %v238 = vld [vmem:[%s1 + $0xc0] sm:$0xf]
      %v239 = vld [vmem:[%s1 + $0xc4] sm:$0xf]
      %v240 = vld [vmem:[%s1 + $0xc8] sm:$0xf]
      %v241 = vld [vmem:[%s1 + $0xcc] sm:$0xf]
      %v242 = vld [vmem:[%s1 + $0xd0] sm:$0xf]
      %v243 = vld [vmem:[%s1 + $0xd4] sm:$0xf]
      %v244 = vld [vmem:[%s1 + $0xd8] sm:$0xf]
      %v245 = vld [vmem:[%s1 + $0xdc] sm:$0xf]
      %v246 = vld [vmem:[%s1 + $0xe0] sm:$0xf]
      %v247 = vld [vmem:[%s1 + $0xe4] sm:$0xf]
      %v248 = vld [vmem:[%s1 + $0xe8] sm:$0xf]
      %v249 = vld [vmem:[%s1 + $0xec] sm:$0xf]
      %v250 = vld [vmem:[%s1 + $0xf0] sm:$0xf]
      %v251 = vld [vmem:[%s1 + $0xf4] sm:$0xf]
      %v252 = vld [vmem:[%s1 + $0xf8] sm:$0xf]
      %v253 = vld [vmem:[%s1 + $0xfc] sm:$0xf]
      %v254 = vld [vmem:[%s1 + $0x100] sm:$0xf]
      %v255 = vld [vmem:[%s1 + $0x104] sm:$0xf]
      %v256 = vld [vmem:[%s1 + $0x108] sm:$0xf]
      %v257 = vld [vmem:[%s1 + $0x10c] sm:$0xf]
      %v258 = vld [vmem:[%s1 + $0x110] sm:$0xf]
      %v259 = vld [vmem:[%s1 + $0x114] sm:$0xf]
      %v260 = vld [vmem:[%s1 + $0x118] sm:$0xf]
      %v261 = vld [vmem:[%s1 + $0x11c] sm:$0xf]
      %v262 = vld [vmem:[%s2] sm:$0x1]
      %v264 = vperm.slane %v262, 0
      %v278 = vunpack.c.l.b16 %v178
      %v279 = vunpack.c.h.b16 %v178
      %v280 = vunpack.c.l.b16 %v179
      %v281 = vunpack.c.h.b16 %v179
      %v282 = vunpack.c.l.b16 %v180
      %v283 = vunpack.c.l.b16 %v181
      %v284 = vunpack.c.h.b16 %v181
      %v285 = vunpack.c.l.b16 %v182
      %v286 = vunpack.c.h.b16 %v182
      %v287 = vunpack.c.l.b16 %v183
      %v288 = vunpack.c.l.b16 %v184
      %v289 = vunpack.c.h.b16 %v184
      %v290 = vunpack.c.l.b16 %v185
      %v291 = vunpack.c.h.b16 %v185
      %v292 = vunpack.c.l.b16 %v186
      %v293 = vunpack.c.l.b16 %v187
      %v294 = vunpack.c.h.b16 %v187
      %v295 = vunpack.c.l.b16 %v188
      %v296 = vunpack.c.h.b16 %v188
      %v297 = vunpack.c.l.b16 %v189
      %v298 = vpack.c.b16 %v283, %v278
      %v299 = vpack.c.b16 %v284, %v279
      %v300 = vpack.c.b16 %v285, %v280
      %v301 = vpack.c.b16 %v286, %v281
      %v302 = vpack.c.b16 %v287, %v282
      %v303 = vpack.c.b16 %v293, %v288
      %v304 = vpack.c.b16 %v294, %v289
      %v305 = vpack.c.b16 %v295, %v290
      %v306 = vpack.c.b16 %v296, %v291
      %v307 = vpack.c.b16 %v297, %v292
      %v388 = vunpack.c.l.b16 %v190
      %v389 = vunpack.c.l.b16 %v191
      %v390 = vunpack.c.l.b16 %v192
      %v391 = vunpack.c.l.b16 %v193
      %v392 = vunpack.c.l.b16 %v194
      %v393 = vunpack.c.l.b16 %v195
      %v394 = vunpack.c.l.b16 %v196
      %v395 = vunpack.c.l.b16 %v197
      %v396 = vunpack.c.l.b16 %v198
      %v397 = vunpack.c.l.b16 %v199
      %v398 = vunpack.c.l.b16 %v200
      %v399 = vunpack.c.l.b16 %v201
      %v400 = vunpack.c.l.b16 %v202
      %v401 = vunpack.c.l.b16 %v203
      %v402 = vunpack.c.l.b16 %v204
      %v403 = vunpack.c.l.b16 %v205
      %v404 = vunpack.c.l.b16 %v206
      %v405 = vunpack.c.l.b16 %v207
      %v406 = vunpack.c.l.b16 %v208
      %v407 = vunpack.c.l.b16 %v209
      %v408 = vunpack.c.l.b16 %v210
      %v409 = vunpack.c.l.b16 %v211
      %v410 = vunpack.c.l.b16 %v212
      %v411 = vunpack.c.l.b16 %v213
      %v412 = vunpack.c.l.b16 %v214
      %v413 = vunpack.c.l.b16 %v215
      %v414 = vunpack.c.l.b16 %v216
      %v415 = vunpack.c.l.b16 %v217
      %v416 = vunpack.c.l.b16 %v218
      %v417 = vunpack.c.l.b16 %v219
      %v418 = vunpack.c.l.b16 %v220
      %v419 = vunpack.c.l.b16 %v221
      %v420 = vunpack.c.l.b16 %v222
      %v421 = vunpack.c.l.b16 %v223
      %v422 = vunpack.c.l.b16 %v224
      %v423 = vunpack.c.l.b16 %v225
      %v424 = vunpack.c.l.b16 %v226
      %v425 = vunpack.c.l.b16 %v227
      %v426 = vunpack.c.l.b16 %v228
      %v427 = vunpack.c.l.b16 %v229
      %v428 = vunpack.c.l.b16 %v230
      %v429 = vunpack.c.l.b16 %v231
      %v430 = vunpack.c.l.b16 %v232
      %v431 = vunpack.c.l.b16 %v233
      %v432 = vunpack.c.l.b16 %v234
      %v433 = vunpack.c.l.b16 %v235
      %v434 = vunpack.c.l.b16 %v236
      %v435 = vunpack.c.l.b16 %v237
      %v436 = vunpack.c.l.b16 %v238
      %v437 = vunpack.c.l.b16 %v239
      %v438 = vunpack.c.l.b16 %v240
      %v439 = vunpack.c.l.b16 %v241
      %v440 = vunpack.c.l.b16 %v242
      %v441 = vunpack.c.l.b16 %v243
      %v442 = vunpack.c.l.b16 %v244
      %v443 = vunpack.c.l.b16 %v245
      %v444 = vunpack.c.l.b16 %v246
      %v445 = vunpack.c.l.b16 %v247
      %v446 = vunpack.c.l.b16 %v248
      %v447 = vunpack.c.l.b16 %v249
      %v448 = vunpack.c.l.b16 %v250
      %v449 = vunpack.c.l.b16 %v251
      %v450 = vunpack.c.l.b16 %v252
      %v451 = vunpack.c.l.b16 %v253
      %v452 = vunpack.c.l.b16 %v254
      %v453 = vunpack.c.l.b16 %v255
      %v454 = vunpack.c.l.b16 %v256
      %v455 = vunpack.c.l.b16 %v257
      %v456 = vunpack.c.l.b16 %v258
      %v457 = vunpack.c.l.b16 %v259
      %v458 = vunpack.c.l.b16 %v260
      %v459 = vunpack.c.l.b16 %v261
      %v460 = vpack.c.b16 %v389, %v388
      %v461 = vpack.c.b16 %v391, %v390
      %v462 = vpack.c.b16 %v393, %v392
      %v463 = vpack.c.b16 %v395, %v394
      %v464 = vpack.c.b16 %v397, %v396
      %v465 = vpack.c.b16 %v399, %v398
      %v466 = vpack.c.b16 %v401, %v400
      %v467 = vpack.c.b16 %v403, %v402
      %v468 = vpack.c.b16 %v405, %v404
      %v469 = vpack.c.b16 %v407, %v406
      %v470 = vpack.c.b16 %v409, %v408
      %v471 = vpack.c.b16 %v411, %v410
      %v472 = vpack.c.b16 %v413, %v412
      %v473 = vpack.c.b16 %v415, %v414
      %v474 = vpack.c.b16 %v417, %v416
      %v475 = vpack.c.b16 %v419, %v418
      %v476 = vpack.c.b16 %v421, %v420
      %v477 = vpack.c.b16 %v423, %v422
      %v478 = vpack.c.b16 %v425, %v424
      %v479 = vpack.c.b16 %v427, %v426
      %v480 = vpack.c.b16 %v429, %v428
      %v481 = vpack.c.b16 %v431, %v430
      %v482 = vpack.c.b16 %v433, %v432
      %v483 = vpack.c.b16 %v435, %v434
      %v484 = vpack.c.b16 %v437, %v436
      %v485 = vpack.c.b16 %v439, %v438
      %v486 = vpack.c.b16 %v441, %v440
      %v487 = vpack.c.b16 %v443, %v442
      %v488 = vpack.c.b16 %v445, %v444
      %v489 = vpack.c.b16 %v447, %v446
      %v490 = vpack.c.b16 %v449, %v448
      %v491 = vpack.c.b16 %v451, %v450
      %v492 = vpack.c.b16 %v453, %v452
      %v493 = vpack.c.b16 %v455, %v454
      %v494 = vpack.c.b16 %v457, %v456
      %v495 = vpack.c.b16 %v459, %v458
      %vm532 = vcmask 523264
      %v534 = vsel %vm532, %v302, 0
      %v537 = vsel %vm532, %v307, 0
      %539 = vmatpush.bf16.msra.mxu0 %v467
      %540 = vmatpush.bf16.msra.mxu0 %v466
      %541 = vmatpush.bf16.msra.mxu0 %v465
      %542 = vmatpush.bf16.msra.mxu0 %v464
      %543 = vmatpush.bf16.msra.mxu0 %v463
      %544 = vmatpush.bf16.msra.mxu0 %v462
      %545 = vmatpush.bf16.msra.mxu0 %v461
      %546 = vmatpush.bf16.msra.mxu0 %v460
      %547 = vmatmul.bf16.gmra.mxu0 %v298
      %v548 = vpop.f32.mrf.mxu0
      %v549 = vadd.f32 %v264, %v548
      %v550 = vpop.f32.mrf.mxu0
      %v551 = vadd.f32 %v264, %v550
      %552 = vmatmul.bf16.gmra.mxu0 %v303
      %v553 = vpop.f32.mrf.mxu0
      %v554 = vadd.f32 %v264, %v553
      %v555 = vpop.f32.mrf.mxu0
      %v556 = vadd.f32 %v264, %v555
      %557 = vdwg.mxu0
      %558 = vmatpush.bf16.msra.mxu0 %v475
      %559 = vmatpush.bf16.msra.mxu0 %v474
      %560 = vmatpush.bf16.msra.mxu0 %v473
      %561 = vmatpush.bf16.msra.mxu0 %v472
      %562 = vmatpush.bf16.msra.mxu0 %v471
      %563 = vmatpush.bf16.msra.mxu0 %v470
      %564 = vmatpush.bf16.msra.mxu0 %v469
      %565 = vmatpush.bf16.msra.mxu0 %v468
      %566 = vmatmul.bf16.gmra.mxu0 %v299
      %v567 = vpop.f32.mrf.mxu0
      %v568 = vadd.f32 %v549, %v567
      %v569 = vpop.f32.mrf.mxu0
      %v570 = vadd.f32 %v551, %v569
      %571 = vmatmul.bf16.gmra.mxu0 %v304
      %v572 = vpop.f32.mrf.mxu0
      %v573 = vadd.f32 %v554, %v572
      %v574 = vpop.f32.mrf.mxu0
      %v575 = vadd.f32 %v556, %v574
      %576 = vdwg.mxu0
      %577 = vmatpush.bf16.msra.mxu0 %v483
      %578 = vmatpush.bf16.msra.mxu0 %v482
      %579 = vmatpush.bf16.msra.mxu0 %v481
      %580 = vmatpush.bf16.msra.mxu0 %v480
      %581 = vmatpush.bf16.msra.mxu0 %v479
      %582 = vmatpush.bf16.msra.mxu0 %v478
      %583 = vmatpush.bf16.msra.mxu0 %v477
      %584 = vmatpush.bf16.msra.mxu0 %v476
      %585 = vmatmul.bf16.gmra.mxu0 %v300
      %v586 = vpop.f32.mrf.mxu0
      %v587 = vadd.f32 %v568, %v586
      %v588 = vpop.f32.mrf.mxu0
      %v589 = vadd.f32 %v570, %v588
      %590 = vmatmul.bf16.gmra.mxu0 %v305
      %v591 = vpop.f32.mrf.mxu0
      %v592 = vadd.f32 %v573, %v591
      %v593 = vpop.f32.mrf.mxu0
      %v594 = vadd.f32 %v575, %v593
      %595 = vdwg.mxu0
      %596 = vmatpush.bf16.msra.mxu0 %v491
      %597 = vmatpush.bf16.msra.mxu0 %v490
      %598 = vmatpush.bf16.msra.mxu0 %v489
      %599 = vmatpush.bf16.msra.mxu0 %v488
      %600 = vmatpush.bf16.msra.mxu0 %v487
      %601 = vmatpush.bf16.msra.mxu0 %v486
      %602 = vmatpush.bf16.msra.mxu0 %v485
      %603 = vmatpush.bf16.msra.mxu0 %v484
      %604 = vmatmul.bf16.gmra.mxu0 %v301
      %v605 = vpop.f32.mrf.mxu0
      %v606 = vadd.f32 %v587, %v605
      %v607 = vpop.f32.mrf.mxu0
      %v608 = vadd.f32 %v589, %v607
      %609 = vmatmul.bf16.gmra.mxu0 %v306
      %v610 = vpop.f32.mrf.mxu0
      %v611 = vadd.f32 %v592, %v610
      %v612 = vpop.f32.mrf.mxu0
      %v613 = vadd.f32 %v594, %v612
      %614 = vdwg.mxu0
      %615 = vmatpush.bf16.msra.mxu0 0
      %616 = vmatpush.bf16.msra.mxu0 0
      %617 = vmatpush.bf16.msra.mxu0 0
      %618 = vmatpush.bf16.msra.mxu0 0
      %619 = vmatpush.bf16.msra.mxu0 %v495
      %620 = vmatpush.bf16.msra.mxu0 %v494
      %621 = vmatpush.bf16.msra.mxu0 %v493
      %622 = vmatpush.bf16.msra.mxu0 %v492
      %623 = vmatmul.bf16.gmra.mxu0 %v534
      %v624 = vpop.f32.mrf.mxu0
      %v625 = vadd.f32 %v606, %v624
      %v626 = vpop.f32.mrf.mxu0
      %v627 = vadd.f32 %v608, %v626
      %628 = vmatmul.bf16.gmra.mxu0 %v537
      %v629 = vpop.f32.mrf.mxu0
      %v630 = vadd.f32 %v611, %v629
      %v631 = vpop.f32.mrf.mxu0
      %v632 = vadd.f32 %v613, %v631
      %633 = vdwg.mxu0
      %v634 = vmax.f32 %v625, 0.0
      %v635 = vmax.f32 %v627, 0.0
      %v636 = vmax.f32 %v630, 0.0
      %v637 = vmax.f32 %v632, 0.0
      %v638 = vpack.c.bf16 %v634, %v634
      %v639 = vpack.c.bf16 %v635, %v635
      %v640 = vpack.c.bf16 %v636, %v636
      %v641 = vpack.c.bf16 %v637, %v637
      %vm642 = vcmask 257024
      %643 = vst.msk [vmem:[%s175] sm:$0xf] %vm642, %v638
      %644 = vst.msk [vmem:[%s175 + $0x4] sm:$0xf] %vm642, %v639
      %645 = vst.msk [vmem:[%s175 + $0x8] sm:$0xf] %vm642, %v640
      %646 = vst.msk [vmem:[%s175 + $0xc] sm:$0xf] %vm642, %v641
      %s647 = smul.u32 4, %s14
      %p648 = scmp.lt.s32.totalorder %s647, 7
      %s649 = scalar_select %p648, %s647, 7
      %s650 = smul.addr %s649, 4
      %s651 = scalar_lea.vmem %s3, %s650
      // Predicated region
      $region33: #{single_step_flow_rnn_forward.6} parent=31 // pred_check
        %p652 = pneg %p100
      $region34: #{single_step_flow_rnn_forward.6} parent=31 // pred_check_branch
        %654 = sbr.rel (%p652) target = $region36
      $region35: #{single_step_flow_rnn_forward.6} parent=31 // pred_region
        %s655 = smul.u32 4, %s14
      $region36: #{single_step_flow_rnn_forward.6} parent=31 // pred_fallthru
        _
    $region32: #{single_step_flow_rnn_forward.6} parent=5 // pred_fallthru
      _
    %p656 = scmp.le.s32.totalorder 2, %s9
    // Predicated region
    $region37: #{single_step_flow_rnn_forward.6} parent=5 // pred_check
      %p657 = pneg %p656
    $region38: #{single_step_flow_rnn_forward.6} parent=5 // pred_check_branch
      %659 = sbr.rel (%p657) target = $region40
    $region39: #{single_step_flow_rnn_forward.6} parent=5 // pred_region
      %s660 = ssub.s32 %s9, 2
      // Predicated region
      $region41: #{single_step_flow_rnn_forward.6} parent=39 // pred_check
        %p661 = pneg %p106
      $region42: #{single_step_flow_rnn_forward.6} parent=39 // pred_check_branch
        %663 = sbr.rel (%p661) target = $region44
      $region43: #{single_step_flow_rnn_forward.6} parent=39 // pred_region
        %s664 = smul.u32 4, %s15
        %p665 = scmp.lt.s32.totalorder %s664, 7
        %s666 = scalar_select %p665, %s664, 7
        %s667 = smul.addr %s666, 4
        %s668 = scalar_lea.vmem %s3, %s667
      $region44: #{single_step_flow_rnn_forward.6} parent=39 // pred_fallthru
        _
    $region40: #{single_step_flow_rnn_forward.6} parent=5 // pred_fallthru
      _
  $region6: #{single_step_flow_rnn_forward.6} parent=0 // loop_footer
    %s13 = sadd.s32 1, %s9
  $region7: #{single_step_flow_rnn_forward.6} parent=0 // loop_footer_branch
    %8 = sbr.rel target = $region3
  $region8: #{single_step_flow_rnn_forward.6} parent=0 // loop_exit
    _

// kernel: single_step_flow_rnn_forward.7
$region0: #{single_step_flow_rnn_forward.7}
  #allocation0 [shape = 'u32[]', space=smem, size = 0x4, offset = 0x4, fixed_abs, tag = 'smem constant byte address 0x4 - core index']
  #allocation1 [shape = 'u32[72,128]{1,0:T(1,128)}', space=vmem, size = 0x9000, scoped, tag = 'internal scratch']
  %s0 = inlined_call_operand.vmem [shape: f32[16,5], index: 0, kind: input, shape index: {}]
  %s1 = inlined_call_operand.vmem [shape: bf16[16,128], index: 1, kind: input, shape index: {}]
  %s2 = inlined_call_operand.vmem [shape: f32[5,32], index: 2, kind: input, shape index: {}]
  %s3 = inlined_call_operand.vmem [shape: f32[1,32], index: 3, kind: input, shape index: {}]
  %s4 = inlined_call_operand.vmem [shape: f32[1,32], index: 4, kind: input, shape index: {}]
  %s5 = inlined_call_operand.vmem [shape: f32[1,32], index: 5, kind: input, shape index: {}]
  %s6 = inlined_call_operand.vmem [shape: f32[32,32], index: 6, kind: input, shape index: {}]
  %s7 = inlined_call_operand.vmem [shape: f32[1,32], index: 7, kind: input, shape index: {}]
  %s8 = inlined_call_operand.vmem [shape: f32[1,32], index: 8, kind: input, shape index: {}]
  %s9 = inlined_call_operand.vmem [shape: f32[1,32], index: 9, kind: input, shape index: {}]
  %s10 = inlined_call_operand.vmem [shape: f32[128,32], index: 10, kind: input, shape index: {}]
  %s11 = inlined_call_operand.vmem [shape: f32[1,32], index: 11, kind: input, shape index: {}]
  %s12 = inlined_call_operand.vmem [shape: f32[32,32], index: 12, kind: input, shape index: {}]
  %s13 = inlined_call_operand.vmem [shape: f32[32,32], index: 13, kind: input, shape index: {}]
  %s14 = inlined_call_operand.vmem [shape: f32[1,32], index: 14, kind: input, shape index: {}]
  %s15 = inlined_call_operand.vmem [shape: f32[32,96], index: 15, kind: input, shape index: {}]
  %s16 = inlined_call_operand.vmem [shape: f32[1,96], index: 16, kind: input, shape index: {}]
  %s17 = inlined_call_operand.vmem [shape: f32[32,96], index: 17, kind: input, shape index: {}]
  %s18 = inlined_call_operand.vmem [shape: f32[1,96], index: 18, kind: input, shape index: {}]
  %s19 = inlined_call_operand.vmem [shape: f32[32,32], index: 19, kind: input, shape index: {}]
  %s20 = inlined_call_operand.vmem [shape: f32[1,32], index: 20, kind: input, shape index: {}]
  %s21 = inlined_call_operand.vmem [shape: f32[1,32], index: 21, kind: input, shape index: {}]
  %s22 = inlined_call_operand.vmem [shape: f32[1,32], index: 22, kind: input, shape index: {}]
  %s23 = inlined_call_operand.vmem [shape: f32[32,4], index: 23, kind: input, shape index: {}]
  %s24 = inlined_call_operand.vmem [shape: f32[1,4], index: 24, kind: input, shape index: {}]
  %s25 = inlined_call_operand.hbm [shape: f32[2,4], index: 25, kind: output, shape index: {}]
  %s26 = sld [smem:[#allocation0]]
  $region110: #{single_step_flow_rnn_forward.7} parent=0
    _
  %s28 = ssub.s32 1, %s26
  %s29 = scalar_select 0, %s28, %s26
  $region1: #{single_step_flow_rnn_forward.7} parent=0
    #allocation2 [shape = 'u8[1024]{0}', space=vmem, size = 0x400, scoped, tag = 'output window, operand 0, single buffered']
    #allocation3 [shape = 's32[1]{0}', space=sflag, size = 0x4, scoped, tag = 'scoped memory for single_step_flow_rnn_forward.7']
    %30 = vsyncpa [#allocation3], 0
    // Predicated region
    $region2: #{single_step_flow_rnn_forward.7} parent=1 // pred_check
      _
    $region3: #{single_step_flow_rnn_forward.7} parent=1 // pred_check_branch
      %32 = sbr.rel (0) target = $region5
    $region4: #{single_step_flow_rnn_forward.7} parent=1 // pred_region
      _
    $region5: #{single_step_flow_rnn_forward.7} parent=1 // pred_fallthru
      _
    // Predicated region
    $region6: #{single_step_flow_rnn_forward.7} parent=1 // pred_check
      _
    $region7: #{single_step_flow_rnn_forward.7} parent=1 // pred_check_branch
      %34 = sbr.rel (0) target = $region9
    $region8: #{single_step_flow_rnn_forward.7} parent=1 // pred_region
      _
    $region9: #{single_step_flow_rnn_forward.7} parent=1 // pred_fallthru
      _
    // Predicated region
    $region10: #{single_step_flow_rnn_forward.7} parent=1 // pred_check
      _
    $region11: #{single_step_flow_rnn_forward.7} parent=1 // pred_check_branch
      %36 = sbr.rel (0) target = $region13
    $region12: #{single_step_flow_rnn_forward.7} parent=1 // pred_region
      _
    $region13: #{single_step_flow_rnn_forward.7} parent=1 // pred_fallthru
      _
    // Predicated region
    $region14: #{single_step_flow_rnn_forward.7} parent=1 // pred_check
      _
    $region15: #{single_step_flow_rnn_forward.7} parent=1 // pred_check_branch
      %38 = sbr.rel (0) target = $region17
    $region16: #{single_step_flow_rnn_forward.7} parent=1 // pred_region
      _
    $region17: #{single_step_flow_rnn_forward.7} parent=1 // pred_fallthru
      _
    // Predicated region
    $region18: #{single_step_flow_rnn_forward.7} parent=1 // pred_check
      _
    $region19: #{single_step_flow_rnn_forward.7} parent=1 // pred_check_branch
      %40 = sbr.rel (0) target = $region21
    $region20: #{single_step_flow_rnn_forward.7} parent=1 // pred_region
      _
    $region21: #{single_step_flow_rnn_forward.7} parent=1 // pred_fallthru
      _
    // Predicated region
    $region22: #{single_step_flow_rnn_forward.7} parent=1 // pred_check
      _
    $region23: #{single_step_flow_rnn_forward.7} parent=1 // pred_check_branch
      %42 = sbr.rel (0) target = $region25
    $region24: #{single_step_flow_rnn_forward.7} parent=1 // pred_region
      _
    $region25: #{single_step_flow_rnn_forward.7} parent=1 // pred_fallthru
      _
    // Predicated region
    $region26: #{single_step_flow_rnn_forward.7} parent=1 // pred_check
      _
    $region27: #{single_step_flow_rnn_forward.7} parent=1 // pred_check_branch
      %44 = sbr.rel (0) target = $region29
    $region28: #{single_step_flow_rnn_forward.7} parent=1 // pred_region
      _
    $region29: #{single_step_flow_rnn_forward.7} parent=1 // pred_fallthru
      _
    // Predicated region
    $region30: #{single_step_flow_rnn_forward.7} parent=1 // pred_check
      _
    $region31: #{single_step_flow_rnn_forward.7} parent=1 // pred_check_branch
      %46 = sbr.rel (0) target = $region33
    $region32: #{single_step_flow_rnn_forward.7} parent=1 // pred_region
      _
    $region33: #{single_step_flow_rnn_forward.7} parent=1 // pred_fallthru
      _
    // Predicated region
    $region34: #{single_step_flow_rnn_forward.7} parent=1 // pred_check
      _
    $region35: #{single_step_flow_rnn_forward.7} parent=1 // pred_check_branch
      %48 = sbr.rel (0) target = $region37
    $region36: #{single_step_flow_rnn_forward.7} parent=1 // pred_region
      _
    $region37: #{single_step_flow_rnn_forward.7} parent=1 // pred_fallthru
      _
    // Predicated region
    $region38: #{single_step_flow_rnn_forward.7} parent=1 // pred_check
      _
    $region39: #{single_step_flow_rnn_forward.7} parent=1 // pred_check_branch
      %50 = sbr.rel (0) target = $region41
    $region40: #{single_step_flow_rnn_forward.7} parent=1 // pred_region
      _
    $region41: #{single_step_flow_rnn_forward.7} parent=1 // pred_fallthru
      _
    // Predicated region
    $region42: #{single_step_flow_rnn_forward.7} parent=1 // pred_check
      _
    $region43: #{single_step_flow_rnn_forward.7} parent=1 // pred_check_branch
      %52 = sbr.rel (0) target = $region45
    $region44: #{single_step_flow_rnn_forward.7} parent=1 // pred_region
      _
    $region45: #{single_step_flow_rnn_forward.7} parent=1 // pred_fallthru
      _
    // Predicated region
    $region46: #{single_step_flow_rnn_forward.7} parent=1 // pred_check
      _
    $region47: #{single_step_flow_rnn_forward.7} parent=1 // pred_check_branch
      %54 = sbr.rel (0) target = $region49
    $region48: #{single_step_flow_rnn_forward.7} parent=1 // pred_region
      _
    $region49: #{single_step_flow_rnn_forward.7} parent=1 // pred_fallthru
      _
    // Predicated region
    $region50: #{single_step_flow_rnn_forward.7} parent=1 // pred_check
      _
    $region51: #{single_step_flow_rnn_forward.7} parent=1 // pred_check_branch
      %56 = sbr.rel (0) target = $region53
    $region52: #{single_step_flow_rnn_forward.7} parent=1 // pred_region
      _
    $region53: #{single_step_flow_rnn_forward.7} parent=1 // pred_fallthru
      _
    // Predicated region
    $region54: #{single_step_flow_rnn_forward.7} parent=1 // pred_check
      _
    $region55: #{single_step_flow_rnn_forward.7} parent=1 // pred_check_branch
      %58 = sbr.rel (0) target = $region57
    $region56: #{single_step_flow_rnn_forward.7} parent=1 // pred_region
      _
    $region57: #{single_step_flow_rnn_forward.7} parent=1 // pred_fallthru
      _
    // Predicated region
    $region58: #{single_step_flow_rnn_forward.7} parent=1 // pred_check
      _
    $region59: #{single_step_flow_rnn_forward.7} parent=1 // pred_check_branch
      %60 = sbr.rel (0) target = $region61
    $region60: #{single_step_flow_rnn_forward.7} parent=1 // pred_region
      _
    $region61: #{single_step_flow_rnn_forward.7} parent=1 // pred_fallthru
      _
    // Predicated region
    $region62: #{single_step_flow_rnn_forward.7} parent=1 // pred_check
      _
    $region63: #{single_step_flow_rnn_forward.7} parent=1 // pred_check_branch
      %62 = sbr.rel (0) target = $region65
    $region64: #{single_step_flow_rnn_forward.7} parent=1 // pred_region
      _
    $region65: #{single_step_flow_rnn_forward.7} parent=1 // pred_fallthru
      _
    // Predicated region
    $region66: #{single_step_flow_rnn_forward.7} parent=1 // pred_check
      _
    $region67: #{single_step_flow_rnn_forward.7} parent=1 // pred_check_branch
      %64 = sbr.rel (0) target = $region69
    $region68: #{single_step_flow_rnn_forward.7} parent=1 // pred_region
      _
    $region69: #{single_step_flow_rnn_forward.7} parent=1 // pred_fallthru
      _
    // Predicated region
    $region70: #{single_step_flow_rnn_forward.7} parent=1 // pred_check
      _
    $region71: #{single_step_flow_rnn_forward.7} parent=1 // pred_check_branch
      %66 = sbr.rel (0) target = $region73
    $region72: #{single_step_flow_rnn_forward.7} parent=1 // pred_region
      _
    $region73: #{single_step_flow_rnn_forward.7} parent=1 // pred_fallthru
      _
    // Predicated region
    $region74: #{single_step_flow_rnn_forward.7} parent=1 // pred_check
      _
    $region75: #{single_step_flow_rnn_forward.7} parent=1 // pred_check_branch
      %68 = sbr.rel (0) target = $region77
    $region76: #{single_step_flow_rnn_forward.7} parent=1 // pred_region
      _
    $region77: #{single_step_flow_rnn_forward.7} parent=1 // pred_fallthru
      _
    // Predicated region
    $region78: #{single_step_flow_rnn_forward.7} parent=1 // pred_check
      _
    $region79: #{single_step_flow_rnn_forward.7} parent=1 // pred_check_branch
      %70 = sbr.rel (0) target = $region81
    $region80: #{single_step_flow_rnn_forward.7} parent=1 // pred_region
      _
    $region81: #{single_step_flow_rnn_forward.7} parent=1 // pred_fallthru
      _
    // Predicated region
    $region82: #{single_step_flow_rnn_forward.7} parent=1 // pred_check
      _
    $region83: #{single_step_flow_rnn_forward.7} parent=1 // pred_check_branch
      %72 = sbr.rel (0) target = $region85
    $region84: #{single_step_flow_rnn_forward.7} parent=1 // pred_region
      _
    $region85: #{single_step_flow_rnn_forward.7} parent=1 // pred_fallthru
      _
    // Predicated region
    $region86: #{single_step_flow_rnn_forward.7} parent=1 // pred_check
      _
    $region87: #{single_step_flow_rnn_forward.7} parent=1 // pred_check_branch
      %74 = sbr.rel (0) target = $region89
    $region88: #{single_step_flow_rnn_forward.7} parent=1 // pred_region
      _
    $region89: #{single_step_flow_rnn_forward.7} parent=1 // pred_fallthru
      _
    // Predicated region
    $region90: #{single_step_flow_rnn_forward.7} parent=1 // pred_check
      _
    $region91: #{single_step_flow_rnn_forward.7} parent=1 // pred_check_branch
      %76 = sbr.rel (0) target = $region93
    $region92: #{single_step_flow_rnn_forward.7} parent=1 // pred_region
      _
    $region93: #{single_step_flow_rnn_forward.7} parent=1 // pred_fallthru
      _
    // Predicated region
    $region94: #{single_step_flow_rnn_forward.7} parent=1 // pred_check
      _
    $region95: #{single_step_flow_rnn_forward.7} parent=1 // pred_check_branch
      %78 = sbr.rel (0) target = $region97
    $region96: #{single_step_flow_rnn_forward.7} parent=1 // pred_region
      _
    $region97: #{single_step_flow_rnn_forward.7} parent=1 // pred_fallthru
      _
    // Predicated region
    $region98: #{single_step_flow_rnn_forward.7} parent=1 // pred_check
      _
    $region99: #{single_step_flow_rnn_forward.7} parent=1 // pred_check_branch
      %80 = sbr.rel (0) target = $region101
    $region100: #{single_step_flow_rnn_forward.7} parent=1 // pred_region
      _
    $region101: #{single_step_flow_rnn_forward.7} parent=1 // pred_fallthru
      _
    %v81 = vld [vmem:[%s0] sm:$0xff]
    %v82 = vld [vmem:[%s0 + $0x8] sm:$0xff]
    %v83 = vld [vmem:[%s2] sm:$0x1f]
    %v84 = vld [vmem:[%s3] sm:$0x1]
    %v86 = vperm.slane %v84, 0
    %vm88 = vcmask 39936
    %v90 = vsel %vm88, %v81, 0
    %v93 = vsel %vm88, %v82, 0
    %vm95 = vcmask 1044480
    %v97 = vsel %vm95, %v83, 0
    %99 = vmatpush.msra.mxu0 0.0
    %100 = vmatpush.msra.mxu0 0.0
    %101 = vmatpush.msra.mxu0 0.0
    %102 = vmatpush.msra.mxu0 0.0
    %103 = vmatpush.msra.mxu0 0.0
    %104 = vmatpush.msra.mxu0 0.0
    %105 = vmatpush.msra.mxu0 0.0
    %106 = vmatpush.msra.mxu0 0.0
    %107 = vmatpush.msra.mxu0 0.0
    %108 = vmatpush.msra.mxu0 0.0
    %109 = vmatpush.msra.mxu0 0.0
    %110 = vmatpush.msra.mxu0 0.0
    %111 = vmatpush.msra.mxu0 0.0
    %112 = vmatpush.msra.mxu0 0.0
    %113 = vmatpush.msra.mxu0 0.0
    %114 = vmatpush.msra.mxu0 %v97
    %115 = vmatmul.f32.gmra.mxu0 %v90
    %v116 = vpop.f32.mrf.mxu0
    %v117 = vadd.f32 %v86, %v116
    %118 = vmatmul.f32.gmra.mxu0 %v93
    %v119 = vpop.f32.mrf.mxu0
    %v120 = vadd.f32 %v86, %v119
    %121 = vdwg.mxu0
    %v122 = vld [vmem:[%s4] sm:$0x1]
    %v123 = vld [vmem:[%s5] sm:$0x1]
    %vm124 = vcmask 261120
    %v125 = vsel %vm124, %v117, 0.0
    %126 = vadd.xlane.f32.xlu0 %v125
    %v127 = vpop.xlane.xlu0 %126
    %v128 = vsel %vm124, %v120, 0.0
    %129 = vadd.xlane.f32.xlu0 %v128
    %v130 = vpop.xlane.xlu0 %129
    %v131 = vrcp.pop 32.0
    %v132 = vmul.f32 32.0, %v131
    %v133 = vsub.f32 1.0, %v132
    %v134 = vmul.f32 %v131, %v133
    %v135 = vadd.f32 %v131, %v134
    %vm136 = vweird.f32 %v131
    %v137 = vsel %vm136, %v131, %v135
    %v138 = vmul.f32 %v127, %v137
    %v139 = vmul.f32 %v130, %v137
    %v140 = vsub.f32 %v117, %v138
    %v141 = vsub.f32 %v120, %v139
    %v142 = vmul.f32 %v140, %v140
    %v143 = vmul.f32 %v141, %v141
    %v144 = vsel %vm124, %v142, 0.0
    %145 = vadd.xlane.f32.xlu0 %v144
    %v146 = vpop.xlane.xlu0 %145
    %v147 = vsel %vm124, %v143, 0.0
    %148 = vadd.xlane.f32.xlu0 %v147
    %v149 = vpop.xlane.xlu0 %148
    %v150 = vmul.f32 %v146, %v137
    %v151 = vmul.f32 %v149, %v137
    %v152 = vadd.f32 %v150, 1e-05
    %v153 = vadd.f32 %v151, 1e-05
    %v154 = vrsqrt.pop %v152
    %v155 = vmul.f32 %v154, %v152
    %v156 = vmul.f32 %v155, %v154
    %v157 = vmul.f32 0.5, %v156
    %v158 = vsub.f32 1.5, %v157
    %v159 = vmul.f32 %v154, %v158
    %vm160 = vweird.f32 %v152
    %vm161 = vweird.f32 %v154
    %vm162 = vmor %vm160, %vm161
    %v163 = vsel %vm162, %v154, %v159
    %v164 = vrsqrt.pop %v153
    %v165 = vmul.f32 %v164, %v153
    %v166 = vmul.f32 %v165, %v164
    %v167 = vmul.f32 0.5, %v166
    %v168 = vsub.f32 1.5, %v167
    %v169 = vmul.f32 %v164, %v168
    %vm170 = vweird.f32 %v153
    %vm171 = vweird.f32 %v164
    %vm172 = vmor %vm170, %vm171
    %v173 = vsel %vm172, %v164, %v169
    %v174 = vmul.f32 %v140, %v163
    %v175 = vmul.f32 %v141, %v173
    %v177 = vperm.slane %v122, 0
    %v179 = vmul.f32 %v174, %v177
    %v180 = vmul.f32 %v175, %v177
    %v182 = vperm.slane %v123, 0
    %v184 = vadd.f32 %v179, %v182
    %v185 = vadd.f32 %v180, %v182
    %vm186 = vcmp.ge.f32.partialorder %v184, 0.0
    %vm187 = vcmp.ge.f32.partialorder %v185, 0.0
    %v188 = vmul.f32 %v184, 0.01
    %v189 = vmul.f32 %v185, 0.01
    %v190 = vsel %vm186, %v184, %v188
    %v191 = vsel %vm187, %v185, %v189
    %v192 = vld [vmem:[%s6] sm:$0xff]
    %v193 = vld [vmem:[%s6 + $0x8] sm:$0xff]
    %v194 = vld [vmem:[%s6 + $0x10] sm:$0xff]
    %v195 = vld [vmem:[%s6 + $0x18] sm:$0xff]
    %v196 = vld [vmem:[%s7] sm:$0x1]
    %v198 = vperm.slane %v196, 0
    %v201 = vsel %vm124, %v190, 0
    %v204 = vsel %vm124, %v191, 0
    %206 = vmatpush.msra.mxu0 0.0
    %207 = vmatpush.msra.mxu0 0.0
    %208 = vmatpush.msra.mxu0 0.0
    %209 = vmatpush.msra.mxu0 0.0
    %210 = vmatpush.msra.mxu0 0.0
    %211 = vmatpush.msra.mxu0 0.0
    %212 = vmatpush.msra.mxu0 0.0
    %213 = vmatpush.msra.mxu0 0.0
    %214 = vmatpush.msra.mxu0 0.0
    %215 = vmatpush.msra.mxu0 0.0
    %216 = vmatpush.msra.mxu0 0.0
    %217 = vmatpush.msra.mxu0 0.0
    %218 = vmatpush.msra.mxu0 %v195
    %219 = vmatpush.msra.mxu0 %v194
    %220 = vmatpush.msra.mxu0 %v193
    %221 = vmatpush.msra.mxu0 %v192
    %222 = vmatmul.f32.gmra.mxu0 %v201
    %v223 = vpop.f32.mrf.mxu0
    %v224 = vadd.f32 %v198, %v223
    %225 = vmatmul.f32.gmra.mxu0 %v204
    %v226 = vpop.f32.mrf.mxu0
    %v227 = vadd.f32 %v198, %v226
    %228 = vdwg.mxu0
    %v229 = vld [vmem:[%s8] sm:$0x1]
    %v230 = vld [vmem:[%s9] sm:$0x1]
    %v231 = vsel %vm124, %v224, 0.0
    %232 = vadd.xlane.f32.xlu0 %v231
    %v233 = vpop.xlane.xlu0 %232
    %v234 = vsel %vm124, %v227, 0.0
    %235 = vadd.xlane.f32.xlu0 %v234
    %v236 = vpop.xlane.xlu0 %235
    %v237 = vmul.f32 %v233, %v137
    %v238 = vmul.f32 %v236, %v137
    %v239 = vsub.f32 %v224, %v237
    %v240 = vsub.f32 %v227, %v238
    %v241 = vmul.f32 %v239, %v239
    %v242 = vmul.f32 %v240, %v240
    %v243 = vsel %vm124, %v241, 0.0
    %244 = vadd.xlane.f32.xlu0 %v243
    %v245 = vpop.xlane.xlu0 %244
    %v246 = vsel %vm124, %v242, 0.0
    %247 = vadd.xlane.f32.xlu0 %v246
    %v248 = vpop.xlane.xlu0 %247
    %v249 = vmul.f32 %v245, %v137
    %v250 = vmul.f32 %v248, %v137
    %v251 = vadd.f32 %v249, 1e-05
    %v252 = vadd.f32 %v250, 1e-05
    %v253 = vrsqrt.pop %v251
    %v254 = vmul.f32 %v253, %v251
    %v255 = vmul.f32 %v254, %v253
    %v256 = vmul.f32 0.5, %v255
    %v257 = vsub.f32 1.5, %v256
    %v258 = vmul.f32 %v253, %v257
    %vm259 = vweird.f32 %v251
    %vm260 = vweird.f32 %v253
    %vm261 = vmor %vm259, %vm260
    %v262 = vsel %vm261, %v253, %v258
    %v263 = vrsqrt.pop %v252
    %v264 = vmul.f32 %v263, %v252
    %v265 = vmul.f32 %v264, %v263
    %v266 = vmul.f32 0.5, %v265
    %v267 = vsub.f32 1.5, %v266
    %v268 = vmul.f32 %v263, %v267
    %vm269 = vweird.f32 %v252
    %vm270 = vweird.f32 %v263
    %vm271 = vmor %vm269, %vm270
    %v272 = vsel %vm271, %v263, %v268
    %v273 = vmul.f32 %v239, %v262
    %v274 = vmul.f32 %v240, %v272
    %v276 = vperm.slane %v229, 0
    %v278 = vmul.f32 %v273, %v276
    %v279 = vmul.f32 %v274, %v276
    %v281 = vperm.slane %v230, 0
    %v283 = vadd.f32 %v278, %v281
    %v284 = vadd.f32 %v279, %v281
    %vm285 = vcmp.ge.f32.partialorder %v283, 0.0
    %vm286 = vcmp.ge.f32.partialorder %v284, 0.0
    %v287 = vmul.f32 %v283, 0.01
    %v288 = vmul.f32 %v284, 0.01
    %v289 = vsel %vm285, %v283, %v287
    %v290 = vsel %vm286, %v284, %v288
    %v291 = vld [vmem:[%s1] sm:$0xf]
    %v292 = vld [vmem:[%s1 + $0x4] sm:$0xf]
    %v293 = vunpack.c.l.bf16 %v291
    %v294 = vunpack.c.l.bf16 %v292
    %v295 = vld [vmem:[%s10] sm:$0xff]
    %v296 = vld [vmem:[%s10 + $0x8] sm:$0xff]
    %v297 = vld [vmem:[%s10 + $0x10] sm:$0xff]
    %v298 = vld [vmem:[%s10 + $0x18] sm:$0xff]
    %v299 = vld [vmem:[%s10 + $0x20] sm:$0xff]
    %v300 = vld [vmem:[%s10 + $0x28] sm:$0xff]
    %v301 = vld [vmem:[%s10 + $0x30] sm:$0xff]
    %v302 = vld [vmem:[%s10 + $0x38] sm:$0xff]
    %v303 = vld [vmem:[%s10 + $0x40] sm:$0xff]
    %v304 = vld [vmem:[%s10 + $0x48] sm:$0xff]
    %v305 = vld [vmem:[%s10 + $0x50] sm:$0xff]
    %v306 = vld [vmem:[%s10 + $0x58] sm:$0xff]
    %v307 = vld [vmem:[%s10 + $0x60] sm:$0xff]
    %v308 = vld [vmem:[%s10 + $0x68] sm:$0xff]
    %v309 = vld [vmem:[%s10 + $0x70] sm:$0xff]
    %v310 = vld [vmem:[%s10 + $0x78] sm:$0xff]
    %v311 = vld [vmem:[%s11] sm:$0x1]
    %v313 = vperm.slane %v311, 0
    %315 = vmatpush.msra.mxu0 %v310
    %316 = vmatpush.msra.mxu0 %v309
    %317 = vmatpush.msra.mxu0 %v308
    %318 = vmatpush.msra.mxu0 %v307
    %319 = vmatpush.msra.mxu0 %v306
    %320 = vmatpush.msra.mxu0 %v305
    %321 = vmatpush.msra.mxu0 %v304
    %322 = vmatpush.msra.mxu0 %v303
    %323 = vmatpush.msra.mxu0 %v302
    %324 = vmatpush.msra.mxu0 %v301
    %325 = vmatpush.msra.mxu0 %v300
    %326 = vmatpush.msra.mxu0 %v299
    %327 = vmatpush.msra.mxu0 %v298
    %328 = vmatpush.msra.mxu0 %v297
    %329 = vmatpush.msra.mxu0 %v296
    %330 = vmatpush.msra.mxu0 %v295
    %331 = vmatmul.f32.gmra.mxu0 %v293
    %v332 = vpop.f32.mrf.mxu0
    %v333 = vadd.f32 %v313, %v332
    %334 = vmatmul.f32.gmra.mxu0 %v294
    %v335 = vpop.f32.mrf.mxu0
    %v336 = vadd.f32 %v313, %v335
    %337 = vdwg.mxu0
    %v338 = vmax.f32 %v333, 0.0
    %v339 = vmax.f32 %v336, 0.0
    %v340 = vld [vmem:[%s12] sm:$0xff]
    %v341 = vld [vmem:[%s12 + $0x8] sm:$0xff]
    %v342 = vld [vmem:[%s12 + $0x10] sm:$0xff]
    %v343 = vld [vmem:[%s12 + $0x18] sm:$0xff]
    %v344 = vld [vmem:[%s13] sm:$0xff]
    %v345 = vld [vmem:[%s13 + $0x8] sm:$0xff]
    %v346 = vld [vmem:[%s13 + $0x10] sm:$0xff]
    %v347 = vld [vmem:[%s13 + $0x18] sm:$0xff]
    %v349 = vsel %vm124, %v338, 0
    %v352 = vsel %vm124, %v339, 0
    %354 = vmatpush.msra.mxu0 0.0
    %355 = vmatpush.msra.mxu0 0.0
    %356 = vmatpush.msra.mxu0 0.0
    %357 = vmatpush.msra.mxu0 0.0
    %358 = vmatpush.msra.mxu0 0.0
    %359 = vmatpush.msra.mxu0 0.0
    %360 = vmatpush.msra.mxu0 0.0
    %361 = vmatpush.msra.mxu0 0.0
    %362 = vmatpush.msra.mxu0 0.0
    %363 = vmatpush.msra.mxu0 0.0
    %364 = vmatpush.msra.mxu0 0.0
    %365 = vmatpush.msra.mxu0 0.0
    %366 = vmatpush.msra.mxu0 %v347
    %367 = vmatpush.msra.mxu0 %v346
    %368 = vmatpush.msra.mxu0 %v345
    %369 = vmatpush.msra.mxu0 %v344
    %370 = vmatmul.f32.gmra.mxu0 %v349
    %v371 = vpop.f32.mrf.mxu0
    %v372 = vadd.f32 0.0, %v371
    %373 = vmatmul.f32.gmra.mxu0 %v352
    %v374 = vpop.f32.mrf.mxu0
    %v375 = vadd.f32 0.0, %v374
    %376 = vdwg.mxu0
    %v378 = vsel %vm124, %v289, 0
    %v381 = vsel %vm124, %v290, 0
    %383 = vmatpush.msra.mxu0 0.0
    %384 = vmatpush.msra.mxu0 0.0
    %385 = vmatpush.msra.mxu0 0.0
    %386 = vmatpush.msra.mxu0 0.0
    %387 = vmatpush.msra.mxu0 0.0
    %388 = vmatpush.msra.mxu0 0.0
    %389 = vmatpush.msra.mxu0 0.0
    %390 = vmatpush.msra.mxu0 0.0
    %391 = vmatpush.msra.mxu0 0.0
    %392 = vmatpush.msra.mxu0 0.0
    %393 = vmatpush.msra.mxu0 0.0
    %394 = vmatpush.msra.mxu0 0.0
    %395 = vmatpush.msra.mxu0 %v343
    %396 = vmatpush.msra.mxu0 %v342
    %397 = vmatpush.msra.mxu0 %v341
    %398 = vmatpush.msra.mxu0 %v340
    %399 = vmatmul.f32.gmra.mxu0 %v378
    %v400 = vpop.f32.mrf.mxu0
    %v401 = vadd.f32 %v372, %v400
    %402 = vmatmul.f32.gmra.mxu0 %v381
    %v403 = vpop.f32.mrf.mxu0
    %v404 = vadd.f32 %v375, %v403
    %405 = vdwg.mxu0
    %v406 = vld [vmem:[%s14] sm:$0x1]
    %v408 = vperm.slane %v406, 0
    %v410 = vadd.f32 %v401, %v408
    %v411 = vadd.f32 %v404, %v408
    %v412 = vmax.f32 %v410, 0.0
    %v413 = vmax.f32 %v411, 0.0
    %v414 = vld [vmem:[%s15] sm:$0xff]
    %v415 = vld [vmem:[%s15 + $0x8] sm:$0xff]
    %v416 = vld [vmem:[%s15 + $0x10] sm:$0xff]
    %v417 = vld [vmem:[%s15 + $0x18] sm:$0xff]
    %v418 = vld [vmem:[%s16] sm:$0x1]
    %v420 = vperm.slane %v418, 0
    %v423 = vsel %vm124, %v412, 0
    %v426 = vsel %vm124, %v413, 0
    %428 = vmatpush.msra.mxu0 0.0
    %429 = vmatpush.msra.mxu0 0.0
    %430 = vmatpush.msra.mxu0 0.0
    %431 = vmatpush.msra.mxu0 0.0
    %432 = vmatpush.msra.mxu0 0.0
    %433 = vmatpush.msra.mxu0 0.0
    %434 = vmatpush.msra.mxu0 0.0
    %435 = vmatpush.msra.mxu0 0.0
    %436 = vmatpush.msra.mxu0 0.0
    %437 = vmatpush.msra.mxu0 0.0
    %438 = vmatpush.msra.mxu0 0.0
    %439 = vmatpush.msra.mxu0 0.0
    %440 = vmatpush.msra.mxu0 %v417
    %441 = vmatpush.msra.mxu0 %v416
    %442 = vmatpush.msra.mxu0 %v415
    %443 = vmatpush.msra.mxu0 %v414
    %444 = vmatmul.f32.gmra.mxu0 %v423
    %v445 = vpop.f32.mrf.mxu0
    %v446 = vadd.f32 %v420, %v445
    %447 = vmatmul.f32.gmra.mxu0 %v426
    %v448 = vpop.f32.mrf.mxu0
    %v449 = vadd.f32 %v420, %v448
    %450 = vdwg.mxu0
    %v451 = vld [vmem:[%s17] sm:$0xff]
    %v452 = vld [vmem:[%s17 + $0x8] sm:$0xff]
    %v453 = vld [vmem:[%s17 + $0x10] sm:$0xff]
    %v454 = vld [vmem:[%s17 + $0x18] sm:$0xff]
    %v455 = vld [vmem:[%s18] sm:$0x1]
    %v457 = vperm.slane %v455, 0
    %v460 = vsel %vm124, 0.0, 0
    %462 = vmatpush.msra.mxu0 0.0
    %463 = vmatpush.msra.mxu0 0.0
    %464 = vmatpush.msra.mxu0 0.0
    %465 = vmatpush.msra.mxu0 0.0
    %466 = vmatpush.msra.mxu0 0.0
    %467 = vmatpush.msra.mxu0 0.0
    %468 = vmatpush.msra.mxu0 0.0
    %469 = vmatpush.msra.mxu0 0.0
    %470 = vmatpush.msra.mxu0 0.0
    %471 = vmatpush.msra.mxu0 0.0
    %472 = vmatpush.msra.mxu0 0.0
    %473 = vmatpush.msra.mxu0 0.0
    %474 = vmatpush.msra.mxu0 %v454
    %475 = vmatpush.msra.mxu0 %v453
    %476 = vmatpush.msra.mxu0 %v452
    %477 = vmatpush.msra.mxu0 %v451
    %478 = vmatmul.f32.gmra.mxu0 %v460
    %v479 = vpop.f32.mrf.mxu0
    %v480 = vadd.f32 %v457, %v479
    %481 = vdwg.mxu0
    %486 = vrot.lane.b32.xlu0 %v451, 96
    %v487 = vpop.permute.xlu0 %486
    %488 = vrot.lane.b32.xlu0 %v452, 96
    %v489 = vpop.permute.xlu0 %488
    %490 = vrot.lane.b32.xlu0 %v453, 96
    %v491 = vpop.permute.xlu0 %490
    %492 = vrot.lane.b32.xlu0 %v454, 96
    %v493 = vpop.permute.xlu0 %492
    %498 = vrot.lane.b32.xlu0 %v457, 96
    %v499 = vpop.permute.xlu0 %498
    %501 = vmatpush.msra.mxu0 0.0
    %502 = vmatpush.msra.mxu0 0.0
    %503 = vmatpush.msra.mxu0 0.0
    %504 = vmatpush.msra.mxu0 0.0
    %505 = vmatpush.msra.mxu0 0.0
    %506 = vmatpush.msra.mxu0 0.0
    %507 = vmatpush.msra.mxu0 0.0
    %508 = vmatpush.msra.mxu0 0.0
    %509 = vmatpush.msra.mxu0 0.0
    %510 = vmatpush.msra.mxu0 0.0
    %511 = vmatpush.msra.mxu0 0.0
    %512 = vmatpush.msra.mxu0 0.0
    %513 = vmatpush.msra.mxu0 %v493
    %514 = vmatpush.msra.mxu0 %v491
    %515 = vmatpush.msra.mxu0 %v489
    %516 = vmatpush.msra.mxu0 %v487
    %517 = vmatmul.f32.gmra.mxu0 %v460
    %v518 = vpop.f32.mrf.mxu0
    %v519 = vadd.f32 %v499, %v518
    %520 = vdwg.mxu0
    %521 = vrot.lane.b32.xlu0 %v451, 64
    %v522 = vpop.permute.xlu0 %521
    %523 = vrot.lane.b32.xlu0 %v452, 64
    %v524 = vpop.permute.xlu0 %523
    %525 = vrot.lane.b32.xlu0 %v453, 64
    %v526 = vpop.permute.xlu0 %525
    %527 = vrot.lane.b32.xlu0 %v454, 64
    %v528 = vpop.permute.xlu0 %527
    %533 = vrot.lane.b32.xlu0 %v457, 64
    %v534 = vpop.permute.xlu0 %533
    %536 = vmatpush.msra.mxu0 0.0
    %537 = vmatpush.msra.mxu0 0.0
    %538 = vmatpush.msra.mxu0 0.0
    %539 = vmatpush.msra.mxu0 0.0
    %540 = vmatpush.msra.mxu0 0.0
    %541 = vmatpush.msra.mxu0 0.0
    %542 = vmatpush.msra.mxu0 0.0
    %543 = vmatpush.msra.mxu0 0.0
    %544 = vmatpush.msra.mxu0 0.0
    %545 = vmatpush.msra.mxu0 0.0
    %546 = vmatpush.msra.mxu0 0.0
    %547 = vmatpush.msra.mxu0 0.0
    %548 = vmatpush.msra.mxu0 %v528
    %549 = vmatpush.msra.mxu0 %v526
    %550 = vmatpush.msra.mxu0 %v524
    %551 = vmatpush.msra.mxu0 %v522
    %552 = vmatmul.f32.gmra.mxu0 %v460
    %v553 = vpop.f32.mrf.mxu0
    %v554 = vadd.f32 %v534, %v553
    %555 = vdwg.mxu0
    %v556 = vadd.f32 %v446, %v480
    %v557 = vxor.u32 %v556, 2147483648
    %v558 = vmul.f32 %v557, 1.442695
    %v559 = vpow.pop %v558
    %v560 = vadd.f32 %v559, 1.0
    %v561 = vrcp.pop %v560
    %v562 = vmul.f32 %v560, %v561
    %v563 = vsub.f32 1.0, %v562
    %v564 = vmul.f32 %v561, %v563
    %v565 = vadd.f32 %v561, %v564
    %vm566 = vweird.f32 %v560
    %vm567 = vweird.f32 %v561
    %vm568 = vmor %vm566, %vm567
    %v569 = vsel %vm568, %v561, %v565
    %v570 = vand.u32 2147483647, %v560
    %vm571 = vcmp.eq.f32.partialorder %v570, 8.507059e+37
    %v572 = vand.u32 %v560, 2147483648
    %v573 = vor.u32 1.1754944e-38, %v572
    %v574 = vsel %vm571, %v573, %v569
    %v575 = vmul.f32 1.0, %v574
    %577 = vrot.lane.b32.xlu0 %v519, 32
    %v578 = vpop.permute.xlu0 %577
    %v580 = vadd.f32 %v446, %v578
    %v581 = vxor.u32 %v580, 2147483648
    %v582 = vmul.f32 %v581, 1.442695
    %v583 = vpow.pop %v582
    %v584 = vadd.f32 %v583, 1.0
    %v585 = vrcp.pop %v584
    %v586 = vmul.f32 %v584, %v585
    %v587 = vsub.f32 1.0, %v586
    %v588 = vmul.f32 %v585, %v587
    %v589 = vadd.f32 %v585, %v588
    %vm590 = vweird.f32 %v584
    %vm591 = vweird.f32 %v585
    %vm592 = vmor %vm590, %vm591
    %v593 = vsel %vm592, %v585, %v589
    %v594 = vand.u32 2147483647, %v584
    %vm595 = vcmp.eq.f32.partialorder %v594, 8.507059e+37
    %v596 = vand.u32 %v584, 2147483648
    %v597 = vor.u32 1.1754944e-38, %v596
    %v598 = vsel %vm595, %v597, %v593
    %v599 = vmul.f32 1.0, %v598
    %v600 = vmul.f32 %v575, %v554
    %602 = vrot.lane.b32.xlu0 %v600, 64
    %v603 = vpop.permute.xlu0 %602
    %v605 = vadd.f32 %v446, %v603
    %v606 = vtanh.pop %v605
    %v607 = vsub.f32 1.0, %v599
    %609 = vrot.lane.b32.xlu0 %v606, 96
    %v610 = vpop.permute.xlu0 %609
    %v612 = vmul.f32 %v607, %v610
    %v613 = vmul.f32 %v599, 0.0
    %v614 = vadd.f32 %v612, %v613
    %616 = vrot.lane.b32.xlu0 %v614, 96
    %v617 = vpop.permute.xlu0 %616
    %v618 = vsel %vm124, %v617, 0
    %620 = vmatpush.msra.mxu0 0.0
    %621 = vmatpush.msra.mxu0 0.0
    %622 = vmatpush.msra.mxu0 0.0
    %623 = vmatpush.msra.mxu0 0.0
    %624 = vmatpush.msra.mxu0 0.0
    %625 = vmatpush.msra.mxu0 0.0
    %626 = vmatpush.msra.mxu0 0.0
    %627 = vmatpush.msra.mxu0 0.0
    %628 = vmatpush.msra.mxu0 0.0
    %629 = vmatpush.msra.mxu0 0.0
    %630 = vmatpush.msra.mxu0 0.0
    %631 = vmatpush.msra.mxu0 0.0
    %632 = vmatpush.msra.mxu0 %v454
    %633 = vmatpush.msra.mxu0 %v453
    %634 = vmatpush.msra.mxu0 %v452
    %635 = vmatpush.msra.mxu0 %v451
    %636 = vmatmul.f32.gmra.mxu0 %v618
    %v637 = vpop.f32.mrf.mxu0
    %v638 = vadd.f32 %v457, %v637
    %639 = vdwg.mxu0
    %640 = vmatpush.msra.mxu0 0.0
    %641 = vmatpush.msra.mxu0 0.0
    %642 = vmatpush.msra.mxu0 0.0
    %643 = vmatpush.msra.mxu0 0.0
    %644 = vmatpush.msra.mxu0 0.0
    %645 = vmatpush.msra.mxu0 0.0
    %646 = vmatpush.msra.mxu0 0.0
    %647 = vmatpush.msra.mxu0 0.0
    %648 = vmatpush.msra.mxu0 0.0
    %649 = vmatpush.msra.mxu0 0.0
    %650 = vmatpush.msra.mxu0 0.0
    %651 = vmatpush.msra.mxu0 0.0
    %652 = vmatpush.msra.mxu0 %v493
    %653 = vmatpush.msra.mxu0 %v491
    %654 = vmatpush.msra.mxu0 %v489
    %655 = vmatpush.msra.mxu0 %v487
    %656 = vmatmul.f32.gmra.mxu0 %v618
    %v657 = vpop.f32.mrf.mxu0
    %v658 = vadd.f32 %v499, %v657
    %659 = vdwg.mxu0
    %660 = vmatpush.msra.mxu0 0.0
    %661 = vmatpush.msra.mxu0 0.0
    %662 = vmatpush.msra.mxu0 0.0
    %663 = vmatpush.msra.mxu0 0.0
    %664 = vmatpush.msra.mxu0 0.0
    %665 = vmatpush.msra.mxu0 0.0
    %666 = vmatpush.msra.mxu0 0.0
    %667 = vmatpush.msra.mxu0 0.0
    %668 = vmatpush.msra.mxu0 0.0
    %669 = vmatpush.msra.mxu0 0.0
    %670 = vmatpush.msra.mxu0 0.0
    %671 = vmatpush.msra.mxu0 0.0
    %672 = vmatpush.msra.mxu0 %v528
    %673 = vmatpush.msra.mxu0 %v526
    %674 = vmatpush.msra.mxu0 %v524
    %675 = vmatpush.msra.mxu0 %v522
    %676 = vmatmul.f32.gmra.mxu0 %v618
    %v677 = vpop.f32.mrf.mxu0
    %v678 = vadd.f32 %v534, %v677
    %679 = vdwg.mxu0
    %v681 = vrot.slane %v638, 6
    %v683 = vadd.f32 %v446, %v681
    %v684 = vxor.u32 %v683, 2147483648
    %v685 = vmul.f32 %v684, 1.442695
    %v686 = vpow.pop %v685
    %v687 = vadd.f32 %v686, 1.0
    %v688 = vrcp.pop %v687
    %v689 = vmul.f32 %v687, %v688
    %v690 = vsub.f32 1.0, %v689
    %v691 = vmul.f32 %v688, %v690
    %v692 = vadd.f32 %v688, %v691
    %vm693 = vweird.f32 %v687
    %vm694 = vweird.f32 %v688
    %vm695 = vmor %vm693, %vm694
    %v696 = vsel %vm695, %v688, %v692
    %v697 = vand.u32 2147483647, %v687
    %vm698 = vcmp.eq.f32.partialorder %v697, 8.507059e+37
    %v699 = vand.u32 %v687, 2147483648
    %v700 = vor.u32 1.1754944e-38, %v699
    %v701 = vsel %vm698, %v700, %v696
    %v702 = vmul.f32 1.0, %v701
    %v704 = vrot.slane %v658, 6
    %705 = vrot.lane.b32.xlu0 %v704, 32
    %v706 = vpop.permute.xlu0 %705
    %v708 = vadd.f32 %v446, %v706
    %v709 = vxor.u32 %v708, 2147483648
    %v710 = vmul.f32 %v709, 1.442695
    %v711 = vpow.pop %v710
    %v712 = vadd.f32 %v711, 1.0
    %v713 = vrcp.pop %v712
    %v714 = vmul.f32 %v712, %v713
    %v715 = vsub.f32 1.0, %v714
    %v716 = vmul.f32 %v713, %v715
    %v717 = vadd.f32 %v713, %v716
    %vm718 = vweird.f32 %v712
    %vm719 = vweird.f32 %v713
    %vm720 = vmor %vm718, %vm719
    %v721 = vsel %vm720, %v713, %v717
    %v722 = vand.u32 2147483647, %v712
    %vm723 = vcmp.eq.f32.partialorder %v722, 8.507059e+37
    %v724 = vand.u32 %v712, 2147483648
    %v725 = vor.u32 1.1754944e-38, %v724
    %v726 = vsel %vm723, %v725, %v721
    %v727 = vmul.f32 1.0, %v726
    %v729 = vrot.slane %v678, 6
    %v731 = vmul.f32 %v702, %v729
    %733 = vrot.lane.b32.xlu0 %v731, 64
    %v734 = vpop.permute.xlu0 %733
    %v736 = vadd.f32 %v446, %v734
    %v737 = vtanh.pop %v736
    %v738 = vsub.f32 1.0, %v727
    %740 = vrot.lane.b32.xlu0 %v737, 96
    %v741 = vpop.permute.xlu0 %740
    %v743 = vmul.f32 %v738, %v741
    %v744 = vrot.slane %v614, 6
    %v746 = vmul.f32 %v727, %v744
    %v747 = vadd.f32 %v743, %v746
    %v749 = vrot.slane %v747, 2
    %750 = vrot.lane.b32.xlu0 %v749, 96
    %v751 = vpop.permute.xlu0 %750
    %v752 = vsel %vm124, %v751, 0
    %754 = vmatpush.msra.mxu0 0.0
    %755 = vmatpush.msra.mxu0 0.0
    %756 = vmatpush.msra.mxu0 0.0
    %757 = vmatpush.msra.mxu0 0.0
    %758 = vmatpush.msra.mxu0 0.0
    %759 = vmatpush.msra.mxu0 0.0
    %760 = vmatpush.msra.mxu0 0.0
    %761 = vmatpush.msra.mxu0 0.0
    %762 = vmatpush.msra.mxu0 0.0
    %763 = vmatpush.msra.mxu0 0.0
    %764 = vmatpush.msra.mxu0 0.0
    %765 = vmatpush.msra.mxu0 0.0
    %766 = vmatpush.msra.mxu0 %v454
    %767 = vmatpush.msra.mxu0 %v453
    %768 = vmatpush.msra.mxu0 %v452
    %769 = vmatpush.msra.mxu0 %v451
    %770 = vmatmul.f32.gmra.mxu0 %v752
    %v771 = vpop.f32.mrf.mxu0
    %v772 = vadd.f32 %v457, %v771
    %773 = vdwg.mxu0
    %774 = vmatpush.msra.mxu0 0.0
    %775 = vmatpush.msra.mxu0 0.0
    %776 = vmatpush.msra.mxu0 0.0
    %777 = vmatpush.msra.mxu0 0.0
    %778 = vmatpush.msra.mxu0 0.0
    %779 = vmatpush.msra.mxu0 0.0
    %780 = vmatpush.msra.mxu0 0.0
    %781 = vmatpush.msra.mxu0 0.0
    %782 = vmatpush.msra.mxu0 0.0
    %783 = vmatpush.msra.mxu0 0.0
    %784 = vmatpush.msra.mxu0 0.0
    %785 = vmatpush.msra.mxu0 0.0
    %786 = vmatpush.msra.mxu0 %v493
    %787 = vmatpush.msra.mxu0 %v491
    %788 = vmatpush.msra.mxu0 %v489
    %789 = vmatpush.msra.mxu0 %v487
    %790 = vmatmul.f32.gmra.mxu0 %v752
    %v791 = vpop.f32.mrf.mxu0
    %v792 = vadd.f32 %v499, %v791
    %793 = vdwg.mxu0
    %794 = vmatpush.msra.mxu0 0.0
    %795 = vmatpush.msra.mxu0 0.0
    %796 = vmatpush.msra.mxu0 0.0
    %797 = vmatpush.msra.mxu0 0.0
    %798 = vmatpush.msra.mxu0 0.0
    %799 = vmatpush.msra.mxu0 0.0
    %800 = vmatpush.msra.mxu0 0.0
    %801 = vmatpush.msra.mxu0 0.0
    %802 = vmatpush.msra.mxu0 0.0
    %803 = vmatpush.msra.mxu0 0.0
    %804 = vmatpush.msra.mxu0 0.0
    %805 = vmatpush.msra.mxu0 0.0
    %806 = vmatpush.msra.mxu0 %v528
    %807 = vmatpush.msra.mxu0 %v526
    %808 = vmatpush.msra.mxu0 %v524
    %809 = vmatpush.msra.mxu0 %v522
    %810 = vmatmul.f32.gmra.mxu0 %v752
    %v811 = vpop.f32.mrf.mxu0
    %v812 = vadd.f32 %v534, %v811
    %813 = vdwg.mxu0
    %v815 = vrot.slane %v772, 4
    %v817 = vadd.f32 %v446, %v815
    %v818 = vxor.u32 %v817, 2147483648
    %v819 = vmul.f32 %v818, 1.442695
    %v820 = vpow.pop %v819
    %v821 = vadd.f32 %v820, 1.0
    %v822 = vrcp.pop %v821
    %v823 = vmul.f32 %v821, %v822
    %v824 = vsub.f32 1.0, %v823
    %v825 = vmul.f32 %v822, %v824
    %v826 = vadd.f32 %v822, %v825
    %vm827 = vweird.f32 %v821
    %vm828 = vweird.f32 %v822
    %vm829 = vmor %vm827, %vm828
    %v830 = vsel %vm829, %v822, %v826
    %v831 = vand.u32 2147483647, %v821
    %vm832 = vcmp.eq.f32.partialorder %v831, 8.507059e+37
    %v833 = vand.u32 %v821, 2147483648
    %v834 = vor.u32 1.1754944e-38, %v833
    %v835 = vsel %vm832, %v834, %v830
    %v836 = vmul.f32 1.0, %v835
    %v838 = vrot.slane %v792, 4
    %839 = vrot.lane.b32.xlu0 %v838, 32
    %v840 = vpop.permute.xlu0 %839
    %v842 = vadd.f32 %v446, %v840
    %v843 = vxor.u32 %v842, 2147483648
    %v844 = vmul.f32 %v843, 1.442695
    %v845 = vpow.pop %v844
    %v846 = vadd.f32 %v845, 1.0
    %v847 = vrcp.pop %v846
    %v848 = vmul.f32 %v846, %v847
    %v849 = vsub.f32 1.0, %v848
    %v850 = vmul.f32 %v847, %v849
    %v851 = vadd.f32 %v847, %v850
    %vm852 = vweird.f32 %v846
    %vm853 = vweird.f32 %v847
    %vm854 = vmor %vm852, %vm853
    %v855 = vsel %vm854, %v847, %v851
    %v856 = vand.u32 2147483647, %v846
    %vm857 = vcmp.eq.f32.partialorder %v856, 8.507059e+37
    %v858 = vand.u32 %v846, 2147483648
    %v859 = vor.u32 1.1754944e-38, %v858
    %v860 = vsel %vm857, %v859, %v855
    %v861 = vmul.f32 1.0, %v860
    %v863 = vrot.slane %v812, 4
    %v865 = vmul.f32 %v836, %v863
    %867 = vrot.lane.b32.xlu0 %v865, 64
    %v868 = vpop.permute.xlu0 %867
    %v870 = vadd.f32 %v446, %v868
    %v871 = vtanh.pop %v870
    %v872 = vsub.f32 1.0, %v861
    %874 = vrot.lane.b32.xlu0 %v871, 96
    %v875 = vpop.permute.xlu0 %874
    %v877 = vmul.f32 %v872, %v875
    %v878 = vrot.slane %v747, 6
    %v880 = vmul.f32 %v861, %v878
    %v881 = vadd.f32 %v877, %v880
    %v883 = vrot.slane %v881, 4
    %884 = vrot.lane.b32.xlu0 %v883, 96
    %v885 = vpop.permute.xlu0 %884
    %v886 = vsel %vm124, %v885, 0
    %888 = vmatpush.msra.mxu0 0.0
    %889 = vmatpush.msra.mxu0 0.0
    %890 = vmatpush.msra.mxu0 0.0
    %891 = vmatpush.msra.mxu0 0.0
    %892 = vmatpush.msra.mxu0 0.0
    %893 = vmatpush.msra.mxu0 0.0
    %894 = vmatpush.msra.mxu0 0.0
    %895 = vmatpush.msra.mxu0 0.0
    %896 = vmatpush.msra.mxu0 0.0
    %897 = vmatpush.msra.mxu0 0.0
    %898 = vmatpush.msra.mxu0 0.0
    %899 = vmatpush.msra.mxu0 0.0
    %900 = vmatpush.msra.mxu0 %v454
    %901 = vmatpush.msra.mxu0 %v453
    %902 = vmatpush.msra.mxu0 %v452
    %903 = vmatpush.msra.mxu0 %v451
    %904 = vmatmul.f32.gmra.mxu0 %v886
    %v905 = vpop.f32.mrf.mxu0
    %v906 = vadd.f32 %v457, %v905
    %907 = vdwg.mxu0
    %908 = vmatpush.msra.mxu0 0.0
    %909 = vmatpush.msra.mxu0 0.0
    %910 = vmatpush.msra.mxu0 0.0
    %911 = vmatpush.msra.mxu0 0.0
    %912 = vmatpush.msra.mxu0 0.0
    %913 = vmatpush.msra.mxu0 0.0
    %914 = vmatpush.msra.mxu0 0.0
    %915 = vmatpush.msra.mxu0 0.0
    %916 = vmatpush.msra.mxu0 0.0
    %917 = vmatpush.msra.mxu0 0.0
    %918 = vmatpush.msra.mxu0 0.0
    %919 = vmatpush.msra.mxu0 0.0
    %920 = vmatpush.msra.mxu0 %v493
    %921 = vmatpush.msra.mxu0 %v491
    %922 = vmatpush.msra.mxu0 %v489
    %923 = vmatpush.msra.mxu0 %v487
    %924 = vmatmul.f32.gmra.mxu0 %v886
    %v925 = vpop.f32.mrf.mxu0
    %v926 = vadd.f32 %v499, %v925
    %927 = vdwg.mxu0
    %928 = vmatpush.msra.mxu0 0.0
    %929 = vmatpush.msra.mxu0 0.0
    %930 = vmatpush.msra.mxu0 0.0
    %931 = vmatpush.msra.mxu0 0.0
    %932 = vmatpush.msra.mxu0 0.0
    %933 = vmatpush.msra.mxu0 0.0
    %934 = vmatpush.msra.mxu0 0.0
    %935 = vmatpush.msra.mxu0 0.0
    %936 = vmatpush.msra.mxu0 0.0
    %937 = vmatpush.msra.mxu0 0.0
    %938 = vmatpush.msra.mxu0 0.0
    %939 = vmatpush.msra.mxu0 0.0
    %940 = vmatpush.msra.mxu0 %v528
    %941 = vmatpush.msra.mxu0 %v526
    %942 = vmatpush.msra.mxu0 %v524
    %943 = vmatpush.msra.mxu0 %v522
    %944 = vmatmul.f32.gmra.mxu0 %v886
    %v945 = vpop.f32.mrf.mxu0
    %v946 = vadd.f32 %v534, %v945
    %947 = vdwg.mxu0
    %v949 = vrot.slane %v906, 2
    %v951 = vadd.f32 %v446, %v949
    %v952 = vxor.u32 %v951, 2147483648
    %v953 = vmul.f32 %v952, 1.442695
    %v954 = vpow.pop %v953
    %v955 = vadd.f32 %v954, 1.0
    %v956 = vrcp.pop %v955
    %v957 = vmul.f32 %v955, %v956
    %v958 = vsub.f32 1.0, %v957
    %v959 = vmul.f32 %v956, %v958
    %v960 = vadd.f32 %v956, %v959
    %vm961 = vweird.f32 %v955
    %vm962 = vweird.f32 %v956
    %vm963 = vmor %vm961, %vm962
    %v964 = vsel %vm963, %v956, %v960
    %v965 = vand.u32 2147483647, %v955
    %vm966 = vcmp.eq.f32.partialorder %v965, 8.507059e+37
    %v967 = vand.u32 %v955, 2147483648
    %v968 = vor.u32 1.1754944e-38, %v967
    %v969 = vsel %vm966, %v968, %v964
    %v970 = vmul.f32 1.0, %v969
    %v972 = vrot.slane %v926, 2
    %973 = vrot.lane.b32.xlu0 %v972, 32
    %v974 = vpop.permute.xlu0 %973
    %v976 = vadd.f32 %v446, %v974
    %v977 = vxor.u32 %v976, 2147483648
    %v978 = vmul.f32 %v977, 1.442695
    %v979 = vpow.pop %v978
    %v980 = vadd.f32 %v979, 1.0
    %v981 = vrcp.pop %v980
    %v982 = vmul.f32 %v980, %v981
    %v983 = vsub.f32 1.0, %v982
    %v984 = vmul.f32 %v981, %v983
    %v985 = vadd.f32 %v981, %v984
    %vm986 = vweird.f32 %v980
    %vm987 = vweird.f32 %v981
    %vm988 = vmor %vm986, %vm987
    %v989 = vsel %vm988, %v981, %v985
    %v990 = vand.u32 2147483647, %v980
    %vm991 = vcmp.eq.f32.partialorder %v990, 8.507059e+37
    %v992 = vand.u32 %v980, 2147483648
    %v993 = vor.u32 1.1754944e-38, %v992
    %v994 = vsel %vm991, %v993, %v989
    %v995 = vmul.f32 1.0, %v994
    %v997 = vrot.slane %v946, 2
    %v999 = vmul.f32 %v970, %v997
    %1001 = vrot.lane.b32.xlu0 %v999, 64
    %v1002 = vpop.permute.xlu0 %1001
    %v1004 = vadd.f32 %v446, %v1002
    %v1005 = vtanh.pop %v1004
    %v1006 = vsub.f32 1.0, %v995
    %1008 = vrot.lane.b32.xlu0 %v1005, 96
    %v1009 = vpop.permute.xlu0 %1008
    %v1011 = vmul.f32 %v1006, %v1009
    %v1012 = vrot.slane %v881, 6
    %v1014 = vmul.f32 %v995, %v1012
    %v1015 = vadd.f32 %v1011, %v1014
    %v1017 = vrot.slane %v1015, 6
    %1018 = vrot.lane.b32.xlu0 %v1017, 96
    %v1019 = vpop.permute.xlu0 %1018
    %v1020 = vsel %vm124, %v1019, 0
    %1022 = vmatpush.msra.mxu0 0.0
    %1023 = vmatpush.msra.mxu0 0.0
    %1024 = vmatpush.msra.mxu0 0.0
    %1025 = vmatpush.msra.mxu0 0.0
    %1026 = vmatpush.msra.mxu0 0.0
    %1027 = vmatpush.msra.mxu0 0.0
    %1028 = vmatpush.msra.mxu0 0.0
    %1029 = vmatpush.msra.mxu0 0.0
    %1030 = vmatpush.msra.mxu0 0.0
    %1031 = vmatpush.msra.mxu0 0.0
    %1032 = vmatpush.msra.mxu0 0.0
    %1033 = vmatpush.msra.mxu0 0.0
    %1034 = vmatpush.msra.mxu0 %v454
    %1035 = vmatpush.msra.mxu0 %v453
    %1036 = vmatpush.msra.mxu0 %v452
    %1037 = vmatpush.msra.mxu0 %v451
    %1038 = vmatmul.f32.gmra.mxu0 %v1020
    %v1039 = vpop.f32.mrf.mxu0
    %v1040 = vadd.f32 %v457, %v1039
    %1041 = vdwg.mxu0
    %1042 = vmatpush.msra.mxu0 0.0
    %1043 = vmatpush.msra.mxu0 0.0
    %1044 = vmatpush.msra.mxu0 0.0
    %1045 = vmatpush.msra.mxu0 0.0
    %1046 = vmatpush.msra.mxu0 0.0
    %1047 = vmatpush.msra.mxu0 0.0
    %1048 = vmatpush.msra.mxu0 0.0
    %1049 = vmatpush.msra.mxu0 0.0
    %1050 = vmatpush.msra.mxu0 0.0
    %1051 = vmatpush.msra.mxu0 0.0
    %1052 = vmatpush.msra.mxu0 0.0
    %1053 = vmatpush.msra.mxu0 0.0
    %1054 = vmatpush.msra.mxu0 %v493
    %1055 = vmatpush.msra.mxu0 %v491
    %1056 = vmatpush.msra.mxu0 %v489
    %1057 = vmatpush.msra.mxu0 %v487
    %1058 = vmatmul.f32.gmra.mxu0 %v1020
    %v1059 = vpop.f32.mrf.mxu0
    %v1060 = vadd.f32 %v499, %v1059
    %1061 = vdwg.mxu0
    %1062 = vmatpush.msra.mxu0 0.0
    %1063 = vmatpush.msra.mxu0 0.0
    %1064 = vmatpush.msra.mxu0 0.0
    %1065 = vmatpush.msra.mxu0 0.0
    %1066 = vmatpush.msra.mxu0 0.0
    %1067 = vmatpush.msra.mxu0 0.0
    %1068 = vmatpush.msra.mxu0 0.0
    %1069 = vmatpush.msra.mxu0 0.0
    %1070 = vmatpush.msra.mxu0 0.0
    %1071 = vmatpush.msra.mxu0 0.0
    %1072 = vmatpush.msra.mxu0 0.0
    %1073 = vmatpush.msra.mxu0 0.0
    %1074 = vmatpush.msra.mxu0 %v528
    %1075 = vmatpush.msra.mxu0 %v526
    %1076 = vmatpush.msra.mxu0 %v524
    %1077 = vmatpush.msra.mxu0 %v522
    %1078 = vmatmul.f32.gmra.mxu0 %v1020
    %v1079 = vpop.f32.mrf.mxu0
    %v1080 = vadd.f32 %v534, %v1079
    %1081 = vdwg.mxu0
    %v1082 = vadd.f32 %v449, %v1040
    %v1083 = vxor.u32 %v1082, 2147483648
    %v1084 = vmul.f32 %v1083, 1.442695
    %v1085 = vpow.pop %v1084
    %v1086 = vadd.f32 %v1085, 1.0
    %v1087 = vrcp.pop %v1086
    %v1088 = vmul.f32 %v1086, %v1087
    %v1089 = vsub.f32 1.0, %v1088
    %v1090 = vmul.f32 %v1087, %v1089
    %v1091 = vadd.f32 %v1087, %v1090
    %vm1092 = vweird.f32 %v1086
    %vm1093 = vweird.f32 %v1087
    %vm1094 = vmor %vm1092, %vm1093
    %v1095 = vsel %vm1094, %v1087, %v1091
    %v1096 = vand.u32 2147483647, %v1086
    %vm1097 = vcmp.eq.f32.partialorder %v1096, 8.507059e+37
    %v1098 = vand.u32 %v1086, 2147483648
    %v1099 = vor.u32 1.1754944e-38, %v1098
    %v1100 = vsel %vm1097, %v1099, %v1095
    %v1101 = vmul.f32 1.0, %v1100
    %1103 = vrot.lane.b32.xlu0 %v1060, 32
    %v1104 = vpop.permute.xlu0 %1103
    %v1106 = vadd.f32 %v449, %v1104
    %v1107 = vxor.u32 %v1106, 2147483648
    %v1108 = vmul.f32 %v1107, 1.442695
    %v1109 = vpow.pop %v1108
    %v1110 = vadd.f32 %v1109, 1.0
    %v1111 = vrcp.pop %v1110
    %v1112 = vmul.f32 %v1110, %v1111
    %v1113 = vsub.f32 1.0, %v1112
    %v1114 = vmul.f32 %v1111, %v1113
    %v1115 = vadd.f32 %v1111, %v1114
    %vm1116 = vweird.f32 %v1110
    %vm1117 = vweird.f32 %v1111
    %vm1118 = vmor %vm1116, %vm1117
    %v1119 = vsel %vm1118, %v1111, %v1115
    %v1120 = vand.u32 2147483647, %v1110
    %vm1121 = vcmp.eq.f32.partialorder %v1120, 8.507059e+37
    %v1122 = vand.u32 %v1110, 2147483648
    %v1123 = vor.u32 1.1754944e-38, %v1122
    %v1124 = vsel %vm1121, %v1123, %v1119
    %v1125 = vmul.f32 1.0, %v1124
    %v1126 = vmul.f32 %v1101, %v1080
    %1128 = vrot.lane.b32.xlu0 %v1126, 64
    %v1129 = vpop.permute.xlu0 %1128
    %v1131 = vadd.f32 %v449, %v1129
    %v1132 = vtanh.pop %v1131
    %v1133 = vsub.f32 1.0, %v1125
    %1135 = vrot.lane.b32.xlu0 %v1132, 96
    %v1136 = vpop.permute.xlu0 %1135
    %v1138 = vmul.f32 %v1133, %v1136
    %v1140 = vmul.f32 %v1125, %v1017
    %v1141 = vadd.f32 %v1138, %v1140
    %1143 = vrot.lane.b32.xlu0 %v1141, 96
    %v1144 = vpop.permute.xlu0 %1143
    %v1145 = vsel %vm124, %v1144, 0
    %1147 = vmatpush.msra.mxu0 0.0
    %1148 = vmatpush.msra.mxu0 0.0
    %1149 = vmatpush.msra.mxu0 0.0
    %1150 = vmatpush.msra.mxu0 0.0
    %1151 = vmatpush.msra.mxu0 0.0
    %1152 = vmatpush.msra.mxu0 0.0
    %1153 = vmatpush.msra.mxu0 0.0
    %1154 = vmatpush.msra.mxu0 0.0
    %1155 = vmatpush.msra.mxu0 0.0
    %1156 = vmatpush.msra.mxu0 0.0
    %1157 = vmatpush.msra.mxu0 0.0
    %1158 = vmatpush.msra.mxu0 0.0
    %1159 = vmatpush.msra.mxu0 %v454
    %1160 = vmatpush.msra.mxu0 %v453
    %1161 = vmatpush.msra.mxu0 %v452
    %1162 = vmatpush.msra.mxu0 %v451
    %1163 = vmatmul.f32.gmra.mxu0 %v1145
    %v1164 = vpop.f32.mrf.mxu0
    %v1165 = vadd.f32 %v457, %v1164
    %1166 = vdwg.mxu0
    %1167 = vmatpush.msra.mxu0 0.0
    %1168 = vmatpush.msra.mxu0 0.0
    %1169 = vmatpush.msra.mxu0 0.0
    %1170 = vmatpush.msra.mxu0 0.0
    %1171 = vmatpush.msra.mxu0 0.0
    %1172 = vmatpush.msra.mxu0 0.0
    %1173 = vmatpush.msra.mxu0 0.0
    %1174 = vmatpush.msra.mxu0 0.0
    %1175 = vmatpush.msra.mxu0 0.0
    %1176 = vmatpush.msra.mxu0 0.0
    %1177 = vmatpush.msra.mxu0 0.0
    %1178 = vmatpush.msra.mxu0 0.0
    %1179 = vmatpush.msra.mxu0 %v493
    %1180 = vmatpush.msra.mxu0 %v491
    %1181 = vmatpush.msra.mxu0 %v489
    %1182 = vmatpush.msra.mxu0 %v487
    %1183 = vmatmul.f32.gmra.mxu0 %v1145
    %v1184 = vpop.f32.mrf.mxu0
    %v1185 = vadd.f32 %v499, %v1184
    %1186 = vdwg.mxu0
    %1187 = vmatpush.msra.mxu0 0.0
    %1188 = vmatpush.msra.mxu0 0.0
    %1189 = vmatpush.msra.mxu0 0.0
    %1190 = vmatpush.msra.mxu0 0.0
    %1191 = vmatpush.msra.mxu0 0.0
    %1192 = vmatpush.msra.mxu0 0.0
    %1193 = vmatpush.msra.mxu0 0.0
    %1194 = vmatpush.msra.mxu0 0.0
    %1195 = vmatpush.msra.mxu0 0.0
    %1196 = vmatpush.msra.mxu0 0.0
    %1197 = vmatpush.msra.mxu0 0.0
    %1198 = vmatpush.msra.mxu0 0.0
    %1199 = vmatpush.msra.mxu0 %v528
    %1200 = vmatpush.msra.mxu0 %v526
    %1201 = vmatpush.msra.mxu0 %v524
    %1202 = vmatpush.msra.mxu0 %v522
    %1203 = vmatmul.f32.gmra.mxu0 %v1145
    %v1204 = vpop.f32.mrf.mxu0
    %v1205 = vadd.f32 %v534, %v1204
    %1206 = vdwg.mxu0
    %v1208 = vrot.slane %v1165, 6
    %v1210 = vadd.f32 %v449, %v1208
    %v1211 = vxor.u32 %v1210, 2147483648
    %v1212 = vmul.f32 %v1211, 1.442695
    %v1213 = vpow.pop %v1212
    %v1214 = vadd.f32 %v1213, 1.0
    %v1215 = vrcp.pop %v1214
    %v1216 = vmul.f32 %v1214, %v1215
    %v1217 = vsub.f32 1.0, %v1216
    %v1218 = vmul.f32 %v1215, %v1217
    %v1219 = vadd.f32 %v1215, %v1218
    %vm1220 = vweird.f32 %v1214
    %vm1221 = vweird.f32 %v1215
    %vm1222 = vmor %vm1220, %vm1221
    %v1223 = vsel %vm1222, %v1215, %v1219
    %v1224 = vand.u32 2147483647, %v1214
    %vm1225 = vcmp.eq.f32.partialorder %v1224, 8.507059e+37
    %v1226 = vand.u32 %v1214, 2147483648
    %v1227 = vor.u32 1.1754944e-38, %v1226
    %v1228 = vsel %vm1225, %v1227, %v1223
    %v1229 = vmul.f32 1.0, %v1228
    %v1231 = vrot.slane %v1185, 6
    %1232 = vrot.lane.b32.xlu0 %v1231, 32
    %v1233 = vpop.permute.xlu0 %1232
    %v1235 = vadd.f32 %v449, %v1233
    %v1236 = vxor.u32 %v1235, 2147483648
    %v1237 = vmul.f32 %v1236, 1.442695
    %v1238 = vpow.pop %v1237
    %v1239 = vadd.f32 %v1238, 1.0
    %v1240 = vrcp.pop %v1239
    %v1241 = vmul.f32 %v1239, %v1240
    %v1242 = vsub.f32 1.0, %v1241
    %v1243 = vmul.f32 %v1240, %v1242
    %v1244 = vadd.f32 %v1240, %v1243
    %vm1245 = vweird.f32 %v1239
    %vm1246 = vweird.f32 %v1240
    %vm1247 = vmor %vm1245, %vm1246
    %v1248 = vsel %vm1247, %v1240, %v1244
    %v1249 = vand.u32 2147483647, %v1239
    %vm1250 = vcmp.eq.f32.partialorder %v1249, 8.507059e+37
    %v1251 = vand.u32 %v1239, 2147483648
    %v1252 = vor.u32 1.1754944e-38, %v1251
    %v1253 = vsel %vm1250, %v1252, %v1248
    %v1254 = vmul.f32 1.0, %v1253
    %v1256 = vrot.slane %v1205, 6
    %v1258 = vmul.f32 %v1229, %v1256
    %1260 = vrot.lane.b32.xlu0 %v1258, 64
    %v1261 = vpop.permute.xlu0 %1260
    %v1263 = vadd.f32 %v449, %v1261
    %v1264 = vtanh.pop %v1263
    %v1265 = vsub.f32 1.0, %v1254
    %1267 = vrot.lane.b32.xlu0 %v1264, 96
    %v1268 = vpop.permute.xlu0 %1267
    %v1270 = vmul.f32 %v1265, %v1268
    %v1271 = vrot.slane %v1141, 6
    %v1273 = vmul.f32 %v1254, %v1271
    %v1274 = vadd.f32 %v1270, %v1273
    %v1276 = vrot.slane %v1274, 2
    %1277 = vrot.lane.b32.xlu0 %v1276, 96
    %v1278 = vpop.permute.xlu0 %1277
    %v1279 = vsel %vm124, %v1278, 0
    %1281 = vmatpush.msra.mxu0 0.0
    %1282 = vmatpush.msra.mxu0 0.0
    %1283 = vmatpush.msra.mxu0 0.0
    %1284 = vmatpush.msra.mxu0 0.0
    %1285 = vmatpush.msra.mxu0 0.0
    %1286 = vmatpush.msra.mxu0 0.0
    %1287 = vmatpush.msra.mxu0 0.0
    %1288 = vmatpush.msra.mxu0 0.0
    %1289 = vmatpush.msra.mxu0 0.0
    %1290 = vmatpush.msra.mxu0 0.0
    %1291 = vmatpush.msra.mxu0 0.0
    %1292 = vmatpush.msra.mxu0 0.0
    %1293 = vmatpush.msra.mxu0 %v454
    %1294 = vmatpush.msra.mxu0 %v453
    %1295 = vmatpush.msra.mxu0 %v452
    %1296 = vmatpush.msra.mxu0 %v451
    %1297 = vmatmul.f32.gmra.mxu0 %v1279
    %v1298 = vpop.f32.mrf.mxu0
    %v1299 = vadd.f32 %v457, %v1298
    %1300 = vdwg.mxu0
    %1301 = vmatpush.msra.mxu0 0.0
    %1302 = vmatpush.msra.mxu0 0.0
    %1303 = vmatpush.msra.mxu0 0.0
    %1304 = vmatpush.msra.mxu0 0.0
    %1305 = vmatpush.msra.mxu0 0.0
    %1306 = vmatpush.msra.mxu0 0.0
    %1307 = vmatpush.msra.mxu0 0.0
    %1308 = vmatpush.msra.mxu0 0.0
    %1309 = vmatpush.msra.mxu0 0.0
    %1310 = vmatpush.msra.mxu0 0.0
    %1311 = vmatpush.msra.mxu0 0.0
    %1312 = vmatpush.msra.mxu0 0.0
    %1313 = vmatpush.msra.mxu0 %v493
    %1314 = vmatpush.msra.mxu0 %v491
    %1315 = vmatpush.msra.mxu0 %v489
    %1316 = vmatpush.msra.mxu0 %v487
    %1317 = vmatmul.f32.gmra.mxu0 %v1279
    %v1318 = vpop.f32.mrf.mxu0
    %v1319 = vadd.f32 %v499, %v1318
    %1320 = vdwg.mxu0
    %1321 = vmatpush.msra.mxu0 0.0
    %1322 = vmatpush.msra.mxu0 0.0
    %1323 = vmatpush.msra.mxu0 0.0
    %1324 = vmatpush.msra.mxu0 0.0
    %1325 = vmatpush.msra.mxu0 0.0
    %1326 = vmatpush.msra.mxu0 0.0
    %1327 = vmatpush.msra.mxu0 0.0
    %1328 = vmatpush.msra.mxu0 0.0
    %1329 = vmatpush.msra.mxu0 0.0
    %1330 = vmatpush.msra.mxu0 0.0
    %1331 = vmatpush.msra.mxu0 0.0
    %1332 = vmatpush.msra.mxu0 0.0
    %1333 = vmatpush.msra.mxu0 %v528
    %1334 = vmatpush.msra.mxu0 %v526
    %1335 = vmatpush.msra.mxu0 %v524
    %1336 = vmatpush.msra.mxu0 %v522
    %1337 = vmatmul.f32.gmra.mxu0 %v1279
    %v1338 = vpop.f32.mrf.mxu0
    %v1339 = vadd.f32 %v534, %v1338
    %1340 = vdwg.mxu0
    %v1342 = vrot.slane %v1299, 4
    %v1344 = vadd.f32 %v449, %v1342
    %v1345 = vxor.u32 %v1344, 2147483648
    %v1346 = vmul.f32 %v1345, 1.442695
    %v1347 = vpow.pop %v1346
    %v1348 = vadd.f32 %v1347, 1.0
    %v1349 = vrcp.pop %v1348
    %v1350 = vmul.f32 %v1348, %v1349
    %v1351 = vsub.f32 1.0, %v1350
    %v1352 = vmul.f32 %v1349, %v1351
    %v1353 = vadd.f32 %v1349, %v1352
    %vm1354 = vweird.f32 %v1348
    %vm1355 = vweird.f32 %v1349
    %vm1356 = vmor %vm1354, %vm1355
    %v1357 = vsel %vm1356, %v1349, %v1353
    %v1358 = vand.u32 2147483647, %v1348
    %vm1359 = vcmp.eq.f32.partialorder %v1358, 8.507059e+37
    %v1360 = vand.u32 %v1348, 2147483648
    %v1361 = vor.u32 1.1754944e-38, %v1360
    %v1362 = vsel %vm1359, %v1361, %v1357
    %v1363 = vmul.f32 1.0, %v1362
    %v1365 = vrot.slane %v1319, 4
    %1366 = vrot.lane.b32.xlu0 %v1365, 32
    %v1367 = vpop.permute.xlu0 %1366
    %v1369 = vadd.f32 %v449, %v1367
    %v1370 = vxor.u32 %v1369, 2147483648
    %v1371 = vmul.f32 %v1370, 1.442695
    %v1372 = vpow.pop %v1371
    %v1373 = vadd.f32 %v1372, 1.0
    %v1374 = vrcp.pop %v1373
    %v1375 = vmul.f32 %v1373, %v1374
    %v1376 = vsub.f32 1.0, %v1375
    %v1377 = vmul.f32 %v1374, %v1376
    %v1378 = vadd.f32 %v1374, %v1377
    %vm1379 = vweird.f32 %v1373
    %vm1380 = vweird.f32 %v1374
    %vm1381 = vmor %vm1379, %vm1380
    %v1382 = vsel %vm1381, %v1374, %v1378
    %v1383 = vand.u32 2147483647, %v1373
    %vm1384 = vcmp.eq.f32.partialorder %v1383, 8.507059e+37
    %v1385 = vand.u32 %v1373, 2147483648
    %v1386 = vor.u32 1.1754944e-38, %v1385
    %v1387 = vsel %vm1384, %v1386, %v1382
    %v1388 = vmul.f32 1.0, %v1387
    %v1390 = vrot.slane %v1339, 4
    %v1392 = vmul.f32 %v1363, %v1390
    %1394 = vrot.lane.b32.xlu0 %v1392, 64
    %v1395 = vpop.permute.xlu0 %1394
    %v1397 = vadd.f32 %v449, %v1395
    %v1398 = vtanh.pop %v1397
    %v1399 = vsub.f32 1.0, %v1388
    %1401 = vrot.lane.b32.xlu0 %v1398, 96
    %v1402 = vpop.permute.xlu0 %1401
    %v1404 = vmul.f32 %v1399, %v1402
    %v1405 = vrot.slane %v1274, 6
    %v1407 = vmul.f32 %v1388, %v1405
    %v1408 = vadd.f32 %v1404, %v1407
    %v1410 = vrot.slane %v1408, 4
    %1411 = vrot.lane.b32.xlu0 %v1410, 96
    %v1412 = vpop.permute.xlu0 %1411
    %v1413 = vsel %vm124, %v1412, 0
    %1415 = vmatpush.msra.mxu0 0.0
    %1416 = vmatpush.msra.mxu0 0.0
    %1417 = vmatpush.msra.mxu0 0.0
    %1418 = vmatpush.msra.mxu0 0.0
    %1419 = vmatpush.msra.mxu0 0.0
    %1420 = vmatpush.msra.mxu0 0.0
    %1421 = vmatpush.msra.mxu0 0.0
    %1422 = vmatpush.msra.mxu0 0.0
    %1423 = vmatpush.msra.mxu0 0.0
    %1424 = vmatpush.msra.mxu0 0.0
    %1425 = vmatpush.msra.mxu0 0.0
    %1426 = vmatpush.msra.mxu0 0.0
    %1427 = vmatpush.msra.mxu0 %v454
    %1428 = vmatpush.msra.mxu0 %v453
    %1429 = vmatpush.msra.mxu0 %v452
    %1430 = vmatpush.msra.mxu0 %v451
    %1431 = vmatmul.f32.gmra.mxu0 %v1413
    %v1432 = vpop.f32.mrf.mxu0
    %v1433 = vadd.f32 %v457, %v1432
    %1434 = vdwg.mxu0
    %1435 = vmatpush.msra.mxu0 0.0
    %1436 = vmatpush.msra.mxu0 0.0
    %1437 = vmatpush.msra.mxu0 0.0
    %1438 = vmatpush.msra.mxu0 0.0
    %1439 = vmatpush.msra.mxu0 0.0
    %1440 = vmatpush.msra.mxu0 0.0
    %1441 = vmatpush.msra.mxu0 0.0
    %1442 = vmatpush.msra.mxu0 0.0
    %1443 = vmatpush.msra.mxu0 0.0
    %1444 = vmatpush.msra.mxu0 0.0
    %1445 = vmatpush.msra.mxu0 0.0
    %1446 = vmatpush.msra.mxu0 0.0
    %1447 = vmatpush.msra.mxu0 %v493
    %1448 = vmatpush.msra.mxu0 %v491
    %1449 = vmatpush.msra.mxu0 %v489
    %1450 = vmatpush.msra.mxu0 %v487
    %1451 = vmatmul.f32.gmra.mxu0 %v1413
    %v1452 = vpop.f32.mrf.mxu0
    %v1453 = vadd.f32 %v499, %v1452
    %1454 = vdwg.mxu0
    %1455 = vmatpush.msra.mxu0 0.0
    %1456 = vmatpush.msra.mxu0 0.0
    %1457 = vmatpush.msra.mxu0 0.0
    %1458 = vmatpush.msra.mxu0 0.0
    %1459 = vmatpush.msra.mxu0 0.0
    %1460 = vmatpush.msra.mxu0 0.0
    %1461 = vmatpush.msra.mxu0 0.0
    %1462 = vmatpush.msra.mxu0 0.0
    %1463 = vmatpush.msra.mxu0 0.0
    %1464 = vmatpush.msra.mxu0 0.0
    %1465 = vmatpush.msra.mxu0 0.0
    %1466 = vmatpush.msra.mxu0 0.0
    %1467 = vmatpush.msra.mxu0 %v528
    %1468 = vmatpush.msra.mxu0 %v526
    %1469 = vmatpush.msra.mxu0 %v524
    %1470 = vmatpush.msra.mxu0 %v522
    %1471 = vmatmul.f32.gmra.mxu0 %v1413
    %v1472 = vpop.f32.mrf.mxu0
    %v1473 = vadd.f32 %v534, %v1472
    %1474 = vdwg.mxu0
    %v1476 = vrot.slane %v1433, 2
    %v1478 = vadd.f32 %v449, %v1476
    %v1479 = vxor.u32 %v1478, 2147483648
    %v1480 = vmul.f32 %v1479, 1.442695
    %v1481 = vpow.pop %v1480
    %v1482 = vadd.f32 %v1481, 1.0
    %v1483 = vrcp.pop %v1482
    %v1484 = vmul.f32 %v1482, %v1483
    %v1485 = vsub.f32 1.0, %v1484
    %v1486 = vmul.f32 %v1483, %v1485
    %v1487 = vadd.f32 %v1483, %v1486
    %vm1488 = vweird.f32 %v1482
    %vm1489 = vweird.f32 %v1483
    %vm1490 = vmor %vm1488, %vm1489
    %v1491 = vsel %vm1490, %v1483, %v1487
    %v1492 = vand.u32 2147483647, %v1482
    %vm1493 = vcmp.eq.f32.partialorder %v1492, 8.507059e+37
    %v1494 = vand.u32 %v1482, 2147483648
    %v1495 = vor.u32 1.1754944e-38, %v1494
    %v1496 = vsel %vm1493, %v1495, %v1491
    %v1497 = vmul.f32 1.0, %v1496
    %v1499 = vrot.slane %v1453, 2
    %1500 = vrot.lane.b32.xlu0 %v1499, 32
    %v1501 = vpop.permute.xlu0 %1500
    %v1503 = vadd.f32 %v449, %v1501
    %v1504 = vxor.u32 %v1503, 2147483648
    %v1505 = vmul.f32 %v1504, 1.442695
    %v1506 = vpow.pop %v1505
    %v1507 = vadd.f32 %v1506, 1.0
    %v1508 = vrcp.pop %v1507
    %v1509 = vmul.f32 %v1507, %v1508
    %v1510 = vsub.f32 1.0, %v1509
    %v1511 = vmul.f32 %v1508, %v1510
    %v1512 = vadd.f32 %v1508, %v1511
    %vm1513 = vweird.f32 %v1507
    %vm1514 = vweird.f32 %v1508
    %vm1515 = vmor %vm1513, %vm1514
    %v1516 = vsel %vm1515, %v1508, %v1512
    %v1517 = vand.u32 2147483647, %v1507
    %vm1518 = vcmp.eq.f32.partialorder %v1517, 8.507059e+37
    %v1519 = vand.u32 %v1507, 2147483648
    %v1520 = vor.u32 1.1754944e-38, %v1519
    %v1521 = vsel %vm1518, %v1520, %v1516
    %v1522 = vmul.f32 1.0, %v1521
    %v1524 = vrot.slane %v1473, 2
    %v1526 = vmul.f32 %v1497, %v1524
    %1528 = vrot.lane.b32.xlu0 %v1526, 64
    %v1529 = vpop.permute.xlu0 %1528
    %v1531 = vadd.f32 %v449, %v1529
    %v1532 = vtanh.pop %v1531
    %v1533 = vsub.f32 1.0, %v1522
    %1535 = vrot.lane.b32.xlu0 %v1532, 96
    %v1536 = vpop.permute.xlu0 %1535
    %v1538 = vmul.f32 %v1533, %v1536
    %v1539 = vrot.slane %v1408, 6
    %v1541 = vmul.f32 %v1522, %v1539
    %v1542 = vadd.f32 %v1538, %v1541
    %v1543 = vld [vmem:[%s19] sm:$0xff]
    %v1544 = vld [vmem:[%s19 + $0x8] sm:$0xff]
    %v1545 = vld [vmem:[%s19 + $0x10] sm:$0xff]
    %v1546 = vld [vmem:[%s19 + $0x18] sm:$0xff]
    %v1547 = vld [vmem:[%s20] sm:$0x1]
    %v1549 = vperm.slane %v1547, 0
    %v1552 = vrot.slane %v1542, 6
    %1553 = vrot.lane.b32.xlu0 %v1552, 96
    %v1554 = vpop.permute.xlu0 %1553
    %v1555 = vsel %vm124, %v1554, 0
    %1557 = vmatpush.msra.mxu0 0.0
    %1558 = vmatpush.msra.mxu0 0.0
    %1559 = vmatpush.msra.mxu0 0.0
    %1560 = vmatpush.msra.mxu0 0.0
    %1561 = vmatpush.msra.mxu0 0.0
    %1562 = vmatpush.msra.mxu0 0.0
    %1563 = vmatpush.msra.mxu0 0.0
    %1564 = vmatpush.msra.mxu0 0.0
    %1565 = vmatpush.msra.mxu0 0.0
    %1566 = vmatpush.msra.mxu0 0.0
    %1567 = vmatpush.msra.mxu0 0.0
    %1568 = vmatpush.msra.mxu0 0.0
    %1569 = vmatpush.msra.mxu0 %v1546
    %1570 = vmatpush.msra.mxu0 %v1545
    %1571 = vmatpush.msra.mxu0 %v1544
    %1572 = vmatpush.msra.mxu0 %v1543
    %1573 = vmatmul.f32.gmra.mxu0 %v1555
    %v1574 = vpop.f32.mrf.mxu0
    %v1575 = vadd.f32 %v1549, %v1574
    %1576 = vdwg.mxu0
    %v1577 = vld [vmem:[%s21] sm:$0x1]
    %v1578 = vld [vmem:[%s22] sm:$0x1]
    %vm1579 = vcmask 254976
    %v1580 = vsel %vm1579, %v1575, 0.0
    %1581 = vadd.xlane.f32.xlu0 %v1580
    %v1582 = vpop.xlane.xlu0 %1581
    %v1583 = vmul.f32 %v1582, %v137
    %v1584 = vsub.f32 %v1575, %v1583
    %v1585 = vmul.f32 %v1584, %v1584
    %v1586 = vsel %vm1579, %v1585, 0.0
    %1587 = vadd.xlane.f32.xlu0 %v1586
    %v1588 = vpop.xlane.xlu0 %1587
    %v1589 = vmul.f32 %v1588, %v137
    %v1590 = vadd.f32 %v1589, 1e-05
    %v1591 = vrsqrt.pop %v1590
    %v1592 = vmul.f32 %v1591, %v1590
    %v1593 = vmul.f32 %v1592, %v1591
    %v1594 = vmul.f32 0.5, %v1593
    %v1595 = vsub.f32 1.5, %v1594
    %v1596 = vmul.f32 %v1591, %v1595
    %vm1597 = vweird.f32 %v1590
    %vm1598 = vweird.f32 %v1591
    %vm1599 = vmor %vm1597, %vm1598
    %v1600 = vsel %vm1599, %v1591, %v1596
    %v1601 = vmul.f32 %v1584, %v1600
    %v1603 = vperm.slane %v1577, 0
    %v1605 = vmul.f32 %v1601, %v1603
    %v1607 = vperm.slane %v1578, 0
    %v1609 = vadd.f32 %v1605, %v1607
    %vm1610 = vcmp.ge.f32.partialorder %v1609, 0.0
    %v1611 = vmul.f32 %v1609, 0.01
    %v1612 = vsel %vm1610, %v1609, %v1611
    %v1613 = vld [vmem:[%s23] sm:$0xff]
    %v1614 = vld [vmem:[%s23 + $0x8] sm:$0xff]
    %v1615 = vld [vmem:[%s23 + $0x10] sm:$0xff]
    %v1616 = vld [vmem:[%s23 + $0x18] sm:$0xff]
    %v1617 = vld [vmem:[%s24] sm:$0x1]
    %v1619 = vperm.slane %v1617, 0
    %v1622 = vsel %vm124, %v1612, 0
    %1624 = vmatpush.msra.mxu0 0.0
    %1625 = vmatpush.msra.mxu0 0.0
    %1626 = vmatpush.msra.mxu0 0.0
    %1627 = vmatpush.msra.mxu0 0.0
    %1628 = vmatpush.msra.mxu0 0.0
    %1629 = vmatpush.msra.mxu0 0.0
    %1630 = vmatpush.msra.mxu0 0.0
    %1631 = vmatpush.msra.mxu0 0.0
    %1632 = vmatpush.msra.mxu0 0.0
    %1633 = vmatpush.msra.mxu0 0.0
    %1634 = vmatpush.msra.mxu0 0.0
    %1635 = vmatpush.msra.mxu0 0.0
    %1636 = vmatpush.msra.mxu0 %v1616
    %1637 = vmatpush.msra.mxu0 %v1615
    %1638 = vmatpush.msra.mxu0 %v1614
    %1639 = vmatpush.msra.mxu0 %v1613
    %1640 = vmatmul.f32.gmra.mxu0 %v1622
    %v1641 = vpop.f32.mrf.mxu0
    %v1642 = vadd.f32 %v1619, %v1641
    %1643 = vdwg.mxu0
    %vm1644 = vcmask 25600
    %1645 = vst.msk [vmem:[#allocation2] sm:$0x3] %vm1644, %v1642
    // Predicated region
    $region102: #{single_step_flow_rnn_forward.7} parent=1 // pred_check
      _
    $region103: #{single_step_flow_rnn_forward.7} parent=1 // pred_check_branch
      %1647 = sbr.rel (0) target = $region105
    $region104: #{single_step_flow_rnn_forward.7} parent=1 // pred_region
      %1649 = vsyncadd [#allocation3], 0
      %s1651 = sshll.u32 [#allocation2], 4
      %s1652 = int_to_ptr.vmem [resolvable:$true] %s1651
      %s1653 = sshll.u32 %s25, 4
      %s1654 = int_to_ptr.hbm [resolvable:$true] %s1653
      %1656 = dma.vmem_to_hbm [thread:$0]  %s1652, 32, %s1654, [#allocation3]
    $region105: #{single_step_flow_rnn_forward.7} parent=1 // pred_fallthru
      _
    // Predicated region
    $region106: #{single_step_flow_rnn_forward.7} parent=1 // pred_check
      _
    $region107: #{single_step_flow_rnn_forward.7} parent=1 // pred_check_branch
      %1658 = sbr.rel (0) target = $region109
    $region108: #{single_step_flow_rnn_forward.7} parent=1 // pred_region
      %1660 = dma.done [#allocation3], 32
    $region109: #{single_step_flow_rnn_forward.7} parent=1 // pred_fallthru
      _
    %1661 = vsyncpa [#allocation3], 1

</llo_original>
